<compile_context>
chip_gen: v7x
topology: tpu7x:2x2x1
jax: 0.10.0
libtpu: 0.0.40
codegen_flags: <defaults>
</compile_context>

<pallas_src>
import functools

import jax
import jax.numpy as jnp
import numpy as np
from jax.experimental import pallas as pl
from jax.experimental.pallas import tpu as pltpu

EPS = 1e-5
LANE = 128


# ------------------------------ tiling helpers ------------------------------


def _round_up(x, m):
    return (x + m - 1) // m * m


def _pick_m_tile(m, row_bytes=512):
    """Largest row tile dividing m whose (tile x row) f32 slab stays within a
    few MiB, preferring >= 2 grid steps so a 'parallel' axis can feed both
    TensorCores on megacore parts."""
    budget = 8 * 1024 * 1024
    cands = [t for t in (1024, 512, 256, 128, 64, 32, 16, 8)
             if t * row_bytes <= budget]
    if not cands:
        cands = [8]
    for t in cands:
        if m % t == 0 and m // t >= 2:
            return t
    for t in cands:
        if m % t == 0:
            return t
    return m  # TODO(synk): pad M up to a multiple of 8 for awkward sizes.


def _pick_k_tile(k):
    for t in (512, 256, 128):
        if k % t == 0:
            return t
    return k  # small K: a single reduction step


def _vmem_limit_bytes(est_bytes):
    # Generation-dependent cap: 128 MiB physical on v5e/v6e, 64 MiB on v7x.
    cap = 64 * 1024 * 1024
    try:
        cap = int(pltpu.get_tpu_info().vmem_capacity_bytes)
    except Exception:
        pass
    return int(min(max(2 * est_bytes, 16 * 1024 * 1024), (3 * cap) // 4))


def _mosaic_params(dim_sem, est_bytes):
    return pltpu.CompilerParams(dimension_semantics=dim_sem,
                                vmem_limit_bytes=_vmem_limit_bytes(est_bytes))


# ------------------------------ Pallas kernels -------------------------------


def _fused_conv1_gconv_kernel(x_ref, w1_ref, b1_ref, w2_ref, b2_ref, o_ref,
                              y1p_ref, acc_ref, *, stride, h, w, ho, wo):
    """conv1(1x1)+BN1+ReLU -> grouped 3x3 conv (block-diagonal)+BN2+ReLU for
    one image.  y1 lives in a zero-bordered VMEM scratch; the grouped conv is
    9 lane-dense (Ho*Wo, gw) @ (gw, gw) matmuls into one f32 accumulator; the
    output is written with a single lane-dense bf16 store."""
    c_in = x_ref.shape[-1]
    gw = w1_ref.shape[-1]

    # --- conv1 (1x1) + BN1 + ReLU over the whole image (stays in VMEM) ------
    x2d = x_ref[0].reshape(h * w, c_in)                        # bf16
    y1 = jnp.dot(x2d, w1_ref[...], preferred_element_type=jnp.float32)
    y1 = jnp.maximum(y1 + b1_ref[...], 0.0)                    # (h*w, gw) f32

    # --- write y1 + zero only the 1-element border of the padded scratch ----
    # (interior is fully overwritten each step; border-only zeroing is both
    # cheaper than a full clear and megacore-safe, since each core owns its
    # scratch and would never see a pl.when(program_id==0) init step.)
    # TODO(synk): a bf16 scratch would halve this buffer on v7x.
    zr = jnp.zeros((1, w + 2, gw), jnp.float32)
    zc = jnp.zeros((h, 1, gw), jnp.float32)
    y1p_ref[0:1, :, :] = zr
    y1p_ref[h + 1:h + 2, :, :] = zr
    y1p_ref[1:h + 1, 0:1, :] = zc
    y1p_ref[1:h + 1, w + 1:w + 2, :] = zc
    y1p_ref[1:h + 1, 1:w + 1, :] = y1.reshape(h, w, gw)

    # --- grouped 3x3 conv: 9 full-width block-diagonal matmuls --------------
    first = True
    for ky in range(3):
        for kx in range(3):
            if stride == 1:
                win = y1p_ref[ky:ky + ho, kx:kx + wo, :]
            else:
                # TODO(synk): strided-window path is not exercised by the demo.
                win = y1p_ref[pl.ds(ky, ho, stride=stride),
                              pl.ds(kx, wo, stride=stride), :]
            lhs = win.reshape(ho * wo, gw).astype(jnp.bfloat16)
            d = jnp.dot(lhs, w2_ref[ky * 3 + kx],
                        preferred_element_type=jnp.float32)
            if first:
                acc_ref[...] = d
                first = False
            else:
                acc_ref[...] += d

    # --- BN2 + ReLU, single lane-dense store of the whole image -------------
    y2 = jnp.maximum(acc_ref[...] + b2_ref[...], 0.0)
    o_ref[...] = y2.reshape(1, ho, wo, gw).astype(o_ref.dtype)


def _conv3_shortcut_kernel(y2_ref, w3_ref, xs_ref, ws_ref, b_ref, o_ref,
                           acc_ref):
    """out = relu(y2 @ w3 + xs @ ws + b), K-tiled over y2's channel axis.
    The shortcut 1x1 conv seeds the accumulator; b = BN3 bias + shortcut-BN
    bias, pre-combined host-side."""

    @pl.when(pl.program_id(1) == 0)
    def _init():
        acc_ref[...] = jnp.dot(xs_ref[...], ws_ref[...],
                               preferred_element_type=jnp.float32)

    acc_ref[...] += jnp.dot(y2_ref[...], w3_ref[...],
                            preferred_element_type=jnp.float32)

    @pl.when(pl.program_id(1) == pl.num_programs(1) - 1)
    def _finalize():
        o_ref[...] = jnp.maximum(acc_ref[...] + b_ref[...],
                                 0.0).astype(o_ref.dtype)


def _conv3_identity_kernel(y2_ref, w3_ref, r_ref, b_ref, o_ref, acc_ref):
    """out = relu(y2 @ w3 + b + residual) for the identity shortcut."""

    @pl.when(pl.program_id(1) == 0)
    def _init():
        acc_ref[...] = jnp.zeros_like(acc_ref)

    acc_ref[...] += jnp.dot(y2_ref[...], w3_ref[...],
                            preferred_element_type=jnp.float32)

    @pl.when(pl.program_id(1) == pl.num_programs(1) - 1)
    def _finalize():
        o_ref[...] = jnp.maximum(acc_ref[...] + b_ref[...] + r_ref[...],
                                 0.0).astype(o_ref.dtype)


# ------------------------------ kernel wrappers ------------------------------


def fused_conv1_gconv(x_nhwc, w1s, b1, w2bd, b2, stride):
    """Fused conv1(1x1)+BN1+ReLU -> grouped 3x3 conv+BN2+ReLU; grid over batch."""
    n, h, w, cp = x_nhwc.shape
    gwp = w1s.shape[1]
    ho = (h - 1) // stride + 1
    wo = (w - 1) // stride + 1

    kernel = functools.partial(_fused_conv1_gconv_kernel, stride=stride,
                               h=h, w=w, ho=ho, wo=wo)

    est = (2 * (h * w * cp * 2 + cp * gwp * 2 + 9 * gwp * gwp * 2
                + 2 * gwp * 4 + ho * wo * gwp * 2)
           + (h + 2) * (w + 2) * gwp * 4 + ho * wo * gwp * 4)

    return pl.pallas_call(
        kernel,
        out_shape=jax.ShapeDtypeStruct((n, ho, wo, gwp), jnp.bfloat16),
        grid_spec=pltpu.PrefetchScalarGridSpec(
            num_scalar_prefetch=0,
            grid=(n,),
            in_specs=[
                pl.BlockSpec((1, h, w, cp), lambda i: (i, 0, 0, 0)),
                pl.BlockSpec((cp, gwp), lambda i: (0, 0)),
                pl.BlockSpec((1, gwp), lambda i: (0, 0)),
                pl.BlockSpec((9, gwp, gwp), lambda i: (0, 0, 0)),
                pl.BlockSpec((1, gwp), lambda i: (0, 0)),
            ],
            out_specs=pl.BlockSpec((1, ho, wo, gwp), lambda i: (i, 0, 0, 0)),
            scratch_shapes=[
                pltpu.VMEM((h + 2, w + 2, gwp), jnp.float32),
                pltpu.VMEM((ho * wo, gwp), jnp.float32),
            ],
        ),
        compiler_params=_mosaic_params(("parallel",), est),
    )(x_nhwc, w1s, b1.reshape(1, gwp), w2bd, b2.reshape(1, gwp))


def conv3_block_tail(y2_flat, w3s, bias, *, xs=None, wss=None, residual=None):
    """Fused conv3 (1x1) + BN3 + shortcut + residual-add + ReLU.

    Either (xs, wss) — shortcut 1x1 conv fused into the kernel — or `residual`
    (identity shortcut, added at finalize) must be provided."""
    m, kp = y2_flat.shape
    ocp = w3s.shape[1]
    tm = _pick_m_tile(m, row_bytes=4 * ocp)
    tk = _pick_k_tile(kp)
    grid = (m // tm, kp // tk)

    in_specs = [
        pl.BlockSpec((tm, tk), lambda i, j: (i, j)),
        pl.BlockSpec((tk, ocp), lambda i, j: (j, 0)),
    ]
    args = [y2_flat, w3s]
    if xs is not None:
        cp = xs.shape[1]
        in_specs += [pl.BlockSpec((tm, cp), lambda i, j: (i, 0)),
                     pl.BlockSpec((cp, ocp), lambda i, j: (0, 0))]
        args += [xs, wss]
        kernel = _conv3_shortcut_kernel
        extra = tm * cp * 2 + cp * ocp * 2
    else:
        in_specs += [pl.BlockSpec((tm, ocp), lambda i, j: (i, 0))]
        args += [residual]
        kernel = _conv3_identity_kernel
        extra = tm * ocp * 4
    in_specs.append(pl.BlockSpec((1, ocp), lambda i, j: (0, 0)))
    args.append(bias.reshape(1, ocp))

    est = (2 * (tm * tk * 2 + tk * ocp * 2 + extra + ocp * 4 + tm * ocp * 4)
           + tm * ocp * 4)
    return pl.pallas_call(
        kernel,
        out_shape=jax.ShapeDtypeStruct((m, ocp), jnp.float32),
        grid_spec=pltpu.PrefetchScalarGridSpec(
            num_scalar_prefetch=0,
            grid=grid,
            in_specs=in_specs,
            out_specs=pl.BlockSpec((tm, ocp), lambda i, j: (i, 0)),
            scratch_shapes=[pltpu.VMEM((tm, ocp), jnp.float32)],
        ),
        compiler_params=_mosaic_params(("parallel", "arbitrary"), est),
    )(*args)


# ------------------------------- JAX glue ------------------------------------


def fold_bn(bn):
    gamma, beta, mean, var = bn
    scale = gamma / jnp.sqrt(var + EPS)
    bias = beta - mean * scale
    return scale, bias


def _pad_axis(a, axis, new):
    pad = [(0, 0)] * a.ndim
    pad[axis] = (0, new - a.shape[axis])
    return jnp.pad(a, pad)


def grouped_block_diag_weight(w_t, cardinality, scale):
    """Torch grouped weight (gw, cg, 3, 3) -> block-diagonal (9, gw, gw) with
    the BN2 scale folded into the output channels."""
    gw, cg = w_t.shape[0], w_t.shape[1]
    wv = w_t.reshape(cardinality, cg, cg, 3, 3)       # (g, co, ci, ky, kx)
    wv = jnp.transpose(wv, (3, 4, 0, 2, 1))           # (ky, kx, g, ci, co)
    wv = wv * scale.reshape(1, 1, cardinality, 1, cg)
    wbd = jnp.zeros((3, 3, gw, gw), jnp.float32)
    for g in range(cardinality):
        sl = slice(g * cg, (g + 1) * cg)
        wbd = wbd.at[:, :, sl, sl].set(wv[:, :, g])
    return wbd.reshape(9, gw, gw)


def init_params(key, in_channel, cardinality, bottleneck_width):
    gw = bottleneck_width * cardinality
    out_c = gw * 2  # expansion = 2
    ks = jax.random.split(key, 6)

    def bn_params(k, c):
        k1, k2, k3, k4 = jax.random.split(k, 4)
        gamma = jax.random.uniform(k1, (c,), jnp.float32, 0.5, 1.5)
        beta = 0.1 * jax.random.normal(k2, (c,), jnp.float32)
        mean = 0.1 * jax.random.normal(k3, (c,), jnp.float32)
        var = jax.random.uniform(k4, (c,), jnp.float32, 0.5, 1.5)
        return (gamma, beta, mean, var)

    params = {
        "w1": 0.2 * jax.random.normal(ks[0], (in_channel, gw), jnp.float32),
        "bn1": bn_params(ks[1], gw),
        "w2_t": 0.2 * jax.random.normal(ks[2], (gw, gw // cardinality, 3, 3),
                                        jnp.float32),
        "bn2": bn_params(ks[3], gw),
        "w3": 0.2 * jax.random.normal(ks[4], (gw, out_c), jnp.float32),
        "bn3": bn_params(ks[5], out_c),
    }
    return params, gw, out_c


def bottleneck_forward(x_nchw, params, cardinality, stride):
    x = jnp.transpose(x_nchw, (0, 2, 3, 1)).astype(jnp.float32)  # NCHW -> NHWC
    n, h, w, c_in = x.shape
    gw = params["w1"].shape[1]
    out_c = params["w3"].shape[1]

    # Pad all channel widths to multiples of the 128-lane width so every
    # matmul / store in the kernels is lane-dense.  Padded channels carry
    # exact zeros through the whole block (weights/biases zero-padded), so
    # slicing the final output recovers the reference result exactly.
    cp = _round_up(c_in, LANE)
    gwp = _round_up(gw, LANE)
    ocp = _round_up(out_c, LANE)

    s1, b1 = fold_bn(params["bn1"])
    s2, b2 = fold_bn(params["bn2"])
    s3, b3 = fold_bn(params["bn3"])

    w1s = _pad_axis(_pad_axis(params["w1"] * s1[None, :], 0, cp), 1, gwp)
    w1s = w1s.astype(jnp.bfloat16)
    b1p = _pad_axis(b1, 0, gwp)

    w2bd = grouped_block_diag_weight(params["w2_t"], cardinality, s2)
    w2bd = _pad_axis(_pad_axis(w2bd, 1, gwp), 2, gwp).astype(jnp.bfloat16)
    b2p = _pad_axis(b2, 0, gwp)

    w3s = _pad_axis(_pad_axis(params["w3"] * s3[None, :], 0, gwp), 1, ocp)
    w3s = w3s.astype(jnp.bfloat16)
    b3p = _pad_axis(b3, 0, ocp)

    x_pad = _pad_axis(x, 3, cp).astype(jnp.bfloat16)

    # conv1 + BN1 + ReLU + grouped 3x3 conv + BN2 + ReLU (fully fused; y1 and
    # the shifted windows never touch HBM).  y2 written once as bf16.
    y2 = fused_conv1_gconv(x_pad, w1s, b1p, w2bd, b2p, stride)
    ho, wo = y2.shape[1], y2.shape[2]
    y2_flat = y2.reshape(n * ho * wo, gwp)

    # conv3 + BN3 + shortcut + residual add + ReLU, all in one kernel.
    if "ws" in params:
        ss, bs = fold_bn(params["bns"])
        wss = _pad_axis(_pad_axis(params["ws"] * ss[None, :], 0, cp), 1, ocp)
        wss = wss.astype(jnp.bfloat16)
        bias_tail = b3p + _pad_axis(bs, 0, ocp)
        # TODO(synk): for stride > 1 this subsample is an XLA-side slice; a
        #             BlockSpec-level stride would avoid the extra HBM pass.
        xs = x_pad[:, ::stride, ::stride, :].reshape(n * ho * wo, cp)
        y3 = conv3_block_tail(y2_flat, w3s, bias_tail, xs=xs, wss=wss)
    else:
        assert stride == 1 and c_in == out_c, "identity shortcut misconfigured"
        residual = _pad_axis(x.reshape(n * h * w, c_in), 1, ocp)
        y3 = conv3_block_tail(y2_flat, w3s, b3p, residual=residual)

    y3 = y3.reshape(n, ho, wo, ocp)[:, :, :, :out_c]
    return jnp.transpose(y3, (0, 3, 1, 2))  # back to NCHW


# ----------------------- pure-JAX reference (for checking) -------------------


def reference_forward(x_nchw, params, cardinality, stride):
    x = jnp.transpose(x_nchw, (0, 2, 3, 1)).astype(jnp.float32)

    def bn(y, p):
        s, b = fold_bn(p)
        return y * s + b

    y = jnp.einsum("nhwc,cd->nhwd", x, params["w1"])
    y = jax.nn.relu(bn(y, params["bn1"]))
    w2_hwio = jnp.transpose(params["w2_t"], (2, 3, 1, 0))  # (3,3,Cin/g,Cout)
    y = jax.lax.conv_general_dilated(
        y, w2_hwio, window_strides=(stride, stride), padding=((1, 1), (1, 1)),
        dimension_numbers=("NHWC", "HWIO", "NHWC"),
        feature_group_count=cardinality)
    y = jax.nn.relu(bn(y, params["bn2"]))
    y = jnp.einsum("nhwc,cd->nhwd", y, params["w3"])
    y = bn(y, params["bn3"])
    if "ws" in params:
        r = jnp.einsum("nhwc,cd->nhwd", x[:, ::stride, ::stride, :], params["ws"])
        r = bn(r, params["bns"])
    else:
        r = x
    return jnp.transpose(jax.nn.relu(y + r), (0, 3, 1, 2))


# ----------------------------------- main -------------------------------------


if __name__ == "__main__":
    # PyTorch-consistent small shapes:
    #   BottleNeck(in_channel=4, cardinality=2, bottleneck_width=4, stride=1)
    #   x: (N=2, C=4, H=16, W=16)  [NCHW]
    in_channel, cardinality, bottleneck_width, stride = 4, 2, 4, 1

    key = jax.random.PRNGKey(0)
    k_x, k_p, k_s = jax.random.split(key, 3)
    params, gw, out_c = init_params(k_p, in_channel, cardinality,
                                    bottleneck_width)

    # Shortcut branch exists iff stride != 1 or in_channel != group_width * 2.
    if stride != 1 or in_channel != out_c:
        ks1, ks2 = jax.random.split(k_s, 2)
        params["ws"] = 0.2 * jax.random.normal(ks1, (in_channel, out_c),
                                               jnp.float32)
        g = jax.random.uniform(ks2, (4, out_c), jnp.float32, 0.5, 1.5)
        params["bns"] = (g[0], 0.1 * (g[1] - 1.0), 0.1 * (g[2] - 1.0), g[3])

    x = jax.random.normal(k_x, (2, in_channel, 16, 16), jnp.float32)

    out = jax.block_until_ready(bottleneck_forward(x, params, cardinality,
                                                   stride))
    ref = jax.block_until_ready(reference_forward(x, params, cardinality,
                                                  stride))

    assert out.shape == (2, out_c, 16, 16), out.shape
    # bf16 MXU operands (f32 accumulation) vs the f32 reference -> loose tol.
    np.testing.assert_allclose(np.asarray(out), np.asarray(ref),
                               rtol=5e-2, atol=5e-2)

    print("KERNEL_OK")
</pallas_src>

<mosaic_0001>
module attributes {stable_mosaic.version = 11 : i64} {
  func.func @_fused_conv1_gconv_kernel(%arg0: i32, %arg1: memref<1x16x16x128xbf16, #tpu.memory_space<vmem>>, %arg2: memref<128x128xbf16, #tpu.memory_space<vmem>>, %arg3: memref<1x128xf32, #tpu.memory_space<vmem>>, %arg4: memref<9x128x128xbf16, #tpu.memory_space<vmem>>, %arg5: memref<1x128xf32, #tpu.memory_space<vmem>>, %arg6: memref<1x16x16x128xbf16, #tpu.memory_space<vmem>>, %arg7: memref<18x18x128xf32, #tpu.memory_space<vmem>>, %arg8: memref<256x128xf32, #tpu.memory_space<vmem>>) attributes {dimension_semantics = [#tpu.dimension_semantics<parallel>], iteration_bounds = array<i64: 2>, scalar_prefetch = 0 : i64, scratch_operands = 2 : i64, tpu.core_type = #tpu.core_type<tc>, window_params = [{transform_indices = @transform_0, window_bounds = array<i64: 1, 16, 16, 128>}, {pipeline_mode = #tpu.pipeline_mode<synchronous>, transform_indices = @transform_1, window_bounds = array<i64: 128, 128>}, {pipeline_mode = #tpu.pipeline_mode<synchronous>, transform_indices = @transform_2, window_bounds = array<i64: 1, 128>}, {pipeline_mode = #tpu.pipeline_mode<synchronous>, transform_indices = @transform_3, window_bounds = array<i64: 9, 128, 128>}, {pipeline_mode = #tpu.pipeline_mode<synchronous>, transform_indices = @transform_4, window_bounds = array<i64: 1, 128>}, {transform_indices = @transform_5, window_bounds = array<i64: 1, 16, 16, 128>}]} {
    %c0 = arith.constant 0 : index
    %c0_0 = arith.constant 0 : index
    %c0_1 = arith.constant 0 : index
    %c0_2 = arith.constant 0 : index
    %0 = vector.load %arg1[%c0, %c0_0, %c0_1, %c0_2] : memref<1x16x16x128xbf16, #tpu.memory_space<vmem>>, vector<1x16x16x128xbf16>
    %1 = vector.shape_cast %0 : vector<1x16x16x128xbf16> to vector<16x16x128xbf16>
    %2 = vector.shape_cast %1 : vector<16x16x128xbf16> to vector<256x128xbf16>
    %c0_3 = arith.constant 0 : index
    %c0_4 = arith.constant 0 : index
    %3 = vector.load %arg2[%c0_3, %c0_4] : memref<128x128xbf16, #tpu.memory_space<vmem>>, vector<128x128xbf16>
    %cst = arith.constant dense<0.000000e+00> : vector<256x128xf32>
    %4 = tpu.matmul %2, %3, %cst {dimension_numbers = #tpu.dot_dimension_numbers<[1], [0], [0], [1], [0, 0, 1, 1], [], []>} : vector<256x128xbf16>, vector<128x128xbf16>, vector<256x128xf32> -> vector<256x128xf32>
    %c0_5 = arith.constant 0 : index
    %c0_6 = arith.constant 0 : index
    %5 = vector.load %arg3[%c0_5, %c0_6] : memref<1x128xf32, #tpu.memory_space<vmem>>, vector<1x128xf32>
    %6 = vector.broadcast %5 : vector<1x128xf32> to vector<256x128xf32>
    %7 = arith.addf %4, %6 : vector<256x128xf32>
    %cst_7 = arith.constant 0.000000e+00 : f32
    %8 = vector.broadcast %cst_7 : f32 to vector<256x128xf32>
    %9 = arith.maximumf %7, %8 : vector<256x128xf32>
    %cst_8 = arith.constant 0.000000e+00 : f32
    %10 = vector.broadcast %cst_8 : f32 to vector<1x18x128xf32>
    %cst_9 = arith.constant 0.000000e+00 : f32
    %11 = vector.broadcast %cst_9 : f32 to vector<16x1x128xf32>
    %c0_10 = arith.constant 0 : index
    %c0_11 = arith.constant 0 : index
    %c0_12 = arith.constant 0 : index
    %12 = vector.load %arg7[%c0_10, %c0_11, %c0_12] : memref<18x18x128xf32, #tpu.memory_space<vmem>>, vector<1x18x128xf32>
    tpu.vector_store %arg7[%c0_10, %c0_11, %c0_12], %10 {strides = array<i32>} : memref<18x18x128xf32, #tpu.memory_space<vmem>>, vector<1x18x128xf32>,
    %c17 = arith.constant 17 : index
    %c0_13 = arith.constant 0 : index
    %c0_14 = arith.constant 0 : index
    %13 = vector.load %arg7[%c17, %c0_13, %c0_14] : memref<18x18x128xf32, #tpu.memory_space<vmem>>, vector<1x18x128xf32>
    tpu.vector_store %arg7[%c17, %c0_13, %c0_14], %10 {strides = array<i32>} : memref<18x18x128xf32, #tpu.memory_space<vmem>>, vector<1x18x128xf32>,
    %c1 = arith.constant 1 : index
    %c0_15 = arith.constant 0 : index
    %c0_16 = arith.constant 0 : index
    %14 = vector.load %arg7[%c1, %c0_15, %c0_16] : memref<18x18x128xf32, #tpu.memory_space<vmem>>, vector<16x1x128xf32>
    tpu.vector_store %arg7[%c1, %c0_15, %c0_16], %11 {strides = array<i32>} : memref<18x18x128xf32, #tpu.memory_space<vmem>>, vector<16x1x128xf32>,
    %c1_17 = arith.constant 1 : index
    %c17_18 = arith.constant 17 : index
    %c0_19 = arith.constant 0 : index
    %15 = vector.load %arg7[%c1_17, %c17_18, %c0_19] : memref<18x18x128xf32, #tpu.memory_space<vmem>>, vector<16x1x128xf32>
    tpu.vector_store %arg7[%c1_17, %c17_18, %c0_19], %11 {strides = array<i32>} : memref<18x18x128xf32, #tpu.memory_space<vmem>>, vector<16x1x128xf32>,
    %16 = vector.shape_cast %9 : vector<256x128xf32> to vector<16x16x128xf32>
    %c1_20 = arith.constant 1 : index
    %c1_21 = arith.constant 1 : index
    %c0_22 = arith.constant 0 : index
    %17 = vector.load %arg7[%c1_20, %c1_21, %c0_22] : memref<18x18x128xf32, #tpu.memory_space<vmem>>, vector<16x16x128xf32>
    tpu.vector_store %arg7[%c1_20, %c1_21, %c0_22], %16 {strides = array<i32>} : memref<18x18x128xf32, #tpu.memory_space<vmem>>, vector<16x16x128xf32>,
    %c0_23 = arith.constant 0 : index
    %c0_24 = arith.constant 0 : index
    %c0_25 = arith.constant 0 : index
    %18 = vector.load %arg7[%c0_23, %c0_24, %c0_25] : memref<18x18x128xf32, #tpu.memory_space<vmem>>, vector<16x16x128xf32>
    %19 = vector.shape_cast %18 : vector<16x16x128xf32> to vector<256x128xf32>
    %20 = arith.truncf %19 : vector<256x128xf32> to vector<256x128xbf16>
    %c0_26 = arith.constant 0 : index
    %c0_27 = arith.constant 0 : index
    %c0_28 = arith.constant 0 : index
    %21 = vector.load %arg4[%c0_26, %c0_27, %c0_28] : memref<9x128x128xbf16, #tpu.memory_space<vmem>>, vector<1x128x128xbf16>
    %22 = vector.shape_cast %21 : vector<1x128x128xbf16> to vector<128x128xbf16>
    %cst_29 = arith.constant dense<0.000000e+00> : vector<256x128xf32>
    %23 = tpu.matmul %20, %22, %cst_29 {dimension_numbers = #tpu.dot_dimension_numbers<[1], [0], [0], [1], [0, 0, 1, 1], [], []>} : vector<256x128xbf16>, vector<128x128xbf16>, vector<256x128xf32> -> vector<256x128xf32>
    %c0_30 = arith.constant 0 : index
    %c0_31 = arith.constant 0 : index
    %24 = vector.load %arg8[%c0_30, %c0_31] : memref<256x128xf32, #tpu.memory_space<vmem>>, vector<256x128xf32>
    tpu.vector_store %arg8[%c0_30, %c0_31], %23 {strides = array<i32>} : memref<256x128xf32, #tpu.memory_space<vmem>>, vector<256x128xf32>,
    %c0_32 = arith.constant 0 : index
    %c1_33 = arith.constant 1 : index
    %c0_34 = arith.constant 0 : index
    %25 = vector.load %arg7[%c0_32, %c1_33, %c0_34] : memref<18x18x128xf32, #tpu.memory_space<vmem>>, vector<16x16x128xf32>
    %26 = vector.shape_cast %25 : vector<16x16x128xf32> to vector<256x128xf32>
    %27 = arith.truncf %26 : vector<256x128xf32> to vector<256x128xbf16>
    %c1_35 = arith.constant 1 : index
    %c0_36 = arith.constant 0 : index
    %c0_37 = arith.constant 0 : index
    %28 = vector.load %arg4[%c1_35, %c0_36, %c0_37] : memref<9x128x128xbf16, #tpu.memory_space<vmem>>, vector<1x128x128xbf16>
    %29 = vector.shape_cast %28 : vector<1x128x128xbf16> to vector<128x128xbf16>
    %cst_38 = arith.constant dense<0.000000e+00> : vector<256x128xf32>
    %30 = tpu.matmul %27, %29, %cst_38 {dimension_numbers = #tpu.dot_dimension_numbers<[1], [0], [0], [1], [0, 0, 1, 1], [], []>} : vector<256x128xbf16>, vector<128x128xbf16>, vector<256x128xf32> -> vector<256x128xf32>
    %c0_39 = arith.constant 0 : index
    %c0_40 = arith.constant 0 : index
    %31 = vector.load %arg8[%c0_39, %c0_40] : memref<256x128xf32, #tpu.memory_space<vmem>>, vector<256x128xf32>
    %32 = arith.addf %31, %30 : vector<256x128xf32>
    %c0_41 = arith.constant 0 : index
    %c0_42 = arith.constant 0 : index
    %33 = vector.load %arg8[%c0_41, %c0_42] : memref<256x128xf32, #tpu.memory_space<vmem>>, vector<256x128xf32>
    tpu.vector_store %arg8[%c0_41, %c0_42], %32 {strides = array<i32>} : memref<256x128xf32, #tpu.memory_space<vmem>>, vector<256x128xf32>,
    %c0_43 = arith.constant 0 : index
    %c2 = arith.constant 2 : index
    %c0_44 = arith.constant 0 : index
    %34 = vector.load %arg7[%c0_43, %c2, %c0_44] : memref<18x18x128xf32, #tpu.memory_space<vmem>>, vector<16x16x128xf32>
    %35 = vector.shape_cast %34 : vector<16x16x128xf32> to vector<256x128xf32>
    %36 = arith.truncf %35 : vector<256x128xf32> to vector<256x128xbf16>
    %c2_45 = arith.constant 2 : index
    %c0_46 = arith.constant 0 : index
    %c0_47 = arith.constant 0 : index
    %37 = vector.load %arg4[%c2_45, %c0_46, %c0_47] : memref<9x128x128xbf16, #tpu.memory_space<vmem>>, vector<1x128x128xbf16>
    %38 = vector.shape_cast %37 : vector<1x128x128xbf16> to vector<128x128xbf16>
    %cst_48 = arith.constant dense<0.000000e+00> : vector<256x128xf32>
    %39 = tpu.matmul %36, %38, %cst_48 {dimension_numbers = #tpu.dot_dimension_numbers<[1], [0], [0], [1], [0, 0, 1, 1], [], []>} : vector<256x128xbf16>, vector<128x128xbf16>, vector<256x128xf32> -> vector<256x128xf32>
    %c0_49 = arith.constant 0 : index
    %c0_50 = arith.constant 0 : index
    %40 = vector.load %arg8[%c0_49, %c0_50] : memref<256x128xf32, #tpu.memory_space<vmem>>, vector<256x128xf32>
    %41 = arith.addf %40, %39 : vector<256x128xf32>
    %c0_51 = arith.constant 0 : index
    %c0_52 = arith.constant 0 : index
    %42 = vector.load %arg8[%c0_51, %c0_52] : memref<256x128xf32, #tpu.memory_space<vmem>>, vector<256x128xf32>
    tpu.vector_store %arg8[%c0_51, %c0_52], %41 {strides = array<i32>} : memref<256x128xf32, #tpu.memory_space<vmem>>, vector<256x128xf32>,
    %c1_53 = arith.constant 1 : index
    %c0_54 = arith.constant 0 : index
    %c0_55 = arith.constant 0 : index
    %43 = vector.load %arg7[%c1_53, %c0_54, %c0_55] : memref<18x18x128xf32, #tpu.memory_space<vmem>>, vector<16x16x128xf32>
    %44 = vector.shape_cast %43 : vector<16x16x128xf32> to vector<256x128xf32>
    %45 = arith.truncf %44 : vector<256x128xf32> to vector<256x128xbf16>
    %c3 = arith.constant 3 : index
    %c0_56 = arith.constant 0 : index
    %c0_57 = arith.constant 0 : index
    %46 = vector.load %arg4[%c3, %c0_56, %c0_57] : memref<9x128x128xbf16, #tpu.memory_space<vmem>>, vector<1x128x128xbf16>
    %47 = vector.shape_cast %46 : vector<1x128x128xbf16> to vector<128x128xbf16>
    %cst_58 = arith.constant dense<0.000000e+00> : vector<256x128xf32>
    %48 = tpu.matmul %45, %47, %cst_58 {dimension_numbers = #tpu.dot_dimension_numbers<[1], [0], [0], [1], [0, 0, 1, 1], [], []>} : vector<256x128xbf16>, vector<128x128xbf16>, vector<256x128xf32> -> vector<256x128xf32>
    %c0_59 = arith.constant 0 : index
    %c0_60 = arith.constant 0 : index
    %49 = vector.load %arg8[%c0_59, %c0_60] : memref<256x128xf32, #tpu.memory_space<vmem>>, vector<256x128xf32>
    %50 = arith.addf %49, %48 : vector<256x128xf32>
    %c0_61 = arith.constant 0 : index
    %c0_62 = arith.constant 0 : index
    %51 = vector.load %arg8[%c0_61, %c0_62] : memref<256x128xf32, #tpu.memory_space<vmem>>, vector<256x128xf32>
    tpu.vector_store %arg8[%c0_61, %c0_62], %50 {strides = array<i32>} : memref<256x128xf32, #tpu.memory_space<vmem>>, vector<256x128xf32>,
    %c1_63 = arith.constant 1 : index
    %c1_64 = arith.constant 1 : index
    %c0_65 = arith.constant 0 : index
    %52 = vector.load %arg7[%c1_63, %c1_64, %c0_65] : memref<18x18x128xf32, #tpu.memory_space<vmem>>, vector<16x16x128xf32>
    %53 = vector.shape_cast %52 : vector<16x16x128xf32> to vector<256x128xf32>
    %54 = arith.truncf %53 : vector<256x128xf32> to vector<256x128xbf16>
    %c4 = arith.constant 4 : index
    %c0_66 = arith.constant 0 : index
    %c0_67 = arith.constant 0 : index
    %55 = vector.load %arg4[%c4, %c0_66, %c0_67] : memref<9x128x128xbf16, #tpu.memory_space<vmem>>, vector<1x128x128xbf16>
    %56 = vector.shape_cast %55 : vector<1x128x128xbf16> to vector<128x128xbf16>
    %cst_68 = arith.constant dense<0.000000e+00> : vector<256x128xf32>
    %57 = tpu.matmul %54, %56, %cst_68 {dimension_numbers = #tpu.dot_dimension_numbers<[1], [0], [0], [1], [0, 0, 1, 1], [], []>} : vector<256x128xbf16>, vector<128x128xbf16>, vector<256x128xf32> -> vector<256x128xf32>
    %c0_69 = arith.constant 0 : index
    %c0_70 = arith.constant 0 : index
    %58 = vector.load %arg8[%c0_69, %c0_70] : memref<256x128xf32, #tpu.memory_space<vmem>>, vector<256x128xf32>
    %59 = arith.addf %58, %57 : vector<256x128xf32>
    %c0_71 = arith.constant 0 : index
    %c0_72 = arith.constant 0 : index
    %60 = vector.load %arg8[%c0_71, %c0_72] : memref<256x128xf32, #tpu.memory_space<vmem>>, vector<256x128xf32>
    tpu.vector_store %arg8[%c0_71, %c0_72], %59 {strides = array<i32>} : memref<256x128xf32, #tpu.memory_space<vmem>>, vector<256x128xf32>,
    %c1_73 = arith.constant 1 : index
    %c2_74 = arith.constant 2 : index
    %c0_75 = arith.constant 0 : index
    %61 = vector.load %arg7[%c1_73, %c2_74, %c0_75] : memref<18x18x128xf32, #tpu.memory_space<vmem>>, vector<16x16x128xf32>
    %62 = vector.shape_cast %61 : vector<16x16x128xf32> to vector<256x128xf32>
    %63 = arith.truncf %62 : vector<256x128xf32> to vector<256x128xbf16>
    %c5 = arith.constant 5 : index
    %c0_76 = arith.constant 0 : index
    %c0_77 = arith.constant 0 : index
    %64 = vector.load %arg4[%c5, %c0_76, %c0_77] : memref<9x128x128xbf16, #tpu.memory_space<vmem>>, vector<1x128x128xbf16>
    %65 = vector.shape_cast %64 : vector<1x128x128xbf16> to vector<128x128xbf16>
    %cst_78 = arith.constant dense<0.000000e+00> : vector<256x128xf32>
    %66 = tpu.matmul %63, %65, %cst_78 {dimension_numbers = #tpu.dot_dimension_numbers<[1], [0], [0], [1], [0, 0, 1, 1], [], []>} : vector<256x128xbf16>, vector<128x128xbf16>, vector<256x128xf32> -> vector<256x128xf32>
    %c0_79 = arith.constant 0 : index
    %c0_80 = arith.constant 0 : index
    %67 = vector.load %arg8[%c0_79, %c0_80] : memref<256x128xf32, #tpu.memory_space<vmem>>, vector<256x128xf32>
    %68 = arith.addf %67, %66 : vector<256x128xf32>
    %c0_81 = arith.constant 0 : index
    %c0_82 = arith.constant 0 : index
    %69 = vector.load %arg8[%c0_81, %c0_82] : memref<256x128xf32, #tpu.memory_space<vmem>>, vector<256x128xf32>
    tpu.vector_store %arg8[%c0_81, %c0_82], %68 {strides = array<i32>} : memref<256x128xf32, #tpu.memory_space<vmem>>, vector<256x128xf32>,
    %c2_83 = arith.constant 2 : index
    %c0_84 = arith.constant 0 : index
    %c0_85 = arith.constant 0 : index
    %70 = vector.load %arg7[%c2_83, %c0_84, %c0_85] : memref<18x18x128xf32, #tpu.memory_space<vmem>>, vector<16x16x128xf32>
    %71 = vector.shape_cast %70 : vector<16x16x128xf32> to vector<256x128xf32>
    %72 = arith.truncf %71 : vector<256x128xf32> to vector<256x128xbf16>
    %c6 = arith.constant 6 : index
    %c0_86 = arith.constant 0 : index
    %c0_87 = arith.constant 0 : index
    %73 = vector.load %arg4[%c6, %c0_86, %c0_87] : memref<9x128x128xbf16, #tpu.memory_space<vmem>>, vector<1x128x128xbf16>
    %74 = vector.shape_cast %73 : vector<1x128x128xbf16> to vector<128x128xbf16>
    %cst_88 = arith.constant dense<0.000000e+00> : vector<256x128xf32>
    %75 = tpu.matmul %72, %74, %cst_88 {dimension_numbers = #tpu.dot_dimension_numbers<[1], [0], [0], [1], [0, 0, 1, 1], [], []>} : vector<256x128xbf16>, vector<128x128xbf16>, vector<256x128xf32> -> vector<256x128xf32>
    %c0_89 = arith.constant 0 : index
    %c0_90 = arith.constant 0 : index
    %76 = vector.load %arg8[%c0_89, %c0_90] : memref<256x128xf32, #tpu.memory_space<vmem>>, vector<256x128xf32>
    %77 = arith.addf %76, %75 : vector<256x128xf32>
    %c0_91 = arith.constant 0 : index
    %c0_92 = arith.constant 0 : index
    %78 = vector.load %arg8[%c0_91, %c0_92] : memref<256x128xf32, #tpu.memory_space<vmem>>, vector<256x128xf32>
    tpu.vector_store %arg8[%c0_91, %c0_92], %77 {strides = array<i32>} : memref<256x128xf32, #tpu.memory_space<vmem>>, vector<256x128xf32>,
    %c2_93 = arith.constant 2 : index
    %c1_94 = arith.constant 1 : index
    %c0_95 = arith.constant 0 : index
    %79 = vector.load %arg7[%c2_93, %c1_94, %c0_95] : memref<18x18x128xf32, #tpu.memory_space<vmem>>, vector<16x16x128xf32>
    %80 = vector.shape_cast %79 : vector<16x16x128xf32> to vector<256x128xf32>
    %81 = arith.truncf %80 : vector<256x128xf32> to vector<256x128xbf16>
    %c7 = arith.constant 7 : index
    %c0_96 = arith.constant 0 : index
    %c0_97 = arith.constant 0 : index
    %82 = vector.load %arg4[%c7, %c0_96, %c0_97] : memref<9x128x128xbf16, #tpu.memory_space<vmem>>, vector<1x128x128xbf16>
    %83 = vector.shape_cast %82 : vector<1x128x128xbf16> to vector<128x128xbf16>
    %cst_98 = arith.constant dense<0.000000e+00> : vector<256x128xf32>
    %84 = tpu.matmul %81, %83, %cst_98 {dimension_numbers = #tpu.dot_dimension_numbers<[1], [0], [0], [1], [0, 0, 1, 1], [], []>} : vector<256x128xbf16>, vector<128x128xbf16>, vector<256x128xf32> -> vector<256x128xf32>
    %c0_99 = arith.constant 0 : index
    %c0_100 = arith.constant 0 : index
    %85 = vector.load %arg8[%c0_99, %c0_100] : memref<256x128xf32, #tpu.memory_space<vmem>>, vector<256x128xf32>
    %86 = arith.addf %85, %84 : vector<256x128xf32>
    %c0_101 = arith.constant 0 : index
    %c0_102 = arith.constant 0 : index
    %87 = vector.load %arg8[%c0_101, %c0_102] : memref<256x128xf32, #tpu.memory_space<vmem>>, vector<256x128xf32>
    tpu.vector_store %arg8[%c0_101, %c0_102], %86 {strides = array<i32>} : memref<256x128xf32, #tpu.memory_space<vmem>>, vector<256x128xf32>,
    %c2_103 = arith.constant 2 : index
    %c2_104 = arith.constant 2 : index
    %c0_105 = arith.constant 0 : index
    %88 = vector.load %arg7[%c2_103, %c2_104, %c0_105] : memref<18x18x128xf32, #tpu.memory_space<vmem>>, vector<16x16x128xf32>
    %89 = vector.shape_cast %88 : vector<16x16x128xf32> to vector<256x128xf32>
    %90 = arith.truncf %89 : vector<256x128xf32> to vector<256x128xbf16>
    %c8 = arith.constant 8 : index
    %c0_106 = arith.constant 0 : index
    %c0_107 = arith.constant 0 : index
    %91 = vector.load %arg4[%c8, %c0_106, %c0_107] : memref<9x128x128xbf16, #tpu.memory_space<vmem>>, vector<1x128x128xbf16>
    %92 = vector.shape_cast %91 : vector<1x128x128xbf16> to vector<128x128xbf16>
    %cst_108 = arith.constant dense<0.000000e+00> : vector<256x128xf32>
    %93 = tpu.matmul %90, %92, %cst_108 {dimension_numbers = #tpu.dot_dimension_numbers<[1], [0], [0], [1], [0, 0, 1, 1], [], []>} : vector<256x128xbf16>, vector<128x128xbf16>, vector<256x128xf32> -> vector<256x128xf32>
    %c0_109 = arith.constant 0 : index
    %c0_110 = arith.constant 0 : index
    %94 = vector.load %arg8[%c0_109, %c0_110] : memref<256x128xf32, #tpu.memory_space<vmem>>, vector<256x128xf32>
    %95 = arith.addf %94, %93 : vector<256x128xf32>
    %c0_111 = arith.constant 0 : index
    %c0_112 = arith.constant 0 : index
    %96 = vector.load %arg8[%c0_111, %c0_112] : memref<256x128xf32, #tpu.memory_space<vmem>>, vector<256x128xf32>
    tpu.vector_store %arg8[%c0_111, %c0_112], %95 {strides = array<i32>} : memref<256x128xf32, #tpu.memory_space<vmem>>, vector<256x128xf32>,
    %c0_113 = arith.constant 0 : index
    %c0_114 = arith.constant 0 : index
    %97 = vector.load %arg8[%c0_113, %c0_114] : memref<256x128xf32, #tpu.memory_space<vmem>>, vector<256x128xf32>
    %c0_115 = arith.constant 0 : index
    %c0_116 = arith.constant 0 : index
    %98 = vector.load %arg5[%c0_115, %c0_116] : memref<1x128xf32, #tpu.memory_space<vmem>>, vector<1x128xf32>
    %99 = vector.broadcast %98 : vector<1x128xf32> to vector<256x128xf32>
    %100 = arith.addf %97, %99 : vector<256x128xf32>
    %cst_117 = arith.constant 0.000000e+00 : f32
    %101 = vector.broadcast %cst_117 : f32 to vector<256x128xf32>
    %102 = arith.maximumf %100, %101 : vector<256x128xf32>
    %103 = vector.shape_cast %102 : vector<256x128xf32> to vector<1x16x16x128xf32>
    %104 = arith.truncf %103 : vector<1x16x16x128xf32> to vector<1x16x16x128xbf16>
    %c0_118 = arith.constant 0 : index
    %c0_119 = arith.constant 0 : index
    %c0_120 = arith.constant 0 : index
    %c0_121 = arith.constant 0 : index
    %105 = vector.load %arg6[%c0_118, %c0_119, %c0_120, %c0_121] : memref<1x16x16x128xbf16, #tpu.memory_space<vmem>>, vector<1x16x16x128xbf16>
    tpu.vector_store %arg6[%c0_118, %c0_119, %c0_120, %c0_121], %104 {strides = array<i32>} : memref<1x16x16x128xbf16, #tpu.memory_space<vmem>>, vector<1x16x16x128xbf16>,
    return
  }
  func.func @transform_0(%arg0: i32) -> (i32, i32, i32, i32) {
    %c0_i32 = arith.constant 0 : i32
    %c0_i32_0 = arith.constant 0 : i32
    %c0_i32_1 = arith.constant 0 : i32
    %c0_i32_2 = arith.constant 0 : i32
    return %arg0, %c0_i32, %c0_i32_0, %c0_i32_1 : i32, i32, i32, i32
  }
  func.func @transform_1(%arg0: i32) -> (i32, i32) {
    %c0_i32 = arith.constant 0 : i32
    %c0_i32_0 = arith.constant 0 : i32
    %c0_i32_1 = arith.constant 0 : i32
    return %c0_i32, %c0_i32_0 : i32, i32
  }
  func.func @transform_2(%arg0: i32) -> (i32, i32) {
    %c0_i32 = arith.constant 0 : i32
    %c0_i32_0 = arith.constant 0 : i32
    %c0_i32_1 = arith.constant 0 : i32
    return %c0_i32, %c0_i32_0 : i32, i32
  }
  func.func @transform_3(%arg0: i32) -> (i32, i32, i32) {
    %c0_i32 = arith.constant 0 : i32
    %c0_i32_0 = arith.constant 0 : i32
    %c0_i32_1 = arith.constant 0 : i32
    %c0_i32_2 = arith.constant 0 : i32
    return %c0_i32, %c0_i32_0, %c0_i32_1 : i32, i32, i32
  }
  func.func @transform_4(%arg0: i32) -> (i32, i32) {
    %c0_i32 = arith.constant 0 : i32
    %c0_i32_0 = arith.constant 0 : i32
    %c0_i32_1 = arith.constant 0 : i32
    return %c0_i32, %c0_i32_0 : i32, i32
  }
  func.func @transform_5(%arg0: i32) -> (i32, i32, i32, i32) {
    %c0_i32 = arith.constant 0 : i32
    %c0_i32_0 = arith.constant 0 : i32
    %c0_i32_1 = arith.constant 0 : i32
    %c0_i32_2 = arith.constant 0 : i32
    return %arg0, %c0_i32, %c0_i32_0, %c0_i32_1 : i32, i32, i32, i32
  }
}

</mosaic_0001>

<llo_original>
// kernel: tpu_custom_call.1
$region0: #{tpu_custom_call.1}
  #allocation0 [shape = 'u32[]', space=smem, size = 0x4, offset = 0x4, fixed_abs, tag = 'smem constant byte address 0x4 - core index']
  #allocation1 [shape = 'u32[144,128]{1,0:T(1,128)}', space=vmem, size = 0x12000, scoped, tag = 'internal scratch']
  #allocation2 [shape = 'f32[18,18,128]{2,1,0:T(8,128)}', space=vmem, size = 0x36000, scoped, tag = 'scratch operand']
  #allocation3 [shape = 'f32[256,128]{1,0:T(8,128)}', space=vmem, size = 0x20000, scoped, tag = 'scratch operand']
  %s0 = inlined_call_operand.hbm [shape: bf16[2,16,16,128], index: 0, kind: input, shape index: {}]
  %s1 = inlined_call_operand.hbm [shape: bf16[128,128], index: 1, kind: input, shape index: {}]
  %s2 = inlined_call_operand.vmem [shape: f32[1,128], index: 2, kind: input, shape index: {}]
  %s3 = inlined_call_operand.hbm [shape: bf16[9,128,128], index: 3, kind: input, shape index: {}]
  %s4 = inlined_call_operand.vmem [shape: f32[1,128], index: 4, kind: input, shape index: {}]
  %s5 = inlined_call_operand.hbm [shape: bf16[2,16,16,128], index: 5, kind: output, shape index: {}]
  %s6 = sld [smem:[#allocation0]]
  $region65: #{tpu_custom_call.1} parent=0
    _
  %s8 = ssub.s32 1, %s6
  %s9 = scalar_select 0, %s8, %s6
  $region1: #{tpu_custom_call.1} parent=0
    #allocation4 [shape = 'u8[131072]{0}', space=vmem, size = 0x20000, scoped, tag = 'input window, operand 0']
    #allocation5 [shape = 's32[2]{0}', space=sflag, size = 0x8, scoped, tag = 'scoped memory for tpu_custom_call.1']
    #allocation6 [shape = 's32[2]{0}', space=sflag, size = 0x8, scoped, tag = 'scoped memory for tpu_custom_call.1']
    #allocation7 [shape = 'u8[32768]{0}', space=vmem, size = 0x8000, scoped, tag = 'input window, operand 1, single buffered']
    #allocation8 [shape = 's32[1]{0}', space=sflag, size = 0x4, scoped, tag = 'scoped memory for tpu_custom_call.1']
    #allocation9 [shape = 'u8[294912]{0}', space=vmem, size = 0x48000, scoped, tag = 'input window, operand 3, single buffered']
    #allocation10 [shape = 'u8[131072]{0}', space=vmem, size = 0x20000, scoped, tag = 'output window, operand 0']
    %10 = vsyncpa [#allocation5], 0
    %s11 = scalar_lea.sflag [#allocation5], 1
    %12 = vsyncpa %s11, 0
    %13 = vsyncpa [#allocation8], 0
    %14 = vsyncpa [#allocation6], 0
    %s15 = scalar_lea.sflag [#allocation6], 1
    %16 = vsyncpa %s15, 0
    loop: start=0, step=1, limit=4
    $region2: #{tpu_custom_call.1} parent=1 // loop_pre_header
      _
    $region3: #{tpu_custom_call.1} parent=1 // loop_header
      %s18 = sphi 0, %s22
      %p19 = scmp.ge.s32.totalorder %s18, 4
      %s28 = sphi 0, %s30
      %s31 = sphi 0, %s28
      %s32 = sphi 0, %s31
      %s48 = sphi 0, %s32
      %s52 = sphi 0, %s52
      %s54 = sphi 0, %s52
      %s55 = sphi 0, %s54
      %s69 = sphi 0, %s55
      %s73 = sphi 0, %s73
      %s75 = sphi 0, %s73
      %s76 = sphi 0, %s75
      %s90 = sphi 0, %s76
      %s94 = sphi 0, %s94
      %s96 = sphi 0, %s94
      %s97 = sphi 0, %s96
      %s111 = sphi 0, %s97
      %s115 = sphi 0, %s115
      %s117 = sphi 0, %s115
      %s118 = sphi 0, %s117
      %s132 = sphi 0, %s118
      %s138 = sphi 0, %s140
      %s141 = sphi 0, %s138
      %s142 = sphi 0, %s141
      %s158 = sphi 0, %s142
    $region4: #{tpu_custom_call.1} parent=1 // loop_header_branch
      %21 = sbr.rel (%p19) target = $region8
    $region5: #{tpu_custom_call.1} parent=1 // loop_body
      %s23 = ssub.s32 %s18, 1
      %s24 = ssub.s32 %s18, 2
      %s25 = sadd.s32 %s18, 1
      %s26 = ssub.s32 %s18, %s25
      %p27 = scmp.eq.s32.totalorder %s26, 0
      %s29 = sadd.s32 %s28, 1
      %s30 = scalar_select %p27, %s28, %s29
      %p33 = pneg %p27
      %p34 = scmp.eq.s32.totalorder %s18, 1
      %p35 = por %p33, %p34
      %p36 = scmp.ne.s32.totalorder %s28, %s31
      %p37 = scmp.eq.s32.totalorder %s18, 0
      %p38 = por %p36, %p37
      %p39 = scmp.ne.s32.totalorder %s28, %s31
      %p40 = scmp.eq.s32.totalorder %s23, 1
      %p41 = por %p39, %p40
      %p42 = scmp.ne.s32.totalorder %s31, %s32
      %p43 = scmp.eq.s32.totalorder %s23, 0
      %p44 = por %p42, %p43
      %p45 = scmp.ne.s32.totalorder %s31, %s32
      %p46 = scmp.eq.s32.totalorder %s24, 1
      %p47 = por %p45, %p46
      %p49 = scmp.ne.s32.totalorder %s32, %s48
      %p50 = scmp.eq.s32.totalorder %s24, 0
      %p51 = por %p49, %p50
      %s53 = sadd.s32 %s52, 1
      %p56 = scmp.eq.s32.totalorder %s18, 1
      %p57 = scmp.ne.s32.totalorder %s52, %s54
      %p58 = scmp.eq.s32.totalorder %s18, 0
      %p59 = por %p57, %p58
      %p60 = scmp.ne.s32.totalorder %s52, %s54
      %p61 = scmp.eq.s32.totalorder %s23, 1
      %p62 = por %p60, %p61
      %p63 = scmp.ne.s32.totalorder %s54, %s55
      %p64 = scmp.eq.s32.totalorder %s23, 0
      %p65 = por %p63, %p64
      %p66 = scmp.ne.s32.totalorder %s54, %s55
      %p67 = scmp.eq.s32.totalorder %s24, 1
      %p68 = por %p66, %p67
      %p70 = scmp.ne.s32.totalorder %s55, %s69
      %p71 = scmp.eq.s32.totalorder %s24, 0
      %p72 = por %p70, %p71
      %s74 = sadd.s32 %s73, 1
      %p77 = scmp.eq.s32.totalorder %s18, 1
      %p78 = scmp.ne.s32.totalorder %s73, %s75
      %p79 = scmp.eq.s32.totalorder %s18, 0
      %p80 = por %p78, %p79
      %p81 = scmp.ne.s32.totalorder %s73, %s75
      %p82 = scmp.eq.s32.totalorder %s23, 1
      %p83 = por %p81, %p82
      %p84 = scmp.ne.s32.totalorder %s75, %s76
      %p85 = scmp.eq.s32.totalorder %s23, 0
      %p86 = por %p84, %p85
      %p87 = scmp.ne.s32.totalorder %s75, %s76
      %p88 = scmp.eq.s32.totalorder %s24, 1
      %p89 = por %p87, %p88
      %p91 = scmp.ne.s32.totalorder %s76, %s90
      %p92 = scmp.eq.s32.totalorder %s24, 0
      %p93 = por %p91, %p92
      %s95 = sadd.s32 %s94, 1
      %p98 = scmp.eq.s32.totalorder %s18, 1
      %p99 = scmp.ne.s32.totalorder %s94, %s96
      %p100 = scmp.eq.s32.totalorder %s18, 0
      %p101 = por %p99, %p100
      %p102 = scmp.ne.s32.totalorder %s94, %s96
      %p103 = scmp.eq.s32.totalorder %s23, 1
      %p104 = por %p102, %p103
      %p105 = scmp.ne.s32.totalorder %s96, %s97
      %p106 = scmp.eq.s32.totalorder %s23, 0
      %p107 = por %p105, %p106
      %p108 = scmp.ne.s32.totalorder %s96, %s97
      %p109 = scmp.eq.s32.totalorder %s24, 1
      %p110 = por %p108, %p109
      %p112 = scmp.ne.s32.totalorder %s97, %s111
      %p113 = scmp.eq.s32.totalorder %s24, 0
      %p114 = por %p112, %p113
      %s116 = sadd.s32 %s115, 1
      %p119 = scmp.eq.s32.totalorder %s18, 1
      %p120 = scmp.ne.s32.totalorder %s115, %s117
      %p121 = scmp.eq.s32.totalorder %s18, 0
      %p122 = por %p120, %p121
      %p123 = scmp.ne.s32.totalorder %s115, %s117
      %p124 = scmp.eq.s32.totalorder %s23, 1
      %p125 = por %p123, %p124
      %p126 = scmp.ne.s32.totalorder %s117, %s118
      %p127 = scmp.eq.s32.totalorder %s23, 0
      %p128 = por %p126, %p127
      %p129 = scmp.ne.s32.totalorder %s117, %s118
      %p130 = scmp.eq.s32.totalorder %s24, 1
      %p131 = por %p129, %p130
      %p133 = scmp.ne.s32.totalorder %s118, %s132
      %p134 = scmp.eq.s32.totalorder %s24, 0
      %p135 = por %p133, %p134
      %s136 = ssub.s32 %s18, %s25
      %p137 = scmp.eq.s32.totalorder %s136, 0
      %s139 = sadd.s32 %s138, 1
      %s140 = scalar_select %p137, %s138, %s139
      %p143 = pneg %p137
      %p144 = scmp.eq.s32.totalorder %s18, 1
      %p145 = por %p143, %p144
      %p146 = scmp.ne.s32.totalorder %s138, %s141
      %p147 = scmp.eq.s32.totalorder %s18, 0
      %p148 = por %p146, %p147
      %p149 = scmp.ne.s32.totalorder %s138, %s141
      %p150 = scmp.eq.s32.totalorder %s23, 1
      %p151 = por %p149, %p150
      %p152 = scmp.ne.s32.totalorder %s141, %s142
      %p153 = scmp.eq.s32.totalorder %s23, 0
      %p154 = por %p152, %p153
      %p155 = scmp.ne.s32.totalorder %s141, %s142
      %p156 = scmp.eq.s32.totalorder %s24, 1
      %p157 = por %p155, %p156
      %p159 = scmp.ne.s32.totalorder %s142, %s158
      %p160 = scmp.eq.s32.totalorder %s24, 0
      %p161 = por %p159, %p160
      %p162 = scmp.le.s32.totalorder 1, %s18
      %p163 = scmp.lt.s32.totalorder %s18, 3
      %p164 = pnand %p162, %p163
      %p165 = pneg %p164
      // Predicated region
      $region9: #{tpu_custom_call.1} parent=5 // pred_check
        _
      $region10: #{tpu_custom_call.1} parent=5 // pred_check_branch
        %167 = sbr.rel (%p164) target = $region12
      $region11: #{tpu_custom_call.1} parent=5 // pred_region
        %s168 = ssub.s32 %s18, 1
        // Predicated region
        $region13: #{tpu_custom_call.1} parent=11 // pred_check
          %p169 = pneg %p65
        $region14: #{tpu_custom_call.1} parent=11 // pred_check_branch
          %171 = sbr.rel (%p169) target = $region16
        $region15: #{tpu_custom_call.1} parent=11 // pred_region
          %s173 = ssub.s32 1024, 1024
          %174 = vsyncadd [#allocation8], %s173
          %s175 = sshll.u32 [#allocation7], 4
          %s176 = int_to_ptr.vmem [resolvable:$true] %s175
          %181 = dma.hbm_to_vmem [thread:$0]  %s1, 1024, %s176, [#allocation8], 64, 64, 4
        $region16: #{tpu_custom_call.1} parent=11 // pred_fallthru
          _
        // Predicated region
        $region17: #{tpu_custom_call.1} parent=11 // pred_check
          %p182 = pneg %p86
        $region18: #{tpu_custom_call.1} parent=11 // pred_check_branch
          %184 = sbr.rel (%p182) target = $region20
        $region19: #{tpu_custom_call.1} parent=11 // pred_region
          _
        $region20: #{tpu_custom_call.1} parent=11 // pred_fallthru
          _
        // Predicated region
        $region21: #{tpu_custom_call.1} parent=11 // pred_check
          %p185 = pneg %p107
        $region22: #{tpu_custom_call.1} parent=11 // pred_check_branch
          %187 = sbr.rel (%p185) target = $region24
        $region23: #{tpu_custom_call.1} parent=11 // pred_region
          %s189 = ssub.s32 9216, 9216
          %190 = vsyncadd [#allocation8], %s189
          %s191 = sshll.u32 [#allocation9], 4
          %s192 = int_to_ptr.vmem [resolvable:$true] %s191
          %197 = dma.hbm_to_vmem [thread:$0]  %s3, 9216, %s192, [#allocation8], 64, 64, 4
        $region24: #{tpu_custom_call.1} parent=11 // pred_fallthru
          _
        // Predicated region
        $region25: #{tpu_custom_call.1} parent=11 // pred_check
          %p198 = pneg %p128
        $region26: #{tpu_custom_call.1} parent=11 // pred_check_branch
          %200 = sbr.rel (%p198) target = $region28
        $region27: #{tpu_custom_call.1} parent=11 // pred_region
          _
        $region28: #{tpu_custom_call.1} parent=11 // pred_fallthru
          _
      $region12: #{tpu_custom_call.1} parent=5 // pred_fallthru
        _
      %p201 = scmp.lt.s32.totalorder %s18, 2
      // Predicated region
      $region29: #{tpu_custom_call.1} parent=5 // pred_check
        %p202 = pneg %p201
      $region30: #{tpu_custom_call.1} parent=5 // pred_check_branch
        %204 = sbr.rel (%p202) target = $region32
      $region31: #{tpu_custom_call.1} parent=5 // pred_region
        // Predicated region
        $region33: #{tpu_custom_call.1} parent=31 // pred_check
          %p205 = pneg %p38
        $region34: #{tpu_custom_call.1} parent=31 // pred_check_branch
          %207 = sbr.rel (%p205) target = $region36
        $region35: #{tpu_custom_call.1} parent=31 // pred_region
          %s208 = sand.u32 %s28, 1
          %s209 = scalar_lea.sflag [#allocation5], %s208
          %s210 = sand.u32 %s28, 1
          %s211 = smul.addr %s210, 128
          %s212 = scalar_lea.vmem [#allocation4], %s211
          %s214 = ssub.s32 2048, 2048
          %215 = vsyncadd %s209, %s214
          %s216 = smul.addr %s18, 32
          %s217 = smul.addr %s216, 64
          %s218 = scalar_lea.hbm %s0, %s217
          %s219 = sshll.u32 %s212, 4
          %s220 = int_to_ptr.vmem [resolvable:$true] %s219
          %225 = dma.hbm_to_vmem [thread:$0]  %s218, 2048, %s220, %s209, 64, 64, 4
        $region36: #{tpu_custom_call.1} parent=31 // pred_fallthru
          _
      $region32: #{tpu_custom_call.1} parent=5 // pred_fallthru
        _
      %p226 = scmp.le.s32.totalorder 1, %s18
      %p227 = scmp.lt.s32.totalorder %s18, 3
      %p228 = pnand %p226, %p227
      %p229 = pneg %p228
      // Predicated region
      $region37: #{tpu_custom_call.1} parent=5 // pred_check
        _
      $region38: #{tpu_custom_call.1} parent=5 // pred_check_branch
        %231 = sbr.rel (%p228) target = $region40
      $region39: #{tpu_custom_call.1} parent=5 // pred_region
        %s232 = ssub.s32 %s18, 1
        %s233 = sand.u32 %s31, 1
        %s234 = scalar_lea.sflag [#allocation5], %s233
        %s235 = sand.u32 %s31, 1
        %s236 = smul.addr %s235, 128
        %s237 = scalar_lea.vmem [#allocation4], %s236
        // Predicated region
        $region41: #{tpu_custom_call.1} parent=39 // pred_check
          %p238 = pneg %p44
        $region42: #{tpu_custom_call.1} parent=39 // pred_check_branch
          %240 = sbr.rel (%p238) target = $region44
        $region43: #{tpu_custom_call.1} parent=39 // pred_region
          %241 = dma.done %s234, 2048
        $region44: #{tpu_custom_call.1} parent=39 // pred_fallthru
          _
        // Predicated region
        $region45: #{tpu_custom_call.1} parent=39 // pred_check
          %p242 = pneg %p65
        $region46: #{tpu_custom_call.1} parent=39 // pred_check_branch
          %244 = sbr.rel (%p242) target = $region48
        $region47: #{tpu_custom_call.1} parent=39 // pred_region
          %245 = dma.done [#allocation8], 1024
        $region48: #{tpu_custom_call.1} parent=39 // pred_fallthru
          _
        // Predicated region
        $region49: #{tpu_custom_call.1} parent=39 // pred_check
          %p246 = pneg %p107
        $region50: #{tpu_custom_call.1} parent=39 // pred_check_branch
          %248 = sbr.rel (%p246) target = $region52
        $region51: #{tpu_custom_call.1} parent=39 // pred_region
          %249 = dma.done [#allocation8], 9216
        $region52: #{tpu_custom_call.1} parent=39 // pred_fallthru
          _
        %s250 = sand.u32 %s31, 1
        %s251 = scalar_lea.sflag [#allocation5], %s250
        %s252 = sand.u32 %s31, 1
        %s253 = smul.addr %s252, 128
        %s254 = scalar_lea.vmem [#allocation4], %s253
        %p255 = pneg %p44
        %p256 = pneg %p41
        %p257 = pneg %p65
        %p258 = pneg %p62
        %p259 = pneg %p86
        %p260 = pneg %p83
        %p261 = pneg %p107
        %p262 = pneg %p104
        %p263 = pneg %p128
        %p264 = pneg %p125
        %p265 = pneg %p154
        %p266 = pneg %p151
        %s267 = sand.u32 %s141, 1
        %s268 = scalar_lea.sflag [#allocation6], %s267
        %s269 = sand.u32 %s141, 1
        %s270 = smul.addr %s269, 128
        %s271 = scalar_lea.vmem [#allocation10], %s270
        %v273 = vld [vmem:[%s237] sm:$0xf]
        %v274 = vld [vmem:[%s237 + $0x4] sm:$0xf]
        %v275 = vld [vmem:[%s237 + $0x8] sm:$0xf]
        %v276 = vld [vmem:[%s237 + $0xc] sm:$0xf]
        %v277 = vld [vmem:[%s237 + $0x10] sm:$0xf]
        %v278 = vld [vmem:[%s237 + $0x14] sm:$0xf]
        %v279 = vld [vmem:[%s237 + $0x18] sm:$0xf]
        %v280 = vld [vmem:[%s237 + $0x1c] sm:$0xf]
        %v281 = vld [vmem:[%s237 + $0x20] sm:$0xf]
        %v282 = vld [vmem:[%s237 + $0x24] sm:$0xf]
        %v283 = vld [vmem:[%s237 + $0x28] sm:$0xf]
        %v284 = vld [vmem:[%s237 + $0x2c] sm:$0xf]
        %v285 = vld [vmem:[%s237 + $0x30] sm:$0xf]
        %v286 = vld [vmem:[%s237 + $0x34] sm:$0xf]
        %v287 = vld [vmem:[%s237 + $0x38] sm:$0xf]
        %v288 = vld [vmem:[%s237 + $0x3c] sm:$0xf]
        %v289 = vld [vmem:[%s237 + $0x40] sm:$0xf]
        %v290 = vld [vmem:[%s237 + $0x44] sm:$0xf]
        %v291 = vld [vmem:[%s237 + $0x48] sm:$0xf]
        %v292 = vld [vmem:[%s237 + $0x4c] sm:$0xf]
        %v293 = vld [vmem:[%s237 + $0x50] sm:$0xf]
        %v294 = vld [vmem:[%s237 + $0x54] sm:$0xf]
        %v295 = vld [vmem:[%s237 + $0x58] sm:$0xf]
        %v296 = vld [vmem:[%s237 + $0x5c] sm:$0xf]
        %v297 = vld [vmem:[%s237 + $0x60] sm:$0xf]
        %v298 = vld [vmem:[%s237 + $0x64] sm:$0xf]
        %v299 = vld [vmem:[%s237 + $0x68] sm:$0xf]
        %v300 = vld [vmem:[%s237 + $0x6c] sm:$0xf]
        %v301 = vld [vmem:[%s237 + $0x70] sm:$0xf]
        %v302 = vld [vmem:[%s237 + $0x74] sm:$0xf]
        %v303 = vld [vmem:[%s237 + $0x78] sm:$0xf]
        %v304 = vld [vmem:[%s237 + $0x7c] sm:$0xf]
        %v305 = vld [vmem:[#allocation7] sm:$0xf]
        %v306 = vld [vmem:[#allocation7 + $0x4] sm:$0xf]
        %v307 = vld [vmem:[#allocation7 + $0x8] sm:$0xf]
        %v308 = vld [vmem:[#allocation7 + $0xc] sm:$0xf]
        %v309 = vld [vmem:[#allocation7 + $0x10] sm:$0xf]
        %v310 = vld [vmem:[#allocation7 + $0x14] sm:$0xf]
        %v311 = vld [vmem:[#allocation7 + $0x18] sm:$0xf]
        %v312 = vld [vmem:[#allocation7 + $0x1c] sm:$0xf]
        %v313 = vld [vmem:[#allocation7 + $0x20] sm:$0xf]
        %v314 = vld [vmem:[#allocation7 + $0x24] sm:$0xf]
        %v315 = vld [vmem:[#allocation7 + $0x28] sm:$0xf]
        %v316 = vld [vmem:[#allocation7 + $0x2c] sm:$0xf]
        %v317 = vld [vmem:[#allocation7 + $0x30] sm:$0xf]
        %v318 = vld [vmem:[#allocation7 + $0x34] sm:$0xf]
        %v319 = vld [vmem:[#allocation7 + $0x38] sm:$0xf]
        %v320 = vld [vmem:[#allocation7 + $0x3c] sm:$0xf]
        %v321 = vld [vmem:[%s2] sm:$0x1]
        %v323 = vlaneseq
        %v324 = vshrl.u32 %v323, 7
        %v325 = vsub.s32 0, %v324
        %v326 = vrot.slane %v321, %v325
        %v360 = vunpack.c.l.b16 %v273
        %v361 = vunpack.c.l.b16 %v274
        %v362 = vunpack.c.l.b16 %v275
        %v363 = vunpack.c.l.b16 %v276
        %v364 = vunpack.c.l.b16 %v277
        %v365 = vunpack.c.l.b16 %v278
        %v366 = vunpack.c.l.b16 %v279
        %v367 = vunpack.c.l.b16 %v280
        %v368 = vunpack.c.l.b16 %v281
        %v369 = vunpack.c.l.b16 %v282
        %v370 = vunpack.c.l.b16 %v283
        %v371 = vunpack.c.l.b16 %v284
        %v372 = vunpack.c.l.b16 %v285
        %v373 = vunpack.c.l.b16 %v286
        %v374 = vunpack.c.l.b16 %v287
        %v375 = vunpack.c.l.b16 %v288
        %v376 = vunpack.c.l.b16 %v289
        %v377 = vunpack.c.l.b16 %v290
        %v378 = vunpack.c.l.b16 %v291
        %v379 = vunpack.c.l.b16 %v292
        %v380 = vunpack.c.l.b16 %v293
        %v381 = vunpack.c.l.b16 %v294
        %v382 = vunpack.c.l.b16 %v295
        %v383 = vunpack.c.l.b16 %v296
        %v384 = vunpack.c.l.b16 %v297
        %v385 = vunpack.c.l.b16 %v298
        %v386 = vunpack.c.l.b16 %v299
        %v387 = vunpack.c.l.b16 %v300
        %v388 = vunpack.c.l.b16 %v301
        %v389 = vunpack.c.l.b16 %v302
        %v390 = vunpack.c.l.b16 %v303
        %v391 = vunpack.c.l.b16 %v304
        %v392 = vpack.c.b16 %v361, %v360
        %v393 = vpack.c.b16 %v363, %v362
        %v394 = vpack.c.b16 %v365, %v364
        %v395 = vpack.c.b16 %v367, %v366
        %v396 = vpack.c.b16 %v369, %v368
        %v397 = vpack.c.b16 %v371, %v370
        %v398 = vpack.c.b16 %v373, %v372
        %v399 = vpack.c.b16 %v375, %v374
        %v400 = vpack.c.b16 %v377, %v376
        %v401 = vpack.c.b16 %v379, %v378
        %v402 = vpack.c.b16 %v381, %v380
        %v403 = vpack.c.b16 %v383, %v382
        %v404 = vpack.c.b16 %v385, %v384
        %v405 = vpack.c.b16 %v387, %v386
        %v406 = vpack.c.b16 %v389, %v388
        %v407 = vpack.c.b16 %v391, %v390
        %v440 = vunpack.c.l.b16 %v305
        %v441 = vunpack.c.l.b16 %v306
        %v442 = vunpack.c.l.b16 %v307
        %v443 = vunpack.c.l.b16 %v308
        %v444 = vunpack.c.l.b16 %v309
        %v445 = vunpack.c.l.b16 %v310
        %v446 = vunpack.c.l.b16 %v311
        %v447 = vunpack.c.l.b16 %v312
        %v448 = vunpack.c.l.b16 %v313
        %v449 = vunpack.c.l.b16 %v314
        %v450 = vunpack.c.l.b16 %v315
        %v451 = vunpack.c.l.b16 %v316
        %v452 = vunpack.c.l.b16 %v317
        %v453 = vunpack.c.l.b16 %v318
        %v454 = vunpack.c.l.b16 %v319
        %v455 = vunpack.c.l.b16 %v320
        %v456 = vpack.c.b16 %v441, %v440
        %v457 = vpack.c.b16 %v443, %v442
        %v458 = vpack.c.b16 %v445, %v444
        %v459 = vpack.c.b16 %v447, %v446
        %v460 = vpack.c.b16 %v449, %v448
        %v461 = vpack.c.b16 %v451, %v450
        %v462 = vpack.c.b16 %v453, %v452
        %v463 = vpack.c.b16 %v455, %v454
        %472 = vmatprep.subr.bf16.mxu0 0
        %473 = vmatpush1.bf16.msra.mxu0 %v456
        %474 = vmatprep.subr.bf16.mxu0 0
        %475 = vmatpush1.bf16.msra.mxu0 %v457
        %476 = vmatprep.subr.bf16.mxu0 0
        %477 = vmatpush1.bf16.msra.mxu0 %v458
        %478 = vmatprep.subr.bf16.mxu0 0
        %479 = vmatpush1.bf16.msra.mxu0 %v459
        %480 = vmatprep.subr.bf16.mxu0 0
        %481 = vmatpush1.bf16.msra.mxu0 %v460
        %482 = vmatprep.subr.bf16.mxu0 0
        %483 = vmatpush1.bf16.msra.mxu0 %v461
        %484 = vmatprep.subr.bf16.mxu0 0
        %485 = vmatpush1.bf16.msra.mxu0 %v462
        %486 = vmatprep.subr.bf16.mxu0 0
        %487 = vmatpush1.bf16.msra.mxu0 %v463
        %488 = vmatprep.subr.bf16.mxu0 0
        %489 = vmatpush1.bf16.msra.mxu0 0
        %490 = vmatprep.subr.bf16.mxu0 0
        %491 = vmatpush1.bf16.msra.mxu0 0
        %492 = vmatprep.subr.bf16.mxu0 0
        %493 = vmatpush1.bf16.msra.mxu0 0
        %494 = vmatprep.subr.bf16.mxu0 0
        %495 = vmatpush1.bf16.msra.mxu0 0
        %496 = vmatprep.subr.bf16.mxu0 0
        %497 = vmatpush1.bf16.msra.mxu0 0
        %498 = vmatprep.subr.bf16.mxu0 0
        %499 = vmatpush1.bf16.msra.mxu0 0
        %500 = vmatprep.subr.bf16.mxu0 0
        %501 = vmatpush1.bf16.msra.mxu0 0
        %502 = vmatprep.subr.bf16.mxu0 0
        %503 = vmatpush1.bf16.msra.mxu0 0
        %504 = vmatprep.mubr.bf16.mxu0 0
        %505 = vmatmul.mubr.bf16.gmra.mrb[0].mxu0 %v392
        %v506 = vpop.f32.mrb[0].mxu0
        %v507 = vadd.f32 %v326, %v506
        %v508 = vpop.f32.mrb[0].mxu0
        %v509 = vpop.f32.mrb[0].mxu0
        %v510 = vadd.f32 %v326, %v509
        %v511 = vpop.f32.mrb[0].mxu0
        %512 = vmatprep.mubr.bf16.mxu0 0
        %513 = vmatmul.mubr.bf16.gmra.mrb[0].mxu0 %v393
        %v514 = vpop.f32.mrb[0].mxu0
        %v515 = vadd.f32 %v326, %v514
        %v516 = vpop.f32.mrb[0].mxu0
        %v517 = vpop.f32.mrb[0].mxu0
        %v518 = vadd.f32 %v326, %v517
        %v519 = vpop.f32.mrb[0].mxu0
        %520 = vmatprep.mubr.bf16.mxu0 0
        %521 = vmatmul.mubr.bf16.gmra.mrb[0].mxu0 %v394
        %v522 = vpop.f32.mrb[0].mxu0
        %v523 = vadd.f32 %v326, %v522
        %v524 = vpop.f32.mrb[0].mxu0
        %v525 = vpop.f32.mrb[0].mxu0
        %v526 = vadd.f32 %v326, %v525
        %v527 = vpop.f32.mrb[0].mxu0
        %528 = vmatprep.mubr.bf16.mxu0 0
        %529 = vmatmul.mubr.bf16.gmra.mrb[0].mxu0 %v395
        %v530 = vpop.f32.mrb[0].mxu0
        %v531 = vadd.f32 %v326, %v530
        %v532 = vpop.f32.mrb[0].mxu0
        %v533 = vpop.f32.mrb[0].mxu0
        %v534 = vadd.f32 %v326, %v533
        %v535 = vpop.f32.mrb[0].mxu0
        %536 = vmatprep.mubr.bf16.mxu0 0
        %537 = vmatmul.mubr.bf16.gmra.mrb[0].mxu0 %v396
        %v538 = vpop.f32.mrb[0].mxu0
        %v539 = vadd.f32 %v326, %v538
        %v540 = vpop.f32.mrb[0].mxu0
        %v541 = vpop.f32.mrb[0].mxu0
        %v542 = vadd.f32 %v326, %v541
        %v543 = vpop.f32.mrb[0].mxu0
        %544 = vmatprep.mubr.bf16.mxu0 0
        %545 = vmatmul.mubr.bf16.gmra.mrb[0].mxu0 %v397
        %v546 = vpop.f32.mrb[0].mxu0
        %v547 = vadd.f32 %v326, %v546
        %v548 = vpop.f32.mrb[0].mxu0
        %v549 = vpop.f32.mrb[0].mxu0
        %v550 = vadd.f32 %v326, %v549
        %v551 = vpop.f32.mrb[0].mxu0
        %552 = vmatprep.mubr.bf16.mxu0 0
        %553 = vmatmul.mubr.bf16.gmra.mrb[0].mxu0 %v398
        %v554 = vpop.f32.mrb[0].mxu0
        %v555 = vadd.f32 %v326, %v554
        %v556 = vpop.f32.mrb[0].mxu0
        %v557 = vpop.f32.mrb[0].mxu0
        %v558 = vadd.f32 %v326, %v557
        %v559 = vpop.f32.mrb[0].mxu0
        %560 = vmatprep.mubr.bf16.mxu0 0
        %561 = vmatmul.mubr.bf16.gmra.mrb[0].mxu0 %v399
        %v562 = vpop.f32.mrb[0].mxu0
        %v563 = vadd.f32 %v326, %v562
        %v564 = vpop.f32.mrb[0].mxu0
        %v565 = vpop.f32.mrb[0].mxu0
        %v566 = vadd.f32 %v326, %v565
        %v567 = vpop.f32.mrb[0].mxu0
        %568 = vmatprep.mubr.bf16.mxu0 0
        %569 = vmatmul.mubr.bf16.gmra.mrb[0].mxu0 %v400
        %v570 = vpop.f32.mrb[0].mxu0
        %v571 = vadd.f32 %v326, %v570
        %v572 = vpop.f32.mrb[0].mxu0
        %v573 = vpop.f32.mrb[0].mxu0
        %v574 = vadd.f32 %v326, %v573
        %v575 = vpop.f32.mrb[0].mxu0
        %576 = vmatprep.mubr.bf16.mxu0 0
        %577 = vmatmul.mubr.bf16.gmra.mrb[0].mxu0 %v401
        %v578 = vpop.f32.mrb[0].mxu0
        %v579 = vadd.f32 %v326, %v578
        %v580 = vpop.f32.mrb[0].mxu0
        %v581 = vpop.f32.mrb[0].mxu0
        %v582 = vadd.f32 %v326, %v581
        %v583 = vpop.f32.mrb[0].mxu0
        %584 = vmatprep.mubr.bf16.mxu0 0
        %585 = vmatmul.mubr.bf16.gmra.mrb[0].mxu0 %v402
        %v586 = vpop.f32.mrb[0].mxu0
        %v587 = vadd.f32 %v326, %v586
        %v588 = vpop.f32.mrb[0].mxu0
        %v589 = vpop.f32.mrb[0].mxu0
        %v590 = vadd.f32 %v326, %v589
        %v591 = vpop.f32.mrb[0].mxu0
        %592 = vmatprep.mubr.bf16.mxu0 0
        %593 = vmatmul.mubr.bf16.gmra.mrb[0].mxu0 %v403
        %v594 = vpop.f32.mrb[0].mxu0
        %v595 = vadd.f32 %v326, %v594
        %v596 = vpop.f32.mrb[0].mxu0
        %v597 = vpop.f32.mrb[0].mxu0
        %v598 = vadd.f32 %v326, %v597
        %v599 = vpop.f32.mrb[0].mxu0
        %600 = vmatprep.mubr.bf16.mxu0 0
        %601 = vmatmul.mubr.bf16.gmra.mrb[0].mxu0 %v404
        %v602 = vpop.f32.mrb[0].mxu0
        %v603 = vadd.f32 %v326, %v602
        %v604 = vpop.f32.mrb[0].mxu0
        %v605 = vpop.f32.mrb[0].mxu0
        %v606 = vadd.f32 %v326, %v605
        %v607 = vpop.f32.mrb[0].mxu0
        %608 = vmatprep.mubr.bf16.mxu0 0
        %609 = vmatmul.mubr.bf16.gmra.mrb[0].mxu0 %v405
        %v610 = vpop.f32.mrb[0].mxu0
        %v611 = vadd.f32 %v326, %v610
        %v612 = vpop.f32.mrb[0].mxu0
        %v613 = vpop.f32.mrb[0].mxu0
        %v614 = vadd.f32 %v326, %v613
        %v615 = vpop.f32.mrb[0].mxu0
        %616 = vmatprep.mubr.bf16.mxu0 0
        %617 = vmatmul.mubr.bf16.gmra.mrb[0].mxu0 %v406
        %v618 = vpop.f32.mrb[0].mxu0
        %v619 = vadd.f32 %v326, %v618
        %v620 = vpop.f32.mrb[0].mxu0
        %v621 = vpop.f32.mrb[0].mxu0
        %v622 = vadd.f32 %v326, %v621
        %v623 = vpop.f32.mrb[0].mxu0
        %624 = vmatprep.mubr.bf16.mxu0 0
        %625 = vmatmul.mubr.bf16.gmra.mrb[0].mxu0 %v407
        %v626 = vpop.f32.mrb[0].mxu0
        %v627 = vadd.f32 %v326, %v626
        %v628 = vpop.f32.mrb[0].mxu0
        %v629 = vpop.f32.mrb[0].mxu0
        %v630 = vadd.f32 %v326, %v629
        %v631 = vpop.f32.mrb[0].mxu0
        %632 = vdwg.mxu0
        %v633 = vmax.f32 %v507, 0.0
        %v634 = vmax.f32 %v510, 0.0
        %v635 = vmax.f32 %v515, 0.0
        %v636 = vmax.f32 %v518, 0.0
        %v637 = vmax.f32 %v523, 0.0
        %v638 = vmax.f32 %v526, 0.0
        %v639 = vmax.f32 %v531, 0.0
        %v640 = vmax.f32 %v534, 0.0
        %v641 = vmax.f32 %v539, 0.0
        %v642 = vmax.f32 %v542, 0.0
        %v643 = vmax.f32 %v547, 0.0
        %v644 = vmax.f32 %v550, 0.0
        %v645 = vmax.f32 %v555, 0.0
        %v646 = vmax.f32 %v558, 0.0
        %v647 = vmax.f32 %v563, 0.0
        %v648 = vmax.f32 %v566, 0.0
        %v649 = vmax.f32 %v571, 0.0
        %v650 = vmax.f32 %v574, 0.0
        %v651 = vmax.f32 %v579, 0.0
        %v652 = vmax.f32 %v582, 0.0
        %v653 = vmax.f32 %v587, 0.0
        %v654 = vmax.f32 %v590, 0.0
        %v655 = vmax.f32 %v595, 0.0
        %v656 = vmax.f32 %v598, 0.0
        %v657 = vmax.f32 %v603, 0.0
        %v658 = vmax.f32 %v606, 0.0
        %v659 = vmax.f32 %v611, 0.0
        %v660 = vmax.f32 %v614, 0.0
        %v661 = vmax.f32 %v619, 0.0
        %v662 = vmax.f32 %v622, 0.0
        %v663 = vmax.f32 %v627, 0.0
        %v664 = vmax.f32 %v630, 0.0
        %665 = vst [vmem:[#allocation2] sm:$0xff] 0.0
        %666 = vst [vmem:[#allocation2 + $0x8] sm:$0xff] 0.0
        %667 = vst [vmem:[#allocation2 + $0x10] sm:$0x3] 0.0
        %s668 = scalar_lea.vmem [#allocation2], 408
        %669 = vst [vmem:[%s668] sm:$0xff] 0.0
        %670 = vst [vmem:[%s668 + $0x8] sm:$0xff] 0.0
        %671 = vst [vmem:[%s668 + $0x10] sm:$0x3] 0.0
        %s672 = scalar_lea.vmem [#allocation2], 24
        %673 = vst [vmem:[%s672] sm:$0x1] 0.0
        %674 = vst [vmem:[%s672 + $0x18] sm:$0x1] 0.0
        %675 = vst [vmem:[%s672 + $0x30] sm:$0x1] 0.0
        %676 = vst [vmem:[%s672 + $0x48] sm:$0x1] 0.0
        %677 = vst [vmem:[%s672 + $0x60] sm:$0x1] 0.0
        %678 = vst [vmem:[%s672 + $0x78] sm:$0x1] 0.0
        %679 = vst [vmem:[%s672 + $0x90] sm:$0x1] 0.0
        %680 = vst [vmem:[%s672 + $0xa8] sm:$0x1] 0.0
        %681 = vst [vmem:[%s672 + $0xc0] sm:$0x1] 0.0
        %682 = vst [vmem:[%s672 + $0xd8] sm:$0x1] 0.0
        %683 = vst [vmem:[%s672 + $0xf0] sm:$0x1] 0.0
        %684 = vst [vmem:[%s672 + $0x108] sm:$0x1] 0.0
        %685 = vst [vmem:[%s672 + $0x120] sm:$0x1] 0.0
        %686 = vst [vmem:[%s672 + $0x138] sm:$0x1] 0.0
        %687 = vst [vmem:[%s672 + $0x150] sm:$0x1] 0.0
        %688 = vst [vmem:[%s672 + $0x168] sm:$0x1] 0.0
        %689 = vst [vmem:[%s672 + $0x11] sm:$0x1] 0.0
        %690 = vst [vmem:[%s672 + $0x29] sm:$0x1] 0.0
        %691 = vst [vmem:[%s672 + $0x41] sm:$0x1] 0.0
        %692 = vst [vmem:[%s672 + $0x59] sm:$0x1] 0.0
        %693 = vst [vmem:[%s672 + $0x71] sm:$0x1] 0.0
        %694 = vst [vmem:[%s672 + $0x89] sm:$0x1] 0.0
        %695 = vst [vmem:[%s672 + $0xa1] sm:$0x1] 0.0
        %696 = vst [vmem:[%s672 + $0xb9] sm:$0x1] 0.0
        %697 = vst [vmem:[%s672 + $0xd1] sm:$0x1] 0.0
        %698 = vst [vmem:[%s672 + $0xe9] sm:$0x1] 0.0
        %699 = vst [vmem:[%s672 + $0x101] sm:$0x1] 0.0
        %700 = vst [vmem:[%s672 + $0x119] sm:$0x1] 0.0
        %701 = vst [vmem:[%s672 + $0x131] sm:$0x1] 0.0
        %702 = vst [vmem:[%s672 + $0x149] sm:$0x1] 0.0
        %703 = vst [vmem:[%s672 + $0x161] sm:$0x1] 0.0
        %704 = vst [vmem:[%s672 + $0x179] sm:$0x1] 0.0
        %705 = vst [vmem:[%s672 + $0x1] sm:$0xff] %v633
        %706 = vst [vmem:[%s672 + $0x9] sm:$0xff] %v634
        %707 = vst [vmem:[%s672 + $0x19] sm:$0xff] %v635
        %708 = vst [vmem:[%s672 + $0x21] sm:$0xff] %v636
        %709 = vst [vmem:[%s672 + $0x31] sm:$0xff] %v637
        %710 = vst [vmem:[%s672 + $0x39] sm:$0xff] %v638
        %711 = vst [vmem:[%s672 + $0x49] sm:$0xff] %v639
        %712 = vst [vmem:[%s672 + $0x51] sm:$0xff] %v640
        %713 = vst [vmem:[%s672 + $0x61] sm:$0xff] %v641
        %714 = vst [vmem:[%s672 + $0x69] sm:$0xff] %v642
        %715 = vst [vmem:[%s672 + $0x79] sm:$0xff] %v643
        %716 = vst [vmem:[%s672 + $0x81] sm:$0xff] %v644
        %717 = vst [vmem:[%s672 + $0x91] sm:$0xff] %v645
        %718 = vst [vmem:[%s672 + $0x99] sm:$0xff] %v646
        %719 = vst [vmem:[%s672 + $0xa9] sm:$0xff] %v647
        %720 = vst [vmem:[%s672 + $0xb1] sm:$0xff] %v648
        %721 = vst [vmem:[%s672 + $0xc1] sm:$0xff] %v649
        %722 = vst [vmem:[%s672 + $0xc9] sm:$0xff] %v650
        %723 = vst [vmem:[%s672 + $0xd9] sm:$0xff] %v651
        %724 = vst [vmem:[%s672 + $0xe1] sm:$0xff] %v652
        %725 = vst [vmem:[%s672 + $0xf1] sm:$0xff] %v653
        %726 = vst [vmem:[%s672 + $0xf9] sm:$0xff] %v654
        %727 = vst [vmem:[%s672 + $0x109] sm:$0xff] %v655
        %728 = vst [vmem:[%s672 + $0x111] sm:$0xff] %v656
        %729 = vst [vmem:[%s672 + $0x121] sm:$0xff] %v657
        %730 = vst [vmem:[%s672 + $0x129] sm:$0xff] %v658
        %731 = vst [vmem:[%s672 + $0x139] sm:$0xff] %v659
        %732 = vst [vmem:[%s672 + $0x141] sm:$0xff] %v660
        %733 = vst [vmem:[%s672 + $0x151] sm:$0xff] %v661
        %734 = vst [vmem:[%s672 + $0x159] sm:$0xff] %v662
        %735 = vst [vmem:[%s672 + $0x169] sm:$0xff] %v663
        %736 = vst [vmem:[%s672 + $0x171] sm:$0xff] %v664
        %v737 = vld [vmem:[#allocation2] sm:$0xff]
        %v738 = vld [vmem:[#allocation2 + $0x8] sm:$0xff]
        %v739 = vld [vmem:[#allocation2 + $0x18] sm:$0xff]
        %v740 = vld [vmem:[#allocation2 + $0x20] sm:$0xff]
        %v741 = vld [vmem:[#allocation2 + $0x30] sm:$0xff]
        %v742 = vld [vmem:[#allocation2 + $0x38] sm:$0xff]
        %v743 = vld [vmem:[#allocation2 + $0x48] sm:$0xff]
        %v744 = vld [vmem:[#allocation2 + $0x50] sm:$0xff]
        %v745 = vld [vmem:[#allocation2 + $0x60] sm:$0xff]
        %v746 = vld [vmem:[#allocation2 + $0x68] sm:$0xff]
        %v747 = vld [vmem:[#allocation2 + $0x78] sm:$0xff]
        %v748 = vld [vmem:[#allocation2 + $0x80] sm:$0xff]
        %v749 = vld [vmem:[#allocation2 + $0x90] sm:$0xff]
        %v750 = vld [vmem:[#allocation2 + $0x98] sm:$0xff]
        %v751 = vld [vmem:[#allocation2 + $0xa8] sm:$0xff]
        %v752 = vld [vmem:[#allocation2 + $0xb0] sm:$0xff]
        %v753 = vld [vmem:[#allocation2 + $0xc0] sm:$0xff]
        %v754 = vld [vmem:[#allocation2 + $0xc8] sm:$0xff]
        %v755 = vld [vmem:[#allocation2 + $0xd8] sm:$0xff]
        %v756 = vld [vmem:[#allocation2 + $0xe0] sm:$0xff]
        %v757 = vld [vmem:[#allocation2 + $0xf0] sm:$0xff]
        %v758 = vld [vmem:[#allocation2 + $0xf8] sm:$0xff]
        %v759 = vld [vmem:[#allocation2 + $0x108] sm:$0xff]
        %v760 = vld [vmem:[#allocation2 + $0x110] sm:$0xff]
        %v761 = vld [vmem:[#allocation2 + $0x120] sm:$0xff]
        %v762 = vld [vmem:[#allocation2 + $0x128] sm:$0xff]
        %v763 = vld [vmem:[#allocation2 + $0x138] sm:$0xff]
        %v764 = vld [vmem:[#allocation2 + $0x140] sm:$0xff]
        %v765 = vld [vmem:[#allocation2 + $0x150] sm:$0xff]
        %v766 = vld [vmem:[#allocation2 + $0x158] sm:$0xff]
        %v767 = vld [vmem:[#allocation2 + $0x168] sm:$0xff]
        %v768 = vld [vmem:[#allocation2 + $0x170] sm:$0xff]
        %v769 = vpack.c.bf16 %v738, %v737
        %v770 = vpack.c.bf16 %v740, %v739
        %v771 = vpack.c.bf16 %v742, %v741
        %v772 = vpack.c.bf16 %v744, %v743
        %v773 = vpack.c.bf16 %v746, %v745
        %v774 = vpack.c.bf16 %v748, %v747
        %v775 = vpack.c.bf16 %v750, %v749
        %v776 = vpack.c.bf16 %v752, %v751
        %v777 = vpack.c.bf16 %v754, %v753
        %v778 = vpack.c.bf16 %v756, %v755
        %v779 = vpack.c.bf16 %v758, %v757
        %v780 = vpack.c.bf16 %v760, %v759
        %v781 = vpack.c.bf16 %v762, %v761
        %v782 = vpack.c.bf16 %v764, %v763
        %v783 = vpack.c.bf16 %v766, %v765
        %v784 = vpack.c.bf16 %v768, %v767
        %v785 = vld [vmem:[#allocation9] sm:$0xf]
        %v786 = vld [vmem:[#allocation9 + $0x4] sm:$0xf]
        %v787 = vld [vmem:[#allocation9 + $0x8] sm:$0xf]
        %v788 = vld [vmem:[#allocation9 + $0xc] sm:$0xf]
        %v789 = vld [vmem:[#allocation9 + $0x10] sm:$0xf]
        %v790 = vld [vmem:[#allocation9 + $0x14] sm:$0xf]
        %v791 = vld [vmem:[#allocation9 + $0x18] sm:$0xf]
        %v792 = vld [vmem:[#allocation9 + $0x1c] sm:$0xf]
        %v793 = vld [vmem:[#allocation9 + $0x20] sm:$0xf]
        %v794 = vld [vmem:[#allocation9 + $0x24] sm:$0xf]
        %v795 = vld [vmem:[#allocation9 + $0x28] sm:$0xf]
        %v796 = vld [vmem:[#allocation9 + $0x2c] sm:$0xf]
        %v797 = vld [vmem:[#allocation9 + $0x30] sm:$0xf]
        %v798 = vld [vmem:[#allocation9 + $0x34] sm:$0xf]
        %v799 = vld [vmem:[#allocation9 + $0x38] sm:$0xf]
        %v800 = vld [vmem:[#allocation9 + $0x3c] sm:$0xf]
        %v817 = vunpack.c.l.b16 %v785
        %v818 = vunpack.c.l.b16 %v786
        %v819 = vunpack.c.l.b16 %v787
        %v820 = vunpack.c.l.b16 %v788
        %v821 = vunpack.c.l.b16 %v789
        %v822 = vunpack.c.l.b16 %v790
        %v823 = vunpack.c.l.b16 %v791
        %v824 = vunpack.c.l.b16 %v792
        %v825 = vunpack.c.l.b16 %v793
        %v826 = vunpack.c.l.b16 %v794
        %v827 = vunpack.c.l.b16 %v795
        %v828 = vunpack.c.l.b16 %v796
        %v829 = vunpack.c.l.b16 %v797
        %v830 = vunpack.c.l.b16 %v798
        %v831 = vunpack.c.l.b16 %v799
        %v832 = vunpack.c.l.b16 %v800
        %v833 = vpack.c.b16 %v818, %v817
        %v834 = vpack.c.b16 %v820, %v819
        %v835 = vpack.c.b16 %v822, %v821
        %v836 = vpack.c.b16 %v824, %v823
        %v837 = vpack.c.b16 %v826, %v825
        %v838 = vpack.c.b16 %v828, %v827
        %v839 = vpack.c.b16 %v830, %v829
        %v840 = vpack.c.b16 %v832, %v831
        %849 = vmatprep.subr.bf16.mxu0 0
        %850 = vmatpush1.bf16.msra.mxu0 %v833
        %851 = vmatprep.subr.bf16.mxu0 0
        %852 = vmatpush1.bf16.msra.mxu0 %v834
        %853 = vmatprep.subr.bf16.mxu0 0
        %854 = vmatpush1.bf16.msra.mxu0 %v835
        %855 = vmatprep.subr.bf16.mxu0 0
        %856 = vmatpush1.bf16.msra.mxu0 %v836
        %857 = vmatprep.subr.bf16.mxu0 0
        %858 = vmatpush1.bf16.msra.mxu0 %v837
        %859 = vmatprep.subr.bf16.mxu0 0
        %860 = vmatpush1.bf16.msra.mxu0 %v838
        %861 = vmatprep.subr.bf16.mxu0 0
        %862 = vmatpush1.bf16.msra.mxu0 %v839
        %863 = vmatprep.subr.bf16.mxu0 0
        %864 = vmatpush1.bf16.msra.mxu0 %v840
        %865 = vmatprep.subr.bf16.mxu0 0
        %866 = vmatpush1.bf16.msra.mxu0 0
        %867 = vmatprep.subr.bf16.mxu0 0
        %868 = vmatpush1.bf16.msra.mxu0 0
        %869 = vmatprep.subr.bf16.mxu0 0
        %870 = vmatpush1.bf16.msra.mxu0 0
        %871 = vmatprep.subr.bf16.mxu0 0
        %872 = vmatpush1.bf16.msra.mxu0 0
        %873 = vmatprep.subr.bf16.mxu0 0
        %874 = vmatpush1.bf16.msra.mxu0 0
        %875 = vmatprep.subr.bf16.mxu0 0
        %876 = vmatpush1.bf16.msra.mxu0 0
        %877 = vmatprep.subr.bf16.mxu0 0
        %878 = vmatpush1.bf16.msra.mxu0 0
        %879 = vmatprep.subr.bf16.mxu0 0
        %880 = vmatpush1.bf16.msra.mxu0 0
        %881 = vmatprep.mubr.bf16.mxu0 0
        %882 = vmatmul.mubr.bf16.gmra.mrb[0].mxu0 %v769
        %v883 = vpop.f32.mrb[0].mxu0
        %v884 = vadd.f32 0.0, %v883
        %v885 = vpop.f32.mrb[0].mxu0
        %v886 = vpop.f32.mrb[0].mxu0
        %v887 = vadd.f32 0.0, %v886
        %v888 = vpop.f32.mrb[0].mxu0
        %889 = vmatprep.mubr.bf16.mxu0 0
        %890 = vmatmul.mubr.bf16.gmra.mrb[0].mxu0 %v770
        %v891 = vpop.f32.mrb[0].mxu0
        %v892 = vadd.f32 0.0, %v891
        %v893 = vpop.f32.mrb[0].mxu0
        %v894 = vpop.f32.mrb[0].mxu0
        %v895 = vadd.f32 0.0, %v894
        %v896 = vpop.f32.mrb[0].mxu0
        %897 = vmatprep.mubr.bf16.mxu0 0
        %898 = vmatmul.mubr.bf16.gmra.mrb[0].mxu0 %v771
        %v899 = vpop.f32.mrb[0].mxu0
        %v900 = vadd.f32 0.0, %v899
        %v901 = vpop.f32.mrb[0].mxu0
        %v902 = vpop.f32.mrb[0].mxu0
        %v903 = vadd.f32 0.0, %v902
        %v904 = vpop.f32.mrb[0].mxu0
        %905 = vmatprep.mubr.bf16.mxu0 0
        %906 = vmatmul.mubr.bf16.gmra.mrb[0].mxu0 %v772
        %v907 = vpop.f32.mrb[0].mxu0
        %v908 = vadd.f32 0.0, %v907
        %v909 = vpop.f32.mrb[0].mxu0
        %v910 = vpop.f32.mrb[0].mxu0
        %v911 = vadd.f32 0.0, %v910
        %v912 = vpop.f32.mrb[0].mxu0
        %913 = vmatprep.mubr.bf16.mxu0 0
        %914 = vmatmul.mubr.bf16.gmra.mrb[0].mxu0 %v773
        %v915 = vpop.f32.mrb[0].mxu0
        %v916 = vadd.f32 0.0, %v915
        %v917 = vpop.f32.mrb[0].mxu0
        %v918 = vpop.f32.mrb[0].mxu0
        %v919 = vadd.f32 0.0, %v918
        %v920 = vpop.f32.mrb[0].mxu0
        %921 = vmatprep.mubr.bf16.mxu0 0
        %922 = vmatmul.mubr.bf16.gmra.mrb[0].mxu0 %v774
        %v923 = vpop.f32.mrb[0].mxu0
        %v924 = vadd.f32 0.0, %v923
        %v925 = vpop.f32.mrb[0].mxu0
        %v926 = vpop.f32.mrb[0].mxu0
        %v927 = vadd.f32 0.0, %v926
        %v928 = vpop.f32.mrb[0].mxu0
        %929 = vmatprep.mubr.bf16.mxu0 0
        %930 = vmatmul.mubr.bf16.gmra.mrb[0].mxu0 %v775
        %v931 = vpop.f32.mrb[0].mxu0
        %v932 = vadd.f32 0.0, %v931
        %v933 = vpop.f32.mrb[0].mxu0
        %v934 = vpop.f32.mrb[0].mxu0
        %v935 = vadd.f32 0.0, %v934
        %v936 = vpop.f32.mrb[0].mxu0
        %937 = vmatprep.mubr.bf16.mxu0 0
        %938 = vmatmul.mubr.bf16.gmra.mrb[0].mxu0 %v776
        %v939 = vpop.f32.mrb[0].mxu0
        %v940 = vadd.f32 0.0, %v939
        %v941 = vpop.f32.mrb[0].mxu0
        %v942 = vpop.f32.mrb[0].mxu0
        %v943 = vadd.f32 0.0, %v942
        %v944 = vpop.f32.mrb[0].mxu0
        %945 = vmatprep.mubr.bf16.mxu0 0
        %946 = vmatmul.mubr.bf16.gmra.mrb[0].mxu0 %v777
        %v947 = vpop.f32.mrb[0].mxu0
        %v948 = vadd.f32 0.0, %v947
        %v949 = vpop.f32.mrb[0].mxu0
        %v950 = vpop.f32.mrb[0].mxu0
        %v951 = vadd.f32 0.0, %v950
        %v952 = vpop.f32.mrb[0].mxu0
        %953 = vmatprep.mubr.bf16.mxu0 0
        %954 = vmatmul.mubr.bf16.gmra.mrb[0].mxu0 %v778
        %v955 = vpop.f32.mrb[0].mxu0
        %v956 = vadd.f32 0.0, %v955
        %v957 = vpop.f32.mrb[0].mxu0
        %v958 = vpop.f32.mrb[0].mxu0
        %v959 = vadd.f32 0.0, %v958
        %v960 = vpop.f32.mrb[0].mxu0
        %961 = vmatprep.mubr.bf16.mxu0 0
        %962 = vmatmul.mubr.bf16.gmra.mrb[0].mxu0 %v779
        %v963 = vpop.f32.mrb[0].mxu0
        %v964 = vadd.f32 0.0, %v963
        %v965 = vpop.f32.mrb[0].mxu0
        %v966 = vpop.f32.mrb[0].mxu0
        %v967 = vadd.f32 0.0, %v966
        %v968 = vpop.f32.mrb[0].mxu0
        %969 = vmatprep.mubr.bf16.mxu0 0
        %970 = vmatmul.mubr.bf16.gmra.mrb[0].mxu0 %v780
        %v971 = vpop.f32.mrb[0].mxu0
        %v972 = vadd.f32 0.0, %v971
        %v973 = vpop.f32.mrb[0].mxu0
        %v974 = vpop.f32.mrb[0].mxu0
        %v975 = vadd.f32 0.0, %v974
        %v976 = vpop.f32.mrb[0].mxu0
        %977 = vmatprep.mubr.bf16.mxu0 0
        %978 = vmatmul.mubr.bf16.gmra.mrb[0].mxu0 %v781
        %v979 = vpop.f32.mrb[0].mxu0
        %v980 = vadd.f32 0.0, %v979
        %v981 = vpop.f32.mrb[0].mxu0
        %v982 = vpop.f32.mrb[0].mxu0
        %v983 = vadd.f32 0.0, %v982
        %v984 = vpop.f32.mrb[0].mxu0
        %985 = vmatprep.mubr.bf16.mxu0 0
        %986 = vmatmul.mubr.bf16.gmra.mrb[0].mxu0 %v782
        %v987 = vpop.f32.mrb[0].mxu0
        %v988 = vadd.f32 0.0, %v987
        %v989 = vpop.f32.mrb[0].mxu0
        %v990 = vpop.f32.mrb[0].mxu0
        %v991 = vadd.f32 0.0, %v990
        %v992 = vpop.f32.mrb[0].mxu0
        %993 = vmatprep.mubr.bf16.mxu0 0
        %994 = vmatmul.mubr.bf16.gmra.mrb[0].mxu0 %v783
        %v995 = vpop.f32.mrb[0].mxu0
        %v996 = vadd.f32 0.0, %v995
        %v997 = vpop.f32.mrb[0].mxu0
        %v998 = vpop.f32.mrb[0].mxu0
        %v999 = vadd.f32 0.0, %v998
        %v1000 = vpop.f32.mrb[0].mxu0
        %1001 = vmatprep.mubr.bf16.mxu0 0
        %1002 = vmatmul.mubr.bf16.gmra.mrb[0].mxu0 %v784
        %v1003 = vpop.f32.mrb[0].mxu0
        %v1004 = vadd.f32 0.0, %v1003
        %v1005 = vpop.f32.mrb[0].mxu0
        %v1006 = vpop.f32.mrb[0].mxu0
        %v1007 = vadd.f32 0.0, %v1006
        %v1008 = vpop.f32.mrb[0].mxu0
        %1009 = vdwg.mxu0
        %1010 = vst [vmem:[#allocation3] sm:$0xff] %v884
        %1011 = vst [vmem:[#allocation3 + $0x8] sm:$0xff] %v887
        %1012 = vst [vmem:[#allocation3 + $0x10] sm:$0xff] %v892
        %1013 = vst [vmem:[#allocation3 + $0x18] sm:$0xff] %v895
        %1014 = vst [vmem:[#allocation3 + $0x20] sm:$0xff] %v900
        %1015 = vst [vmem:[#allocation3 + $0x28] sm:$0xff] %v903
        %1016 = vst [vmem:[#allocation3 + $0x30] sm:$0xff] %v908
        %1017 = vst [vmem:[#allocation3 + $0x38] sm:$0xff] %v911
        %1018 = vst [vmem:[#allocation3 + $0x40] sm:$0xff] %v916
        %1019 = vst [vmem:[#allocation3 + $0x48] sm:$0xff] %v919
        %1020 = vst [vmem:[#allocation3 + $0x50] sm:$0xff] %v924
        %1021 = vst [vmem:[#allocation3 + $0x58] sm:$0xff] %v927
        %1022 = vst [vmem:[#allocation3 + $0x60] sm:$0xff] %v932
        %1023 = vst [vmem:[#allocation3 + $0x68] sm:$0xff] %v935
        %1024 = vst [vmem:[#allocation3 + $0x70] sm:$0xff] %v940
        %1025 = vst [vmem:[#allocation3 + $0x78] sm:$0xff] %v943
        %1026 = vst [vmem:[#allocation3 + $0x80] sm:$0xff] %v948
        %1027 = vst [vmem:[#allocation3 + $0x88] sm:$0xff] %v951
        %1028 = vst [vmem:[#allocation3 + $0x90] sm:$0xff] %v956
        %1029 = vst [vmem:[#allocation3 + $0x98] sm:$0xff] %v959
        %1030 = vst [vmem:[#allocation3 + $0xa0] sm:$0xff] %v964
        %1031 = vst [vmem:[#allocation3 + $0xa8] sm:$0xff] %v967
        %1032 = vst [vmem:[#allocation3 + $0xb0] sm:$0xff] %v972
        %1033 = vst [vmem:[#allocation3 + $0xb8] sm:$0xff] %v975
        %1034 = vst [vmem:[#allocation3 + $0xc0] sm:$0xff] %v980
        %1035 = vst [vmem:[#allocation3 + $0xc8] sm:$0xff] %v983
        %1036 = vst [vmem:[#allocation3 + $0xd0] sm:$0xff] %v988
        %1037 = vst [vmem:[#allocation3 + $0xd8] sm:$0xff] %v991
        %1038 = vst [vmem:[#allocation3 + $0xe0] sm:$0xff] %v996
        %1039 = vst [vmem:[#allocation3 + $0xe8] sm:$0xff] %v999
        %1040 = vst [vmem:[#allocation3 + $0xf0] sm:$0xff] %v1004
        %1041 = vst [vmem:[#allocation3 + $0xf8] sm:$0xff] %v1007
        %v1042 = vld [vmem:[#allocation2 + $0x1] sm:$0xff]
        %v1043 = vld [vmem:[#allocation2 + $0x9] sm:$0xff]
        %v1044 = vld [vmem:[#allocation2 + $0x19] sm:$0xff]
        %v1045 = vld [vmem:[#allocation2 + $0x21] sm:$0xff]
        %v1046 = vld [vmem:[#allocation2 + $0x31] sm:$0xff]
        %v1047 = vld [vmem:[#allocation2 + $0x39] sm:$0xff]
        %v1048 = vld [vmem:[#allocation2 + $0x49] sm:$0xff]
        %v1049 = vld [vmem:[#allocation2 + $0x51] sm:$0xff]
        %v1050 = vld [vmem:[#allocation2 + $0x61] sm:$0xff]
        %v1051 = vld [vmem:[#allocation2 + $0x69] sm:$0xff]
        %v1052 = vld [vmem:[#allocation2 + $0x79] sm:$0xff]
        %v1053 = vld [vmem:[#allocation2 + $0x81] sm:$0xff]
        %v1054 = vld [vmem:[#allocation2 + $0x91] sm:$0xff]
        %v1055 = vld [vmem:[#allocation2 + $0x99] sm:$0xff]
        %v1056 = vld [vmem:[#allocation2 + $0xa9] sm:$0xff]
        %v1057 = vld [vmem:[#allocation2 + $0xb1] sm:$0xff]
        %v1058 = vld [vmem:[#allocation2 + $0xc1] sm:$0xff]
        %v1059 = vld [vmem:[#allocation2 + $0xc9] sm:$0xff]
        %v1060 = vld [vmem:[#allocation2 + $0xd9] sm:$0xff]
        %v1061 = vld [vmem:[#allocation2 + $0xe1] sm:$0xff]
        %v1062 = vld [vmem:[#allocation2 + $0xf1] sm:$0xff]
        %v1063 = vld [vmem:[#allocation2 + $0xf9] sm:$0xff]
        %v1064 = vld [vmem:[#allocation2 + $0x109] sm:$0xff]
        %v1065 = vld [vmem:[#allocation2 + $0x111] sm:$0xff]
        %v1066 = vld [vmem:[#allocation2 + $0x121] sm:$0xff]
        %v1067 = vld [vmem:[#allocation2 + $0x129] sm:$0xff]
        %v1068 = vld [vmem:[#allocation2 + $0x139] sm:$0xff]
        %v1069 = vld [vmem:[#allocation2 + $0x141] sm:$0xff]
        %v1070 = vld [vmem:[#allocation2 + $0x151] sm:$0xff]
        %v1071 = vld [vmem:[#allocation2 + $0x159] sm:$0xff]
        %v1072 = vld [vmem:[#allocation2 + $0x169] sm:$0xff]
        %v1073 = vld [vmem:[#allocation2 + $0x171] sm:$0xff]
        %v1074 = vpack.c.bf16 %v1043, %v1042
        %v1075 = vpack.c.bf16 %v1045, %v1044
        %v1076 = vpack.c.bf16 %v1047, %v1046
        %v1077 = vpack.c.bf16 %v1049, %v1048
        %v1078 = vpack.c.bf16 %v1051, %v1050
        %v1079 = vpack.c.bf16 %v1053, %v1052
        %v1080 = vpack.c.bf16 %v1055, %v1054
        %v1081 = vpack.c.bf16 %v1057, %v1056
        %v1082 = vpack.c.bf16 %v1059, %v1058
        %v1083 = vpack.c.bf16 %v1061, %v1060
        %v1084 = vpack.c.bf16 %v1063, %v1062
        %v1085 = vpack.c.bf16 %v1065, %v1064
        %v1086 = vpack.c.bf16 %v1067, %v1066
        %v1087 = vpack.c.bf16 %v1069, %v1068
        %v1088 = vpack.c.bf16 %v1071, %v1070
        %v1089 = vpack.c.bf16 %v1073, %v1072
        %s1090 = scalar_lea.vmem [#allocation9], 64
        %v1091 = vld [vmem:[%s1090] sm:$0xf]
        %v1092 = vld [vmem:[%s1090 + $0x4] sm:$0xf]
        %v1093 = vld [vmem:[%s1090 + $0x8] sm:$0xf]
        %v1094 = vld [vmem:[%s1090 + $0xc] sm:$0xf]
        %v1095 = vld [vmem:[%s1090 + $0x10] sm:$0xf]
        %v1096 = vld [vmem:[%s1090 + $0x14] sm:$0xf]
        %v1097 = vld [vmem:[%s1090 + $0x18] sm:$0xf]
        %v1098 = vld [vmem:[%s1090 + $0x1c] sm:$0xf]
        %v1099 = vld [vmem:[%s1090 + $0x20] sm:$0xf]
        %v1100 = vld [vmem:[%s1090 + $0x24] sm:$0xf]
        %v1101 = vld [vmem:[%s1090 + $0x28] sm:$0xf]
        %v1102 = vld [vmem:[%s1090 + $0x2c] sm:$0xf]
        %v1103 = vld [vmem:[%s1090 + $0x30] sm:$0xf]
        %v1104 = vld [vmem:[%s1090 + $0x34] sm:$0xf]
        %v1105 = vld [vmem:[%s1090 + $0x38] sm:$0xf]
        %v1106 = vld [vmem:[%s1090 + $0x3c] sm:$0xf]
        %v1123 = vunpack.c.l.b16 %v1091
        %v1124 = vunpack.c.l.b16 %v1092
        %v1125 = vunpack.c.l.b16 %v1093
        %v1126 = vunpack.c.l.b16 %v1094
        %v1127 = vunpack.c.l.b16 %v1095
        %v1128 = vunpack.c.l.b16 %v1096
        %v1129 = vunpack.c.l.b16 %v1097
        %v1130 = vunpack.c.l.b16 %v1098
        %v1131 = vunpack.c.l.b16 %v1099
        %v1132 = vunpack.c.l.b16 %v1100
        %v1133 = vunpack.c.l.b16 %v1101
        %v1134 = vunpack.c.l.b16 %v1102
        %v1135 = vunpack.c.l.b16 %v1103
        %v1136 = vunpack.c.l.b16 %v1104
        %v1137 = vunpack.c.l.b16 %v1105
        %v1138 = vunpack.c.l.b16 %v1106
        %v1139 = vpack.c.b16 %v1124, %v1123
        %v1140 = vpack.c.b16 %v1126, %v1125
        %v1141 = vpack.c.b16 %v1128, %v1127
        %v1142 = vpack.c.b16 %v1130, %v1129
        %v1143 = vpack.c.b16 %v1132, %v1131
        %v1144 = vpack.c.b16 %v1134, %v1133
        %v1145 = vpack.c.b16 %v1136, %v1135
        %v1146 = vpack.c.b16 %v1138, %v1137
        %1155 = vmatprep.subr.bf16.mxu0 0
        %1156 = vmatpush1.bf16.msra.mxu0 %v1139
        %1157 = vmatprep.subr.bf16.mxu0 0
        %1158 = vmatpush1.bf16.msra.mxu0 %v1140
        %1159 = vmatprep.subr.bf16.mxu0 0
        %1160 = vmatpush1.bf16.msra.mxu0 %v1141
        %1161 = vmatprep.subr.bf16.mxu0 0
        %1162 = vmatpush1.bf16.msra.mxu0 %v1142
        %1163 = vmatprep.subr.bf16.mxu0 0
        %1164 = vmatpush1.bf16.msra.mxu0 %v1143
        %1165 = vmatprep.subr.bf16.mxu0 0
        %1166 = vmatpush1.bf16.msra.mxu0 %v1144
        %1167 = vmatprep.subr.bf16.mxu0 0
        %1168 = vmatpush1.bf16.msra.mxu0 %v1145
        %1169 = vmatprep.subr.bf16.mxu0 0
        %1170 = vmatpush1.bf16.msra.mxu0 %v1146
        %1171 = vmatprep.subr.bf16.mxu0 0
        %1172 = vmatpush1.bf16.msra.mxu0 0
        %1173 = vmatprep.subr.bf16.mxu0 0
        %1174 = vmatpush1.bf16.msra.mxu0 0
        %1175 = vmatprep.subr.bf16.mxu0 0
        %1176 = vmatpush1.bf16.msra.mxu0 0
        %1177 = vmatprep.subr.bf16.mxu0 0
        %1178 = vmatpush1.bf16.msra.mxu0 0
        %1179 = vmatprep.subr.bf16.mxu0 0
        %1180 = vmatpush1.bf16.msra.mxu0 0
        %1181 = vmatprep.subr.bf16.mxu0 0
        %1182 = vmatpush1.bf16.msra.mxu0 0
        %1183 = vmatprep.subr.bf16.mxu0 0
        %1184 = vmatpush1.bf16.msra.mxu0 0
        %1185 = vmatprep.subr.bf16.mxu0 0
        %1186 = vmatpush1.bf16.msra.mxu0 0
        %1187 = vmatprep.mubr.bf16.mxu0 0
        %1188 = vmatmul.mubr.bf16.gmra.mrb[0].mxu0 %v1074
        %v1189 = vpop.f32.mrb[0].mxu0
        %v1190 = vadd.f32 0.0, %v1189
        %v1191 = vpop.f32.mrb[0].mxu0
        %v1192 = vpop.f32.mrb[0].mxu0
        %v1193 = vadd.f32 0.0, %v1192
        %v1194 = vpop.f32.mrb[0].mxu0
        %1195 = vmatprep.mubr.bf16.mxu0 0
        %1196 = vmatmul.mubr.bf16.gmra.mrb[0].mxu0 %v1075
        %v1197 = vpop.f32.mrb[0].mxu0
        %v1198 = vadd.f32 0.0, %v1197
        %v1199 = vpop.f32.mrb[0].mxu0
        %v1200 = vpop.f32.mrb[0].mxu0
        %v1201 = vadd.f32 0.0, %v1200
        %v1202 = vpop.f32.mrb[0].mxu0
        %1203 = vmatprep.mubr.bf16.mxu0 0
        %1204 = vmatmul.mubr.bf16.gmra.mrb[0].mxu0 %v1076
        %v1205 = vpop.f32.mrb[0].mxu0
        %v1206 = vadd.f32 0.0, %v1205
        %v1207 = vpop.f32.mrb[0].mxu0
        %v1208 = vpop.f32.mrb[0].mxu0
        %v1209 = vadd.f32 0.0, %v1208
        %v1210 = vpop.f32.mrb[0].mxu0
        %1211 = vmatprep.mubr.bf16.mxu0 0
        %1212 = vmatmul.mubr.bf16.gmra.mrb[0].mxu0 %v1077
        %v1213 = vpop.f32.mrb[0].mxu0
        %v1214 = vadd.f32 0.0, %v1213
        %v1215 = vpop.f32.mrb[0].mxu0
        %v1216 = vpop.f32.mrb[0].mxu0
        %v1217 = vadd.f32 0.0, %v1216
        %v1218 = vpop.f32.mrb[0].mxu0
        %1219 = vmatprep.mubr.bf16.mxu0 0
        %1220 = vmatmul.mubr.bf16.gmra.mrb[0].mxu0 %v1078
        %v1221 = vpop.f32.mrb[0].mxu0
        %v1222 = vadd.f32 0.0, %v1221
        %v1223 = vpop.f32.mrb[0].mxu0
        %v1224 = vpop.f32.mrb[0].mxu0
        %v1225 = vadd.f32 0.0, %v1224
        %v1226 = vpop.f32.mrb[0].mxu0
        %1227 = vmatprep.mubr.bf16.mxu0 0
        %1228 = vmatmul.mubr.bf16.gmra.mrb[0].mxu0 %v1079
        %v1229 = vpop.f32.mrb[0].mxu0
        %v1230 = vadd.f32 0.0, %v1229
        %v1231 = vpop.f32.mrb[0].mxu0
        %v1232 = vpop.f32.mrb[0].mxu0
        %v1233 = vadd.f32 0.0, %v1232
        %v1234 = vpop.f32.mrb[0].mxu0
        %1235 = vmatprep.mubr.bf16.mxu0 0
        %1236 = vmatmul.mubr.bf16.gmra.mrb[0].mxu0 %v1080
        %v1237 = vpop.f32.mrb[0].mxu0
        %v1238 = vadd.f32 0.0, %v1237
        %v1239 = vpop.f32.mrb[0].mxu0
        %v1240 = vpop.f32.mrb[0].mxu0
        %v1241 = vadd.f32 0.0, %v1240
        %v1242 = vpop.f32.mrb[0].mxu0
        %1243 = vmatprep.mubr.bf16.mxu0 0
        %1244 = vmatmul.mubr.bf16.gmra.mrb[0].mxu0 %v1081
        %v1245 = vpop.f32.mrb[0].mxu0
        %v1246 = vadd.f32 0.0, %v1245
        %v1247 = vpop.f32.mrb[0].mxu0
        %v1248 = vpop.f32.mrb[0].mxu0
        %v1249 = vadd.f32 0.0, %v1248
        %v1250 = vpop.f32.mrb[0].mxu0
        %1251 = vmatprep.mubr.bf16.mxu0 0
        %1252 = vmatmul.mubr.bf16.gmra.mrb[0].mxu0 %v1082
        %v1253 = vpop.f32.mrb[0].mxu0
        %v1254 = vadd.f32 0.0, %v1253
        %v1255 = vpop.f32.mrb[0].mxu0
        %v1256 = vpop.f32.mrb[0].mxu0
        %v1257 = vadd.f32 0.0, %v1256
        %v1258 = vpop.f32.mrb[0].mxu0
        %1259 = vmatprep.mubr.bf16.mxu0 0
        %1260 = vmatmul.mubr.bf16.gmra.mrb[0].mxu0 %v1083
        %v1261 = vpop.f32.mrb[0].mxu0
        %v1262 = vadd.f32 0.0, %v1261
        %v1263 = vpop.f32.mrb[0].mxu0
        %v1264 = vpop.f32.mrb[0].mxu0
        %v1265 = vadd.f32 0.0, %v1264
        %v1266 = vpop.f32.mrb[0].mxu0
        %1267 = vmatprep.mubr.bf16.mxu0 0
        %1268 = vmatmul.mubr.bf16.gmra.mrb[0].mxu0 %v1084
        %v1269 = vpop.f32.mrb[0].mxu0
        %v1270 = vadd.f32 0.0, %v1269
        %v1271 = vpop.f32.mrb[0].mxu0
        %v1272 = vpop.f32.mrb[0].mxu0
        %v1273 = vadd.f32 0.0, %v1272
        %v1274 = vpop.f32.mrb[0].mxu0
        %1275 = vmatprep.mubr.bf16.mxu0 0
        %1276 = vmatmul.mubr.bf16.gmra.mrb[0].mxu0 %v1085
        %v1277 = vpop.f32.mrb[0].mxu0
        %v1278 = vadd.f32 0.0, %v1277
        %v1279 = vpop.f32.mrb[0].mxu0
        %v1280 = vpop.f32.mrb[0].mxu0
        %v1281 = vadd.f32 0.0, %v1280
        %v1282 = vpop.f32.mrb[0].mxu0
        %1283 = vmatprep.mubr.bf16.mxu0 0
        %1284 = vmatmul.mubr.bf16.gmra.mrb[0].mxu0 %v1086
        %v1285 = vpop.f32.mrb[0].mxu0
        %v1286 = vadd.f32 0.0, %v1285
        %v1287 = vpop.f32.mrb[0].mxu0
        %v1288 = vpop.f32.mrb[0].mxu0
        %v1289 = vadd.f32 0.0, %v1288
        %v1290 = vpop.f32.mrb[0].mxu0
        %1291 = vmatprep.mubr.bf16.mxu0 0
        %1292 = vmatmul.mubr.bf16.gmra.mrb[0].mxu0 %v1087
        %v1293 = vpop.f32.mrb[0].mxu0
        %v1294 = vadd.f32 0.0, %v1293
        %v1295 = vpop.f32.mrb[0].mxu0
        %v1296 = vpop.f32.mrb[0].mxu0
        %v1297 = vadd.f32 0.0, %v1296
        %v1298 = vpop.f32.mrb[0].mxu0
        %1299 = vmatprep.mubr.bf16.mxu0 0
        %1300 = vmatmul.mubr.bf16.gmra.mrb[0].mxu0 %v1088
        %v1301 = vpop.f32.mrb[0].mxu0
        %v1302 = vadd.f32 0.0, %v1301
        %v1303 = vpop.f32.mrb[0].mxu0
        %v1304 = vpop.f32.mrb[0].mxu0
        %v1305 = vadd.f32 0.0, %v1304
        %v1306 = vpop.f32.mrb[0].mxu0
        %1307 = vmatprep.mubr.bf16.mxu0 0
        %1308 = vmatmul.mubr.bf16.gmra.mrb[0].mxu0 %v1089
        %v1309 = vpop.f32.mrb[0].mxu0
        %v1310 = vadd.f32 0.0, %v1309
        %v1311 = vpop.f32.mrb[0].mxu0
        %v1312 = vpop.f32.mrb[0].mxu0
        %v1313 = vadd.f32 0.0, %v1312
        %v1314 = vpop.f32.mrb[0].mxu0
        %1315 = vdwg.mxu0
        %v1316 = vld [vmem:[#allocation3] sm:$0xff]
        %v1317 = vld [vmem:[#allocation3 + $0x8] sm:$0xff]
        %v1318 = vld [vmem:[#allocation3 + $0x10] sm:$0xff]
        %v1319 = vld [vmem:[#allocation3 + $0x18] sm:$0xff]
        %v1320 = vld [vmem:[#allocation3 + $0x20] sm:$0xff]
        %v1321 = vld [vmem:[#allocation3 + $0x28] sm:$0xff]
        %v1322 = vld [vmem:[#allocation3 + $0x30] sm:$0xff]
        %v1323 = vld [vmem:[#allocation3 + $0x38] sm:$0xff]
        %v1324 = vld [vmem:[#allocation3 + $0x40] sm:$0xff]
        %v1325 = vld [vmem:[#allocation3 + $0x48] sm:$0xff]
        %v1326 = vld [vmem:[#allocation3 + $0x50] sm:$0xff]
        %v1327 = vld [vmem:[#allocation3 + $0x58] sm:$0xff]
        %v1328 = vld [vmem:[#allocation3 + $0x60] sm:$0xff]
        %v1329 = vld [vmem:[#allocation3 + $0x68] sm:$0xff]
        %v1330 = vld [vmem:[#allocation3 + $0x70] sm:$0xff]
        %v1331 = vld [vmem:[#allocation3 + $0x78] sm:$0xff]
        %v1332 = vld [vmem:[#allocation3 + $0x80] sm:$0xff]
        %v1333 = vld [vmem:[#allocation3 + $0x88] sm:$0xff]
        %v1334 = vld [vmem:[#allocation3 + $0x90] sm:$0xff]
        %v1335 = vld [vmem:[#allocation3 + $0x98] sm:$0xff]
        %v1336 = vld [vmem:[#allocation3 + $0xa0] sm:$0xff]
        %v1337 = vld [vmem:[#allocation3 + $0xa8] sm:$0xff]
        %v1338 = vld [vmem:[#allocation3 + $0xb0] sm:$0xff]
        %v1339 = vld [vmem:[#allocation3 + $0xb8] sm:$0xff]
        %v1340 = vld [vmem:[#allocation3 + $0xc0] sm:$0xff]
        %v1341 = vld [vmem:[#allocation3 + $0xc8] sm:$0xff]
        %v1342 = vld [vmem:[#allocation3 + $0xd0] sm:$0xff]
        %v1343 = vld [vmem:[#allocation3 + $0xd8] sm:$0xff]
        %v1344 = vld [vmem:[#allocation3 + $0xe0] sm:$0xff]
        %v1345 = vld [vmem:[#allocation3 + $0xe8] sm:$0xff]
        %v1346 = vld [vmem:[#allocation3 + $0xf0] sm:$0xff]
        %v1347 = vld [vmem:[#allocation3 + $0xf8] sm:$0xff]
        %v1348 = vadd.f32 %v1316, %v1190
        %v1349 = vadd.f32 %v1317, %v1193
        %v1350 = vadd.f32 %v1318, %v1198
        %v1351 = vadd.f32 %v1319, %v1201
        %v1352 = vadd.f32 %v1320, %v1206
        %v1353 = vadd.f32 %v1321, %v1209
        %v1354 = vadd.f32 %v1322, %v1214
        %v1355 = vadd.f32 %v1323, %v1217
        %v1356 = vadd.f32 %v1324, %v1222
        %v1357 = vadd.f32 %v1325, %v1225
        %v1358 = vadd.f32 %v1326, %v1230
        %v1359 = vadd.f32 %v1327, %v1233
        %v1360 = vadd.f32 %v1328, %v1238
        %v1361 = vadd.f32 %v1329, %v1241
        %v1362 = vadd.f32 %v1330, %v1246
        %v1363 = vadd.f32 %v1331, %v1249
        %v1364 = vadd.f32 %v1332, %v1254
        %v1365 = vadd.f32 %v1333, %v1257
        %v1366 = vadd.f32 %v1334, %v1262
        %v1367 = vadd.f32 %v1335, %v1265
        %v1368 = vadd.f32 %v1336, %v1270
        %v1369 = vadd.f32 %v1337, %v1273
        %v1370 = vadd.f32 %v1338, %v1278
        %v1371 = vadd.f32 %v1339, %v1281
        %v1372 = vadd.f32 %v1340, %v1286
        %v1373 = vadd.f32 %v1341, %v1289
        %v1374 = vadd.f32 %v1342, %v1294
        %v1375 = vadd.f32 %v1343, %v1297
        %v1376 = vadd.f32 %v1344, %v1302
        %v1377 = vadd.f32 %v1345, %v1305
        %v1378 = vadd.f32 %v1346, %v1310
        %v1379 = vadd.f32 %v1347, %v1313
        %1380 = vst [vmem:[#allocation3] sm:$0xff] %v1348
        %1381 = vst [vmem:[#allocation3 + $0x8] sm:$0xff] %v1349
        %1382 = vst [vmem:[#allocation3 + $0x10] sm:$0xff] %v1350
        %1383 = vst [vmem:[#allocation3 + $0x18] sm:$0xff] %v1351
        %1384 = vst [vmem:[#allocation3 + $0x20] sm:$0xff] %v1352
        %1385 = vst [vmem:[#allocation3 + $0x28] sm:$0xff] %v1353
        %1386 = vst [vmem:[#allocation3 + $0x30] sm:$0xff] %v1354
        %1387 = vst [vmem:[#allocation3 + $0x38] sm:$0xff] %v1355
        %1388 = vst [vmem:[#allocation3 + $0x40] sm:$0xff] %v1356
        %1389 = vst [vmem:[#allocation3 + $0x48] sm:$0xff] %v1357
        %1390 = vst [vmem:[#allocation3 + $0x50] sm:$0xff] %v1358
        %1391 = vst [vmem:[#allocation3 + $0x58] sm:$0xff] %v1359
        %1392 = vst [vmem:[#allocation3 + $0x60] sm:$0xff] %v1360
        %1393 = vst [vmem:[#allocation3 + $0x68] sm:$0xff] %v1361
        %1394 = vst [vmem:[#allocation3 + $0x70] sm:$0xff] %v1362
        %1395 = vst [vmem:[#allocation3 + $0x78] sm:$0xff] %v1363
        %1396 = vst [vmem:[#allocation3 + $0x80] sm:$0xff] %v1364
        %1397 = vst [vmem:[#allocation3 + $0x88] sm:$0xff] %v1365
        %1398 = vst [vmem:[#allocation3 + $0x90] sm:$0xff] %v1366
        %1399 = vst [vmem:[#allocation3 + $0x98] sm:$0xff] %v1367
        %1400 = vst [vmem:[#allocation3 + $0xa0] sm:$0xff] %v1368
        %1401 = vst [vmem:[#allocation3 + $0xa8] sm:$0xff] %v1369
        %1402 = vst [vmem:[#allocation3 + $0xb0] sm:$0xff] %v1370
        %1403 = vst [vmem:[#allocation3 + $0xb8] sm:$0xff] %v1371
        %1404 = vst [vmem:[#allocation3 + $0xc0] sm:$0xff] %v1372
        %1405 = vst [vmem:[#allocation3 + $0xc8] sm:$0xff] %v1373
        %1406 = vst [vmem:[#allocation3 + $0xd0] sm:$0xff] %v1374
        %1407 = vst [vmem:[#allocation3 + $0xd8] sm:$0xff] %v1375
        %1408 = vst [vmem:[#allocation3 + $0xe0] sm:$0xff] %v1376
        %1409 = vst [vmem:[#allocation3 + $0xe8] sm:$0xff] %v1377
        %1410 = vst [vmem:[#allocation3 + $0xf0] sm:$0xff] %v1378
        %1411 = vst [vmem:[#allocation3 + $0xf8] sm:$0xff] %v1379
        %v1412 = vld [vmem:[#allocation2 + $0x2] sm:$0xff]
        %v1413 = vld [vmem:[#allocation2 + $0xa] sm:$0xff]
        %v1414 = vld [vmem:[#allocation2 + $0x1a] sm:$0xff]
        %v1415 = vld [vmem:[#allocation2 + $0x22] sm:$0xff]
        %v1416 = vld [vmem:[#allocation2 + $0x32] sm:$0xff]
        %v1417 = vld [vmem:[#allocation2 + $0x3a] sm:$0xff]
        %v1418 = vld [vmem:[#allocation2 + $0x4a] sm:$0xff]
        %v1419 = vld [vmem:[#allocation2 + $0x52] sm:$0xff]
        %v1420 = vld [vmem:[#allocation2 + $0x62] sm:$0xff]
        %v1421 = vld [vmem:[#allocation2 + $0x6a] sm:$0xff]
        %v1422 = vld [vmem:[#allocation2 + $0x7a] sm:$0xff]
        %v1423 = vld [vmem:[#allocation2 + $0x82] sm:$0xff]
        %v1424 = vld [vmem:[#allocation2 + $0x92] sm:$0xff]
        %v1425 = vld [vmem:[#allocation2 + $0x9a] sm:$0xff]
        %v1426 = vld [vmem:[#allocation2 + $0xaa] sm:$0xff]
        %v1427 = vld [vmem:[#allocation2 + $0xb2] sm:$0xff]
        %v1428 = vld [vmem:[#allocation2 + $0xc2] sm:$0xff]
        %v1429 = vld [vmem:[#allocation2 + $0xca] sm:$0xff]
        %v1430 = vld [vmem:[#allocation2 + $0xda] sm:$0xff]
        %v1431 = vld [vmem:[#allocation2 + $0xe2] sm:$0xff]
        %v1432 = vld [vmem:[#allocation2 + $0xf2] sm:$0xff]
        %v1433 = vld [vmem:[#allocation2 + $0xfa] sm:$0xff]
        %v1434 = vld [vmem:[#allocation2 + $0x10a] sm:$0xff]
        %v1435 = vld [vmem:[#allocation2 + $0x112] sm:$0xff]
        %v1436 = vld [vmem:[#allocation2 + $0x122] sm:$0xff]
        %v1437 = vld [vmem:[#allocation2 + $0x12a] sm:$0xff]
        %v1438 = vld [vmem:[#allocation2 + $0x13a] sm:$0xff]
        %v1439 = vld [vmem:[#allocation2 + $0x142] sm:$0xff]
        %v1440 = vld [vmem:[#allocation2 + $0x152] sm:$0xff]
        %v1441 = vld [vmem:[#allocation2 + $0x15a] sm:$0xff]
        %v1442 = vld [vmem:[#allocation2 + $0x16a] sm:$0xff]
        %v1443 = vld [vmem:[#allocation2 + $0x172] sm:$0xff]
        %v1444 = vpack.c.bf16 %v1413, %v1412
        %v1445 = vpack.c.bf16 %v1415, %v1414
        %v1446 = vpack.c.bf16 %v1417, %v1416
        %v1447 = vpack.c.bf16 %v1419, %v1418
        %v1448 = vpack.c.bf16 %v1421, %v1420
        %v1449 = vpack.c.bf16 %v1423, %v1422
        %v1450 = vpack.c.bf16 %v1425, %v1424
        %v1451 = vpack.c.bf16 %v1427, %v1426
        %v1452 = vpack.c.bf16 %v1429, %v1428
        %v1453 = vpack.c.bf16 %v1431, %v1430
        %v1454 = vpack.c.bf16 %v1433, %v1432
        %v1455 = vpack.c.bf16 %v1435, %v1434
        %v1456 = vpack.c.bf16 %v1437, %v1436
        %v1457 = vpack.c.bf16 %v1439, %v1438
        %v1458 = vpack.c.bf16 %v1441, %v1440
        %v1459 = vpack.c.bf16 %v1443, %v1442
        %s1460 = scalar_lea.vmem [#allocation9], 128
        %v1461 = vld [vmem:[%s1460] sm:$0xf]
        %v1462 = vld [vmem:[%s1460 + $0x4] sm:$0xf]
        %v1463 = vld [vmem:[%s1460 + $0x8] sm:$0xf]
        %v1464 = vld [vmem:[%s1460 + $0xc] sm:$0xf]
        %v1465 = vld [vmem:[%s1460 + $0x10] sm:$0xf]
        %v1466 = vld [vmem:[%s1460 + $0x14] sm:$0xf]
        %v1467 = vld [vmem:[%s1460 + $0x18] sm:$0xf]
        %v1468 = vld [vmem:[%s1460 + $0x1c] sm:$0xf]
        %v1469 = vld [vmem:[%s1460 + $0x20] sm:$0xf]
        %v1470 = vld [vmem:[%s1460 + $0x24] sm:$0xf]
        %v1471 = vld [vmem:[%s1460 + $0x28] sm:$0xf]
        %v1472 = vld [vmem:[%s1460 + $0x2c] sm:$0xf]
        %v1473 = vld [vmem:[%s1460 + $0x30] sm:$0xf]
        %v1474 = vld [vmem:[%s1460 + $0x34] sm:$0xf]
        %v1475 = vld [vmem:[%s1460 + $0x38] sm:$0xf]
        %v1476 = vld [vmem:[%s1460 + $0x3c] sm:$0xf]
        %v1493 = vunpack.c.l.b16 %v1461
        %v1494 = vunpack.c.l.b16 %v1462
        %v1495 = vunpack.c.l.b16 %v1463
        %v1496 = vunpack.c.l.b16 %v1464
        %v1497 = vunpack.c.l.b16 %v1465
        %v1498 = vunpack.c.l.b16 %v1466
        %v1499 = vunpack.c.l.b16 %v1467
        %v1500 = vunpack.c.l.b16 %v1468
        %v1501 = vunpack.c.l.b16 %v1469
        %v1502 = vunpack.c.l.b16 %v1470
        %v1503 = vunpack.c.l.b16 %v1471
        %v1504 = vunpack.c.l.b16 %v1472
        %v1505 = vunpack.c.l.b16 %v1473
        %v1506 = vunpack.c.l.b16 %v1474
        %v1507 = vunpack.c.l.b16 %v1475
        %v1508 = vunpack.c.l.b16 %v1476
        %v1509 = vpack.c.b16 %v1494, %v1493
        %v1510 = vpack.c.b16 %v1496, %v1495
        %v1511 = vpack.c.b16 %v1498, %v1497
        %v1512 = vpack.c.b16 %v1500, %v1499
        %v1513 = vpack.c.b16 %v1502, %v1501
        %v1514 = vpack.c.b16 %v1504, %v1503
        %v1515 = vpack.c.b16 %v1506, %v1505
        %v1516 = vpack.c.b16 %v1508, %v1507
        %1525 = vmatprep.subr.bf16.mxu0 0
        %1526 = vmatpush1.bf16.msra.mxu0 %v1509
        %1527 = vmatprep.subr.bf16.mxu0 0
        %1528 = vmatpush1.bf16.msra.mxu0 %v1510
        %1529 = vmatprep.subr.bf16.mxu0 0
        %1530 = vmatpush1.bf16.msra.mxu0 %v1511
        %1531 = vmatprep.subr.bf16.mxu0 0
        %1532 = vmatpush1.bf16.msra.mxu0 %v1512
        %1533 = vmatprep.subr.bf16.mxu0 0
        %1534 = vmatpush1.bf16.msra.mxu0 %v1513
        %1535 = vmatprep.subr.bf16.mxu0 0
        %1536 = vmatpush1.bf16.msra.mxu0 %v1514
        %1537 = vmatprep.subr.bf16.mxu0 0
        %1538 = vmatpush1.bf16.msra.mxu0 %v1515
        %1539 = vmatprep.subr.bf16.mxu0 0
        %1540 = vmatpush1.bf16.msra.mxu0 %v1516
        %1541 = vmatprep.subr.bf16.mxu0 0
        %1542 = vmatpush1.bf16.msra.mxu0 0
        %1543 = vmatprep.subr.bf16.mxu0 0
        %1544 = vmatpush1.bf16.msra.mxu0 0
        %1545 = vmatprep.subr.bf16.mxu0 0
        %1546 = vmatpush1.bf16.msra.mxu0 0
        %1547 = vmatprep.subr.bf16.mxu0 0
        %1548 = vmatpush1.bf16.msra.mxu0 0
        %1549 = vmatprep.subr.bf16.mxu0 0
        %1550 = vmatpush1.bf16.msra.mxu0 0
        %1551 = vmatprep.subr.bf16.mxu0 0
        %1552 = vmatpush1.bf16.msra.mxu0 0
        %1553 = vmatprep.subr.bf16.mxu0 0
        %1554 = vmatpush1.bf16.msra.mxu0 0
        %1555 = vmatprep.subr.bf16.mxu0 0
        %1556 = vmatpush1.bf16.msra.mxu0 0
        %1557 = vmatprep.mubr.bf16.mxu0 0
        %1558 = vmatmul.mubr.bf16.gmra.mrb[0].mxu0 %v1444
        %v1559 = vpop.f32.mrb[0].mxu0
        %v1560 = vadd.f32 0.0, %v1559
        %v1561 = vpop.f32.mrb[0].mxu0
        %v1562 = vpop.f32.mrb[0].mxu0
        %v1563 = vadd.f32 0.0, %v1562
        %v1564 = vpop.f32.mrb[0].mxu0
        %1565 = vmatprep.mubr.bf16.mxu0 0
        %1566 = vmatmul.mubr.bf16.gmra.mrb[0].mxu0 %v1445
        %v1567 = vpop.f32.mrb[0].mxu0
        %v1568 = vadd.f32 0.0, %v1567
        %v1569 = vpop.f32.mrb[0].mxu0
        %v1570 = vpop.f32.mrb[0].mxu0
        %v1571 = vadd.f32 0.0, %v1570
        %v1572 = vpop.f32.mrb[0].mxu0
        %1573 = vmatprep.mubr.bf16.mxu0 0
        %1574 = vmatmul.mubr.bf16.gmra.mrb[0].mxu0 %v1446
        %v1575 = vpop.f32.mrb[0].mxu0
        %v1576 = vadd.f32 0.0, %v1575
        %v1577 = vpop.f32.mrb[0].mxu0
        %v1578 = vpop.f32.mrb[0].mxu0
        %v1579 = vadd.f32 0.0, %v1578
        %v1580 = vpop.f32.mrb[0].mxu0
        %1581 = vmatprep.mubr.bf16.mxu0 0
        %1582 = vmatmul.mubr.bf16.gmra.mrb[0].mxu0 %v1447
        %v1583 = vpop.f32.mrb[0].mxu0
        %v1584 = vadd.f32 0.0, %v1583
        %v1585 = vpop.f32.mrb[0].mxu0
        %v1586 = vpop.f32.mrb[0].mxu0
        %v1587 = vadd.f32 0.0, %v1586
        %v1588 = vpop.f32.mrb[0].mxu0
        %1589 = vmatprep.mubr.bf16.mxu0 0
        %1590 = vmatmul.mubr.bf16.gmra.mrb[0].mxu0 %v1448
        %v1591 = vpop.f32.mrb[0].mxu0
        %v1592 = vadd.f32 0.0, %v1591
        %v1593 = vpop.f32.mrb[0].mxu0
        %v1594 = vpop.f32.mrb[0].mxu0
        %v1595 = vadd.f32 0.0, %v1594
        %v1596 = vpop.f32.mrb[0].mxu0
        %1597 = vmatprep.mubr.bf16.mxu0 0
        %1598 = vmatmul.mubr.bf16.gmra.mrb[0].mxu0 %v1449
        %v1599 = vpop.f32.mrb[0].mxu0
        %v1600 = vadd.f32 0.0, %v1599
        %v1601 = vpop.f32.mrb[0].mxu0
        %v1602 = vpop.f32.mrb[0].mxu0
        %v1603 = vadd.f32 0.0, %v1602
        %v1604 = vpop.f32.mrb[0].mxu0
        %1605 = vmatprep.mubr.bf16.mxu0 0
        %1606 = vmatmul.mubr.bf16.gmra.mrb[0].mxu0 %v1450
        %v1607 = vpop.f32.mrb[0].mxu0
        %v1608 = vadd.f32 0.0, %v1607
        %v1609 = vpop.f32.mrb[0].mxu0
        %v1610 = vpop.f32.mrb[0].mxu0
        %v1611 = vadd.f32 0.0, %v1610
        %v1612 = vpop.f32.mrb[0].mxu0
        %1613 = vmatprep.mubr.bf16.mxu0 0
        %1614 = vmatmul.mubr.bf16.gmra.mrb[0].mxu0 %v1451
        %v1615 = vpop.f32.mrb[0].mxu0
        %v1616 = vadd.f32 0.0, %v1615
        %v1617 = vpop.f32.mrb[0].mxu0
        %v1618 = vpop.f32.mrb[0].mxu0
        %v1619 = vadd.f32 0.0, %v1618
        %v1620 = vpop.f32.mrb[0].mxu0
        %1621 = vmatprep.mubr.bf16.mxu0 0
        %1622 = vmatmul.mubr.bf16.gmra.mrb[0].mxu0 %v1452
        %v1623 = vpop.f32.mrb[0].mxu0
        %v1624 = vadd.f32 0.0, %v1623
        %v1625 = vpop.f32.mrb[0].mxu0
        %v1626 = vpop.f32.mrb[0].mxu0
        %v1627 = vadd.f32 0.0, %v1626
        %v1628 = vpop.f32.mrb[0].mxu0
        %1629 = vmatprep.mubr.bf16.mxu0 0
        %1630 = vmatmul.mubr.bf16.gmra.mrb[0].mxu0 %v1453
        %v1631 = vpop.f32.mrb[0].mxu0
        %v1632 = vadd.f32 0.0, %v1631
        %v1633 = vpop.f32.mrb[0].mxu0
        %v1634 = vpop.f32.mrb[0].mxu0
        %v1635 = vadd.f32 0.0, %v1634
        %v1636 = vpop.f32.mrb[0].mxu0
        %1637 = vmatprep.mubr.bf16.mxu0 0
        %1638 = vmatmul.mubr.bf16.gmra.mrb[0].mxu0 %v1454
        %v1639 = vpop.f32.mrb[0].mxu0
        %v1640 = vadd.f32 0.0, %v1639
        %v1641 = vpop.f32.mrb[0].mxu0
        %v1642 = vpop.f32.mrb[0].mxu0
        %v1643 = vadd.f32 0.0, %v1642
        %v1644 = vpop.f32.mrb[0].mxu0
        %1645 = vmatprep.mubr.bf16.mxu0 0
        %1646 = vmatmul.mubr.bf16.gmra.mrb[0].mxu0 %v1455
        %v1647 = vpop.f32.mrb[0].mxu0
        %v1648 = vadd.f32 0.0, %v1647
        %v1649 = vpop.f32.mrb[0].mxu0
        %v1650 = vpop.f32.mrb[0].mxu0
        %v1651 = vadd.f32 0.0, %v1650
        %v1652 = vpop.f32.mrb[0].mxu0
        %1653 = vmatprep.mubr.bf16.mxu0 0
        %1654 = vmatmul.mubr.bf16.gmra.mrb[0].mxu0 %v1456
        %v1655 = vpop.f32.mrb[0].mxu0
        %v1656 = vadd.f32 0.0, %v1655
        %v1657 = vpop.f32.mrb[0].mxu0
        %v1658 = vpop.f32.mrb[0].mxu0
        %v1659 = vadd.f32 0.0, %v1658
        %v1660 = vpop.f32.mrb[0].mxu0
        %1661 = vmatprep.mubr.bf16.mxu0 0
        %1662 = vmatmul.mubr.bf16.gmra.mrb[0].mxu0 %v1457
        %v1663 = vpop.f32.mrb[0].mxu0
        %v1664 = vadd.f32 0.0, %v1663
        %v1665 = vpop.f32.mrb[0].mxu0
        %v1666 = vpop.f32.mrb[0].mxu0
        %v1667 = vadd.f32 0.0, %v1666
        %v1668 = vpop.f32.mrb[0].mxu0
        %1669 = vmatprep.mubr.bf16.mxu0 0
        %1670 = vmatmul.mubr.bf16.gmra.mrb[0].mxu0 %v1458
        %v1671 = vpop.f32.mrb[0].mxu0
        %v1672 = vadd.f32 0.0, %v1671
        %v1673 = vpop.f32.mrb[0].mxu0
        %v1674 = vpop.f32.mrb[0].mxu0
        %v1675 = vadd.f32 0.0, %v1674
        %v1676 = vpop.f32.mrb[0].mxu0
        %1677 = vmatprep.mubr.bf16.mxu0 0
        %1678 = vmatmul.mubr.bf16.gmra.mrb[0].mxu0 %v1459
        %v1679 = vpop.f32.mrb[0].mxu0
        %v1680 = vadd.f32 0.0, %v1679
        %v1681 = vpop.f32.mrb[0].mxu0
        %v1682 = vpop.f32.mrb[0].mxu0
        %v1683 = vadd.f32 0.0, %v1682
        %v1684 = vpop.f32.mrb[0].mxu0
        %1685 = vdwg.mxu0
        %v1686 = vld [vmem:[#allocation3] sm:$0xff]
        %v1687 = vld [vmem:[#allocation3 + $0x8] sm:$0xff]
        %v1688 = vld [vmem:[#allocation3 + $0x10] sm:$0xff]
        %v1689 = vld [vmem:[#allocation3 + $0x18] sm:$0xff]
        %v1690 = vld [vmem:[#allocation3 + $0x20] sm:$0xff]
        %v1691 = vld [vmem:[#allocation3 + $0x28] sm:$0xff]
        %v1692 = vld [vmem:[#allocation3 + $0x30] sm:$0xff]
        %v1693 = vld [vmem:[#allocation3 + $0x38] sm:$0xff]
        %v1694 = vld [vmem:[#allocation3 + $0x40] sm:$0xff]
        %v1695 = vld [vmem:[#allocation3 + $0x48] sm:$0xff]
        %v1696 = vld [vmem:[#allocation3 + $0x50] sm:$0xff]
        %v1697 = vld [vmem:[#allocation3 + $0x58] sm:$0xff]
        %v1698 = vld [vmem:[#allocation3 + $0x60] sm:$0xff]
        %v1699 = vld [vmem:[#allocation3 + $0x68] sm:$0xff]
        %v1700 = vld [vmem:[#allocation3 + $0x70] sm:$0xff]
        %v1701 = vld [vmem:[#allocation3 + $0x78] sm:$0xff]
        %v1702 = vld [vmem:[#allocation3 + $0x80] sm:$0xff]
        %v1703 = vld [vmem:[#allocation3 + $0x88] sm:$0xff]
        %v1704 = vld [vmem:[#allocation3 + $0x90] sm:$0xff]
        %v1705 = vld [vmem:[#allocation3 + $0x98] sm:$0xff]
        %v1706 = vld [vmem:[#allocation3 + $0xa0] sm:$0xff]
        %v1707 = vld [vmem:[#allocation3 + $0xa8] sm:$0xff]
        %v1708 = vld [vmem:[#allocation3 + $0xb0] sm:$0xff]
        %v1709 = vld [vmem:[#allocation3 + $0xb8] sm:$0xff]
        %v1710 = vld [vmem:[#allocation3 + $0xc0] sm:$0xff]
        %v1711 = vld [vmem:[#allocation3 + $0xc8] sm:$0xff]
        %v1712 = vld [vmem:[#allocation3 + $0xd0] sm:$0xff]
        %v1713 = vld [vmem:[#allocation3 + $0xd8] sm:$0xff]
        %v1714 = vld [vmem:[#allocation3 + $0xe0] sm:$0xff]
        %v1715 = vld [vmem:[#allocation3 + $0xe8] sm:$0xff]
        %v1716 = vld [vmem:[#allocation3 + $0xf0] sm:$0xff]
        %v1717 = vld [vmem:[#allocation3 + $0xf8] sm:$0xff]
        %v1718 = vadd.f32 %v1686, %v1560
        %v1719 = vadd.f32 %v1687, %v1563
        %v1720 = vadd.f32 %v1688, %v1568
        %v1721 = vadd.f32 %v1689, %v1571
        %v1722 = vadd.f32 %v1690, %v1576
        %v1723 = vadd.f32 %v1691, %v1579
        %v1724 = vadd.f32 %v1692, %v1584
        %v1725 = vadd.f32 %v1693, %v1587
        %v1726 = vadd.f32 %v1694, %v1592
        %v1727 = vadd.f32 %v1695, %v1595
        %v1728 = vadd.f32 %v1696, %v1600
        %v1729 = vadd.f32 %v1697, %v1603
        %v1730 = vadd.f32 %v1698, %v1608
        %v1731 = vadd.f32 %v1699, %v1611
        %v1732 = vadd.f32 %v1700, %v1616
        %v1733 = vadd.f32 %v1701, %v1619
        %v1734 = vadd.f32 %v1702, %v1624
        %v1735 = vadd.f32 %v1703, %v1627
        %v1736 = vadd.f32 %v1704, %v1632
        %v1737 = vadd.f32 %v1705, %v1635
        %v1738 = vadd.f32 %v1706, %v1640
        %v1739 = vadd.f32 %v1707, %v1643
        %v1740 = vadd.f32 %v1708, %v1648
        %v1741 = vadd.f32 %v1709, %v1651
        %v1742 = vadd.f32 %v1710, %v1656
        %v1743 = vadd.f32 %v1711, %v1659
        %v1744 = vadd.f32 %v1712, %v1664
        %v1745 = vadd.f32 %v1713, %v1667
        %v1746 = vadd.f32 %v1714, %v1672
        %v1747 = vadd.f32 %v1715, %v1675
        %v1748 = vadd.f32 %v1716, %v1680
        %v1749 = vadd.f32 %v1717, %v1683
        %1750 = vst [vmem:[#allocation3] sm:$0xff] %v1718
        %1751 = vst [vmem:[#allocation3 + $0x8] sm:$0xff] %v1719
        %1752 = vst [vmem:[#allocation3 + $0x10] sm:$0xff] %v1720
        %1753 = vst [vmem:[#allocation3 + $0x18] sm:$0xff] %v1721
        %1754 = vst [vmem:[#allocation3 + $0x20] sm:$0xff] %v1722
        %1755 = vst [vmem:[#allocation3 + $0x28] sm:$0xff] %v1723
        %1756 = vst [vmem:[#allocation3 + $0x30] sm:$0xff] %v1724
        %1757 = vst [vmem:[#allocation3 + $0x38] sm:$0xff] %v1725
        %1758 = vst [vmem:[#allocation3 + $0x40] sm:$0xff] %v1726
        %1759 = vst [vmem:[#allocation3 + $0x48] sm:$0xff] %v1727
        %1760 = vst [vmem:[#allocation3 + $0x50] sm:$0xff] %v1728
        %1761 = vst [vmem:[#allocation3 + $0x58] sm:$0xff] %v1729
        %1762 = vst [vmem:[#allocation3 + $0x60] sm:$0xff] %v1730
        %1763 = vst [vmem:[#allocation3 + $0x68] sm:$0xff] %v1731
        %1764 = vst [vmem:[#allocation3 + $0x70] sm:$0xff] %v1732
        %1765 = vst [vmem:[#allocation3 + $0x78] sm:$0xff] %v1733
        %1766 = vst [vmem:[#allocation3 + $0x80] sm:$0xff] %v1734
        %1767 = vst [vmem:[#allocation3 + $0x88] sm:$0xff] %v1735
        %1768 = vst [vmem:[#allocation3 + $0x90] sm:$0xff] %v1736
        %1769 = vst [vmem:[#allocation3 + $0x98] sm:$0xff] %v1737
        %1770 = vst [vmem:[#allocation3 + $0xa0] sm:$0xff] %v1738
        %1771 = vst [vmem:[#allocation3 + $0xa8] sm:$0xff] %v1739
        %1772 = vst [vmem:[#allocation3 + $0xb0] sm:$0xff] %v1740
        %1773 = vst [vmem:[#allocation3 + $0xb8] sm:$0xff] %v1741
        %1774 = vst [vmem:[#allocation3 + $0xc0] sm:$0xff] %v1742
        %1775 = vst [vmem:[#allocation3 + $0xc8] sm:$0xff] %v1743
        %1776 = vst [vmem:[#allocation3 + $0xd0] sm:$0xff] %v1744
        %1777 = vst [vmem:[#allocation3 + $0xd8] sm:$0xff] %v1745
        %1778 = vst [vmem:[#allocation3 + $0xe0] sm:$0xff] %v1746
        %1779 = vst [vmem:[#allocation3 + $0xe8] sm:$0xff] %v1747
        %1780 = vst [vmem:[#allocation3 + $0xf0] sm:$0xff] %v1748
        %1781 = vst [vmem:[#allocation3 + $0xf8] sm:$0xff] %v1749
        %v1782 = vld [vmem:[%s672] sm:$0xff]
        %v1783 = vld [vmem:[%s672 + $0x8] sm:$0xff]
        %v1784 = vld [vmem:[%s672 + $0x18] sm:$0xff]
        %v1785 = vld [vmem:[%s672 + $0x20] sm:$0xff]
        %v1786 = vld [vmem:[%s672 + $0x30] sm:$0xff]
        %v1787 = vld [vmem:[%s672 + $0x38] sm:$0xff]
        %v1788 = vld [vmem:[%s672 + $0x48] sm:$0xff]
        %v1789 = vld [vmem:[%s672 + $0x50] sm:$0xff]
        %v1790 = vld [vmem:[%s672 + $0x60] sm:$0xff]
        %v1791 = vld [vmem:[%s672 + $0x68] sm:$0xff]
        %v1792 = vld [vmem:[%s672 + $0x78] sm:$0xff]
        %v1793 = vld [vmem:[%s672 + $0x80] sm:$0xff]
        %v1794 = vld [vmem:[%s672 + $0x90] sm:$0xff]
        %v1795 = vld [vmem:[%s672 + $0x98] sm:$0xff]
        %v1796 = vld [vmem:[%s672 + $0xa8] sm:$0xff]
        %v1797 = vld [vmem:[%s672 + $0xb0] sm:$0xff]
        %v1798 = vld [vmem:[%s672 + $0xc0] sm:$0xff]
        %v1799 = vld [vmem:[%s672 + $0xc8] sm:$0xff]
        %v1800 = vld [vmem:[%s672 + $0xd8] sm:$0xff]
        %v1801 = vld [vmem:[%s672 + $0xe0] sm:$0xff]
        %v1802 = vld [vmem:[%s672 + $0xf0] sm:$0xff]
        %v1803 = vld [vmem:[%s672 + $0xf8] sm:$0xff]
        %v1804 = vld [vmem:[%s672 + $0x108] sm:$0xff]
        %v1805 = vld [vmem:[%s672 + $0x110] sm:$0xff]
        %v1806 = vld [vmem:[%s672 + $0x120] sm:$0xff]
        %v1807 = vld [vmem:[%s672 + $0x128] sm:$0xff]
        %v1808 = vld [vmem:[%s672 + $0x138] sm:$0xff]
        %v1809 = vld [vmem:[%s672 + $0x140] sm:$0xff]
        %v1810 = vld [vmem:[%s672 + $0x150] sm:$0xff]
        %v1811 = vld [vmem:[%s672 + $0x158] sm:$0xff]
        %v1812 = vld [vmem:[%s672 + $0x168] sm:$0xff]
        %v1813 = vld [vmem:[%s672 + $0x170] sm:$0xff]
        %v1814 = vpack.c.bf16 %v1783, %v1782
        %v1815 = vpack.c.bf16 %v1785, %v1784
        %v1816 = vpack.c.bf16 %v1787, %v1786
        %v1817 = vpack.c.bf16 %v1789, %v1788
        %v1818 = vpack.c.bf16 %v1791, %v1790
        %v1819 = vpack.c.bf16 %v1793, %v1792
        %v1820 = vpack.c.bf16 %v1795, %v1794
        %v1821 = vpack.c.bf16 %v1797, %v1796
        %v1822 = vpack.c.bf16 %v1799, %v1798
        %v1823 = vpack.c.bf16 %v1801, %v1800
        %v1824 = vpack.c.bf16 %v1803, %v1802
        %v1825 = vpack.c.bf16 %v1805, %v1804
        %v1826 = vpack.c.bf16 %v1807, %v1806
        %v1827 = vpack.c.bf16 %v1809, %v1808
        %v1828 = vpack.c.bf16 %v1811, %v1810
        %v1829 = vpack.c.bf16 %v1813, %v1812
        %s1830 = scalar_lea.vmem [#allocation9], 192
        %v1831 = vld [vmem:[%s1830] sm:$0xf]
        %v1832 = vld [vmem:[%s1830 + $0x4] sm:$0xf]
        %v1833 = vld [vmem:[%s1830 + $0x8] sm:$0xf]
        %v1834 = vld [vmem:[%s1830 + $0xc] sm:$0xf]
        %v1835 = vld [vmem:[%s1830 + $0x10] sm:$0xf]
        %v1836 = vld [vmem:[%s1830 + $0x14] sm:$0xf]
        %v1837 = vld [vmem:[%s1830 + $0x18] sm:$0xf]
        %v1838 = vld [vmem:[%s1830 + $0x1c] sm:$0xf]
        %v1839 = vld [vmem:[%s1830 + $0x20] sm:$0xf]
        %v1840 = vld [vmem:[%s1830 + $0x24] sm:$0xf]
        %v1841 = vld [vmem:[%s1830 + $0x28] sm:$0xf]
        %v1842 = vld [vmem:[%s1830 + $0x2c] sm:$0xf]
        %v1843 = vld [vmem:[%s1830 + $0x30] sm:$0xf]
        %v1844 = vld [vmem:[%s1830 + $0x34] sm:$0xf]
        %v1845 = vld [vmem:[%s1830 + $0x38] sm:$0xf]
        %v1846 = vld [vmem:[%s1830 + $0x3c] sm:$0xf]
        %v1863 = vunpack.c.l.b16 %v1831
        %v1864 = vunpack.c.l.b16 %v1832
        %v1865 = vunpack.c.l.b16 %v1833
        %v1866 = vunpack.c.l.b16 %v1834
        %v1867 = vunpack.c.l.b16 %v1835
        %v1868 = vunpack.c.l.b16 %v1836
        %v1869 = vunpack.c.l.b16 %v1837
        %v1870 = vunpack.c.l.b16 %v1838
        %v1871 = vunpack.c.l.b16 %v1839
        %v1872 = vunpack.c.l.b16 %v1840
        %v1873 = vunpack.c.l.b16 %v1841
        %v1874 = vunpack.c.l.b16 %v1842
        %v1875 = vunpack.c.l.b16 %v1843
        %v1876 = vunpack.c.l.b16 %v1844
        %v1877 = vunpack.c.l.b16 %v1845
        %v1878 = vunpack.c.l.b16 %v1846
        %v1879 = vpack.c.b16 %v1864, %v1863
        %v1880 = vpack.c.b16 %v1866, %v1865
        %v1881 = vpack.c.b16 %v1868, %v1867
        %v1882 = vpack.c.b16 %v1870, %v1869
        %v1883 = vpack.c.b16 %v1872, %v1871
        %v1884 = vpack.c.b16 %v1874, %v1873
        %v1885 = vpack.c.b16 %v1876, %v1875
        %v1886 = vpack.c.b16 %v1878, %v1877
        %1895 = vmatprep.subr.bf16.mxu0 0
        %1896 = vmatpush1.bf16.msra.mxu0 %v1879
        %1897 = vmatprep.subr.bf16.mxu0 0
        %1898 = vmatpush1.bf16.msra.mxu0 %v1880
        %1899 = vmatprep.subr.bf16.mxu0 0
        %1900 = vmatpush1.bf16.msra.mxu0 %v1881
        %1901 = vmatprep.subr.bf16.mxu0 0
        %1902 = vmatpush1.bf16.msra.mxu0 %v1882
        %1903 = vmatprep.subr.bf16.mxu0 0
        %1904 = vmatpush1.bf16.msra.mxu0 %v1883
        %1905 = vmatprep.subr.bf16.mxu0 0
        %1906 = vmatpush1.bf16.msra.mxu0 %v1884
        %1907 = vmatprep.subr.bf16.mxu0 0
        %1908 = vmatpush1.bf16.msra.mxu0 %v1885
        %1909 = vmatprep.subr.bf16.mxu0 0
        %1910 = vmatpush1.bf16.msra.mxu0 %v1886
        %1911 = vmatprep.subr.bf16.mxu0 0
        %1912 = vmatpush1.bf16.msra.mxu0 0
        %1913 = vmatprep.subr.bf16.mxu0 0
        %1914 = vmatpush1.bf16.msra.mxu0 0
        %1915 = vmatprep.subr.bf16.mxu0 0
        %1916 = vmatpush1.bf16.msra.mxu0 0
        %1917 = vmatprep.subr.bf16.mxu0 0
        %1918 = vmatpush1.bf16.msra.mxu0 0
        %1919 = vmatprep.subr.bf16.mxu0 0
        %1920 = vmatpush1.bf16.msra.mxu0 0
        %1921 = vmatprep.subr.bf16.mxu0 0
        %1922 = vmatpush1.bf16.msra.mxu0 0
        %1923 = vmatprep.subr.bf16.mxu0 0
        %1924 = vmatpush1.bf16.msra.mxu0 0
        %1925 = vmatprep.subr.bf16.mxu0 0
        %1926 = vmatpush1.bf16.msra.mxu0 0
        %1927 = vmatprep.mubr.bf16.mxu0 0
        %1928 = vmatmul.mubr.bf16.gmra.mrb[0].mxu0 %v1814
        %v1929 = vpop.f32.mrb[0].mxu0
        %v1930 = vadd.f32 0.0, %v1929
        %v1931 = vpop.f32.mrb[0].mxu0
        %v1932 = vpop.f32.mrb[0].mxu0
        %v1933 = vadd.f32 0.0, %v1932
        %v1934 = vpop.f32.mrb[0].mxu0
        %1935 = vmatprep.mubr.bf16.mxu0 0
        %1936 = vmatmul.mubr.bf16.gmra.mrb[0].mxu0 %v1815
        %v1937 = vpop.f32.mrb[0].mxu0
        %v1938 = vadd.f32 0.0, %v1937
        %v1939 = vpop.f32.mrb[0].mxu0
        %v1940 = vpop.f32.mrb[0].mxu0
        %v1941 = vadd.f32 0.0, %v1940
        %v1942 = vpop.f32.mrb[0].mxu0
        %1943 = vmatprep.mubr.bf16.mxu0 0
        %1944 = vmatmul.mubr.bf16.gmra.mrb[0].mxu0 %v1816
        %v1945 = vpop.f32.mrb[0].mxu0
        %v1946 = vadd.f32 0.0, %v1945
        %v1947 = vpop.f32.mrb[0].mxu0
        %v1948 = vpop.f32.mrb[0].mxu0
        %v1949 = vadd.f32 0.0, %v1948
        %v1950 = vpop.f32.mrb[0].mxu0
        %1951 = vmatprep.mubr.bf16.mxu0 0
        %1952 = vmatmul.mubr.bf16.gmra.mrb[0].mxu0 %v1817
        %v1953 = vpop.f32.mrb[0].mxu0
        %v1954 = vadd.f32 0.0, %v1953
        %v1955 = vpop.f32.mrb[0].mxu0
        %v1956 = vpop.f32.mrb[0].mxu0
        %v1957 = vadd.f32 0.0, %v1956
        %v1958 = vpop.f32.mrb[0].mxu0
        %1959 = vmatprep.mubr.bf16.mxu0 0
        %1960 = vmatmul.mubr.bf16.gmra.mrb[0].mxu0 %v1818
        %v1961 = vpop.f32.mrb[0].mxu0
        %v1962 = vadd.f32 0.0, %v1961
        %v1963 = vpop.f32.mrb[0].mxu0
        %v1964 = vpop.f32.mrb[0].mxu0
        %v1965 = vadd.f32 0.0, %v1964
        %v1966 = vpop.f32.mrb[0].mxu0
        %1967 = vmatprep.mubr.bf16.mxu0 0
        %1968 = vmatmul.mubr.bf16.gmra.mrb[0].mxu0 %v1819
        %v1969 = vpop.f32.mrb[0].mxu0
        %v1970 = vadd.f32 0.0, %v1969
        %v1971 = vpop.f32.mrb[0].mxu0
        %v1972 = vpop.f32.mrb[0].mxu0
        %v1973 = vadd.f32 0.0, %v1972
        %v1974 = vpop.f32.mrb[0].mxu0
        %1975 = vmatprep.mubr.bf16.mxu0 0
        %1976 = vmatmul.mubr.bf16.gmra.mrb[0].mxu0 %v1820
        %v1977 = vpop.f32.mrb[0].mxu0
        %v1978 = vadd.f32 0.0, %v1977
        %v1979 = vpop.f32.mrb[0].mxu0
        %v1980 = vpop.f32.mrb[0].mxu0
        %v1981 = vadd.f32 0.0, %v1980
        %v1982 = vpop.f32.mrb[0].mxu0
        %1983 = vmatprep.mubr.bf16.mxu0 0
        %1984 = vmatmul.mubr.bf16.gmra.mrb[0].mxu0 %v1821
        %v1985 = vpop.f32.mrb[0].mxu0
        %v1986 = vadd.f32 0.0, %v1985
        %v1987 = vpop.f32.mrb[0].mxu0
        %v1988 = vpop.f32.mrb[0].mxu0
        %v1989 = vadd.f32 0.0, %v1988
        %v1990 = vpop.f32.mrb[0].mxu0
        %1991 = vmatprep.mubr.bf16.mxu0 0
        %1992 = vmatmul.mubr.bf16.gmra.mrb[0].mxu0 %v1822
        %v1993 = vpop.f32.mrb[0].mxu0
        %v1994 = vadd.f32 0.0, %v1993
        %v1995 = vpop.f32.mrb[0].mxu0
        %v1996 = vpop.f32.mrb[0].mxu0
        %v1997 = vadd.f32 0.0, %v1996
        %v1998 = vpop.f32.mrb[0].mxu0
        %1999 = vmatprep.mubr.bf16.mxu0 0
        %2000 = vmatmul.mubr.bf16.gmra.mrb[0].mxu0 %v1823
        %v2001 = vpop.f32.mrb[0].mxu0
        %v2002 = vadd.f32 0.0, %v2001
        %v2003 = vpop.f32.mrb[0].mxu0
        %v2004 = vpop.f32.mrb[0].mxu0
        %v2005 = vadd.f32 0.0, %v2004
        %v2006 = vpop.f32.mrb[0].mxu0
        %2007 = vmatprep.mubr.bf16.mxu0 0
        %2008 = vmatmul.mubr.bf16.gmra.mrb[0].mxu0 %v1824
        %v2009 = vpop.f32.mrb[0].mxu0
        %v2010 = vadd.f32 0.0, %v2009
        %v2011 = vpop.f32.mrb[0].mxu0
        %v2012 = vpop.f32.mrb[0].mxu0
        %v2013 = vadd.f32 0.0, %v2012
        %v2014 = vpop.f32.mrb[0].mxu0
        %2015 = vmatprep.mubr.bf16.mxu0 0
        %2016 = vmatmul.mubr.bf16.gmra.mrb[0].mxu0 %v1825
        %v2017 = vpop.f32.mrb[0].mxu0
        %v2018 = vadd.f32 0.0, %v2017
        %v2019 = vpop.f32.mrb[0].mxu0
        %v2020 = vpop.f32.mrb[0].mxu0
        %v2021 = vadd.f32 0.0, %v2020
        %v2022 = vpop.f32.mrb[0].mxu0
        %2023 = vmatprep.mubr.bf16.mxu0 0
        %2024 = vmatmul.mubr.bf16.gmra.mrb[0].mxu0 %v1826
        %v2025 = vpop.f32.mrb[0].mxu0
        %v2026 = vadd.f32 0.0, %v2025
        %v2027 = vpop.f32.mrb[0].mxu0
        %v2028 = vpop.f32.mrb[0].mxu0
        %v2029 = vadd.f32 0.0, %v2028
        %v2030 = vpop.f32.mrb[0].mxu0
        %2031 = vmatprep.mubr.bf16.mxu0 0
        %2032 = vmatmul.mubr.bf16.gmra.mrb[0].mxu0 %v1827
        %v2033 = vpop.f32.mrb[0].mxu0
        %v2034 = vadd.f32 0.0, %v2033
        %v2035 = vpop.f32.mrb[0].mxu0
        %v2036 = vpop.f32.mrb[0].mxu0
        %v2037 = vadd.f32 0.0, %v2036
        %v2038 = vpop.f32.mrb[0].mxu0
        %2039 = vmatprep.mubr.bf16.mxu0 0
        %2040 = vmatmul.mubr.bf16.gmra.mrb[0].mxu0 %v1828
        %v2041 = vpop.f32.mrb[0].mxu0
        %v2042 = vadd.f32 0.0, %v2041
        %v2043 = vpop.f32.mrb[0].mxu0
        %v2044 = vpop.f32.mrb[0].mxu0
        %v2045 = vadd.f32 0.0, %v2044
        %v2046 = vpop.f32.mrb[0].mxu0
        %2047 = vmatprep.mubr.bf16.mxu0 0
        %2048 = vmatmul.mubr.bf16.gmra.mrb[0].mxu0 %v1829
        %v2049 = vpop.f32.mrb[0].mxu0
        %v2050 = vadd.f32 0.0, %v2049
        %v2051 = vpop.f32.mrb[0].mxu0
        %v2052 = vpop.f32.mrb[0].mxu0
        %v2053 = vadd.f32 0.0, %v2052
        %v2054 = vpop.f32.mrb[0].mxu0
        %2055 = vdwg.mxu0
        %v2056 = vld [vmem:[#allocation3] sm:$0xff]
        %v2057 = vld [vmem:[#allocation3 + $0x8] sm:$0xff]
        %v2058 = vld [vmem:[#allocation3 + $0x10] sm:$0xff]
        %v2059 = vld [vmem:[#allocation3 + $0x18] sm:$0xff]
        %v2060 = vld [vmem:[#allocation3 + $0x20] sm:$0xff]
        %v2061 = vld [vmem:[#allocation3 + $0x28] sm:$0xff]
        %v2062 = vld [vmem:[#allocation3 + $0x30] sm:$0xff]
        %v2063 = vld [vmem:[#allocation3 + $0x38] sm:$0xff]
        %v2064 = vld [vmem:[#allocation3 + $0x40] sm:$0xff]
        %v2065 = vld [vmem:[#allocation3 + $0x48] sm:$0xff]
        %v2066 = vld [vmem:[#allocation3 + $0x50] sm:$0xff]
        %v2067 = vld [vmem:[#allocation3 + $0x58] sm:$0xff]
        %v2068 = vld [vmem:[#allocation3 + $0x60] sm:$0xff]
        %v2069 = vld [vmem:[#allocation3 + $0x68] sm:$0xff]
        %v2070 = vld [vmem:[#allocation3 + $0x70] sm:$0xff]
        %v2071 = vld [vmem:[#allocation3 + $0x78] sm:$0xff]
        %v2072 = vld [vmem:[#allocation3 + $0x80] sm:$0xff]
        %v2073 = vld [vmem:[#allocation3 + $0x88] sm:$0xff]
        %v2074 = vld [vmem:[#allocation3 + $0x90] sm:$0xff]
        %v2075 = vld [vmem:[#allocation3 + $0x98] sm:$0xff]
        %v2076 = vld [vmem:[#allocation3 + $0xa0] sm:$0xff]
        %v2077 = vld [vmem:[#allocation3 + $0xa8] sm:$0xff]
        %v2078 = vld [vmem:[#allocation3 + $0xb0] sm:$0xff]
        %v2079 = vld [vmem:[#allocation3 + $0xb8] sm:$0xff]
        %v2080 = vld [vmem:[#allocation3 + $0xc0] sm:$0xff]
        %v2081 = vld [vmem:[#allocation3 + $0xc8] sm:$0xff]
        %v2082 = vld [vmem:[#allocation3 + $0xd0] sm:$0xff]
        %v2083 = vld [vmem:[#allocation3 + $0xd8] sm:$0xff]
        %v2084 = vld [vmem:[#allocation3 + $0xe0] sm:$0xff]
        %v2085 = vld [vmem:[#allocation3 + $0xe8] sm:$0xff]
        %v2086 = vld [vmem:[#allocation3 + $0xf0] sm:$0xff]
        %v2087 = vld [vmem:[#allocation3 + $0xf8] sm:$0xff]
        %v2088 = vadd.f32 %v2056, %v1930
        %v2089 = vadd.f32 %v2057, %v1933
        %v2090 = vadd.f32 %v2058, %v1938
        %v2091 = vadd.f32 %v2059, %v1941
        %v2092 = vadd.f32 %v2060, %v1946
        %v2093 = vadd.f32 %v2061, %v1949
        %v2094 = vadd.f32 %v2062, %v1954
        %v2095 = vadd.f32 %v2063, %v1957
        %v2096 = vadd.f32 %v2064, %v1962
        %v2097 = vadd.f32 %v2065, %v1965
        %v2098 = vadd.f32 %v2066, %v1970
        %v2099 = vadd.f32 %v2067, %v1973
        %v2100 = vadd.f32 %v2068, %v1978
        %v2101 = vadd.f32 %v2069, %v1981
        %v2102 = vadd.f32 %v2070, %v1986
        %v2103 = vadd.f32 %v2071, %v1989
        %v2104 = vadd.f32 %v2072, %v1994
        %v2105 = vadd.f32 %v2073, %v1997
        %v2106 = vadd.f32 %v2074, %v2002
        %v2107 = vadd.f32 %v2075, %v2005
        %v2108 = vadd.f32 %v2076, %v2010
        %v2109 = vadd.f32 %v2077, %v2013
        %v2110 = vadd.f32 %v2078, %v2018
        %v2111 = vadd.f32 %v2079, %v2021
        %v2112 = vadd.f32 %v2080, %v2026
        %v2113 = vadd.f32 %v2081, %v2029
        %v2114 = vadd.f32 %v2082, %v2034
        %v2115 = vadd.f32 %v2083, %v2037
        %v2116 = vadd.f32 %v2084, %v2042
        %v2117 = vadd.f32 %v2085, %v2045
        %v2118 = vadd.f32 %v2086, %v2050
        %v2119 = vadd.f32 %v2087, %v2053
        %2120 = vst [vmem:[#allocation3] sm:$0xff] %v2088
        %2121 = vst [vmem:[#allocation3 + $0x8] sm:$0xff] %v2089
        %2122 = vst [vmem:[#allocation3 + $0x10] sm:$0xff] %v2090
        %2123 = vst [vmem:[#allocation3 + $0x18] sm:$0xff] %v2091
        %2124 = vst [vmem:[#allocation3 + $0x20] sm:$0xff] %v2092
        %2125 = vst [vmem:[#allocation3 + $0x28] sm:$0xff] %v2093
        %2126 = vst [vmem:[#allocation3 + $0x30] sm:$0xff] %v2094
        %2127 = vst [vmem:[#allocation3 + $0x38] sm:$0xff] %v2095
        %2128 = vst [vmem:[#allocation3 + $0x40] sm:$0xff] %v2096
        %2129 = vst [vmem:[#allocation3 + $0x48] sm:$0xff] %v2097
        %2130 = vst [vmem:[#allocation3 + $0x50] sm:$0xff] %v2098
        %2131 = vst [vmem:[#allocation3 + $0x58] sm:$0xff] %v2099
        %2132 = vst [vmem:[#allocation3 + $0x60] sm:$0xff] %v2100
        %2133 = vst [vmem:[#allocation3 + $0x68] sm:$0xff] %v2101
        %2134 = vst [vmem:[#allocation3 + $0x70] sm:$0xff] %v2102
        %2135 = vst [vmem:[#allocation3 + $0x78] sm:$0xff] %v2103
        %2136 = vst [vmem:[#allocation3 + $0x80] sm:$0xff] %v2104
        %2137 = vst [vmem:[#allocation3 + $0x88] sm:$0xff] %v2105
        %2138 = vst [vmem:[#allocation3 + $0x90] sm:$0xff] %v2106
        %2139 = vst [vmem:[#allocation3 + $0x98] sm:$0xff] %v2107
        %2140 = vst [vmem:[#allocation3 + $0xa0] sm:$0xff] %v2108
        %2141 = vst [vmem:[#allocation3 + $0xa8] sm:$0xff] %v2109
        %2142 = vst [vmem:[#allocation3 + $0xb0] sm:$0xff] %v2110
        %2143 = vst [vmem:[#allocation3 + $0xb8] sm:$0xff] %v2111
        %2144 = vst [vmem:[#allocation3 + $0xc0] sm:$0xff] %v2112
        %2145 = vst [vmem:[#allocation3 + $0xc8] sm:$0xff] %v2113
        %2146 = vst [vmem:[#allocation3 + $0xd0] sm:$0xff] %v2114
        %2147 = vst [vmem:[#allocation3 + $0xd8] sm:$0xff] %v2115
        %2148 = vst [vmem:[#allocation3 + $0xe0] sm:$0xff] %v2116
        %2149 = vst [vmem:[#allocation3 + $0xe8] sm:$0xff] %v2117
        %2150 = vst [vmem:[#allocation3 + $0xf0] sm:$0xff] %v2118
        %2151 = vst [vmem:[#allocation3 + $0xf8] sm:$0xff] %v2119
        %v2152 = vld [vmem:[%s672 + $0x1] sm:$0xff]
        %v2153 = vld [vmem:[%s672 + $0x9] sm:$0xff]
        %v2154 = vld [vmem:[%s672 + $0x19] sm:$0xff]
        %v2155 = vld [vmem:[%s672 + $0x21] sm:$0xff]
        %v2156 = vld [vmem:[%s672 + $0x31] sm:$0xff]
        %v2157 = vld [vmem:[%s672 + $0x39] sm:$0xff]
        %v2158 = vld [vmem:[%s672 + $0x49] sm:$0xff]
        %v2159 = vld [vmem:[%s672 + $0x51] sm:$0xff]
        %v2160 = vld [vmem:[%s672 + $0x61] sm:$0xff]
        %v2161 = vld [vmem:[%s672 + $0x69] sm:$0xff]
        %v2162 = vld [vmem:[%s672 + $0x79] sm:$0xff]
        %v2163 = vld [vmem:[%s672 + $0x81] sm:$0xff]
        %v2164 = vld [vmem:[%s672 + $0x91] sm:$0xff]
        %v2165 = vld [vmem:[%s672 + $0x99] sm:$0xff]
        %v2166 = vld [vmem:[%s672 + $0xa9] sm:$0xff]
        %v2167 = vld [vmem:[%s672 + $0xb1] sm:$0xff]
        %v2168 = vld [vmem:[%s672 + $0xc1] sm:$0xff]
        %v2169 = vld [vmem:[%s672 + $0xc9] sm:$0xff]
        %v2170 = vld [vmem:[%s672 + $0xd9] sm:$0xff]
        %v2171 = vld [vmem:[%s672 + $0xe1] sm:$0xff]
        %v2172 = vld [vmem:[%s672 + $0xf1] sm:$0xff]
        %v2173 = vld [vmem:[%s672 + $0xf9] sm:$0xff]
        %v2174 = vld [vmem:[%s672 + $0x109] sm:$0xff]
        %v2175 = vld [vmem:[%s672 + $0x111] sm:$0xff]
        %v2176 = vld [vmem:[%s672 + $0x121] sm:$0xff]
        %v2177 = vld [vmem:[%s672 + $0x129] sm:$0xff]
        %v2178 = vld [vmem:[%s672 + $0x139] sm:$0xff]
        %v2179 = vld [vmem:[%s672 + $0x141] sm:$0xff]
        %v2180 = vld [vmem:[%s672 + $0x151] sm:$0xff]
        %v2181 = vld [vmem:[%s672 + $0x159] sm:$0xff]
        %v2182 = vld [vmem:[%s672 + $0x169] sm:$0xff]
        %v2183 = vld [vmem:[%s672 + $0x171] sm:$0xff]
        %v2184 = vpack.c.bf16 %v2153, %v2152
        %v2185 = vpack.c.bf16 %v2155, %v2154
        %v2186 = vpack.c.bf16 %v2157, %v2156
        %v2187 = vpack.c.bf16 %v2159, %v2158
        %v2188 = vpack.c.bf16 %v2161, %v2160
        %v2189 = vpack.c.bf16 %v2163, %v2162
        %v2190 = vpack.c.bf16 %v2165, %v2164
        %v2191 = vpack.c.bf16 %v2167, %v2166
        %v2192 = vpack.c.bf16 %v2169, %v2168
        %v2193 = vpack.c.bf16 %v2171, %v2170
        %v2194 = vpack.c.bf16 %v2173, %v2172
        %v2195 = vpack.c.bf16 %v2175, %v2174
        %v2196 = vpack.c.bf16 %v2177, %v2176
        %v2197 = vpack.c.bf16 %v2179, %v2178
        %v2198 = vpack.c.bf16 %v2181, %v2180
        %v2199 = vpack.c.bf16 %v2183, %v2182
        %s2200 = scalar_lea.vmem [#allocation9], 256
        %v2201 = vld [vmem:[%s2200] sm:$0xf]
        %v2202 = vld [vmem:[%s2200 + $0x4] sm:$0xf]
        %v2203 = vld [vmem:[%s2200 + $0x8] sm:$0xf]
        %v2204 = vld [vmem:[%s2200 + $0xc] sm:$0xf]
        %v2205 = vld [vmem:[%s2200 + $0x10] sm:$0xf]
        %v2206 = vld [vmem:[%s2200 + $0x14] sm:$0xf]
        %v2207 = vld [vmem:[%s2200 + $0x18] sm:$0xf]
        %v2208 = vld [vmem:[%s2200 + $0x1c] sm:$0xf]
        %v2209 = vld [vmem:[%s2200 + $0x20] sm:$0xf]
        %v2210 = vld [vmem:[%s2200 + $0x24] sm:$0xf]
        %v2211 = vld [vmem:[%s2200 + $0x28] sm:$0xf]
        %v2212 = vld [vmem:[%s2200 + $0x2c] sm:$0xf]
        %v2213 = vld [vmem:[%s2200 + $0x30] sm:$0xf]
        %v2214 = vld [vmem:[%s2200 + $0x34] sm:$0xf]
        %v2215 = vld [vmem:[%s2200 + $0x38] sm:$0xf]
        %v2216 = vld [vmem:[%s2200 + $0x3c] sm:$0xf]
        %v2233 = vunpack.c.l.b16 %v2201
        %v2234 = vunpack.c.l.b16 %v2202
        %v2235 = vunpack.c.l.b16 %v2203
        %v2236 = vunpack.c.l.b16 %v2204
        %v2237 = vunpack.c.l.b16 %v2205
        %v2238 = vunpack.c.l.b16 %v2206
        %v2239 = vunpack.c.l.b16 %v2207
        %v2240 = vunpack.c.l.b16 %v2208
        %v2241 = vunpack.c.l.b16 %v2209
        %v2242 = vunpack.c.l.b16 %v2210
        %v2243 = vunpack.c.l.b16 %v2211
        %v2244 = vunpack.c.l.b16 %v2212
        %v2245 = vunpack.c.l.b16 %v2213
        %v2246 = vunpack.c.l.b16 %v2214
        %v2247 = vunpack.c.l.b16 %v2215
        %v2248 = vunpack.c.l.b16 %v2216
        %v2249 = vpack.c.b16 %v2234, %v2233
        %v2250 = vpack.c.b16 %v2236, %v2235
        %v2251 = vpack.c.b16 %v2238, %v2237
        %v2252 = vpack.c.b16 %v2240, %v2239
        %v2253 = vpack.c.b16 %v2242, %v2241
        %v2254 = vpack.c.b16 %v2244, %v2243
        %v2255 = vpack.c.b16 %v2246, %v2245
        %v2256 = vpack.c.b16 %v2248, %v2247
        %2265 = vmatprep.subr.bf16.mxu0 0
        %2266 = vmatpush1.bf16.msra.mxu0 %v2249
        %2267 = vmatprep.subr.bf16.mxu0 0
        %2268 = vmatpush1.bf16.msra.mxu0 %v2250
        %2269 = vmatprep.subr.bf16.mxu0 0
        %2270 = vmatpush1.bf16.msra.mxu0 %v2251
        %2271 = vmatprep.subr.bf16.mxu0 0
        %2272 = vmatpush1.bf16.msra.mxu0 %v2252
        %2273 = vmatprep.subr.bf16.mxu0 0
        %2274 = vmatpush1.bf16.msra.mxu0 %v2253
        %2275 = vmatprep.subr.bf16.mxu0 0
        %2276 = vmatpush1.bf16.msra.mxu0 %v2254
        %2277 = vmatprep.subr.bf16.mxu0 0
        %2278 = vmatpush1.bf16.msra.mxu0 %v2255
        %2279 = vmatprep.subr.bf16.mxu0 0
        %2280 = vmatpush1.bf16.msra.mxu0 %v2256
        %2281 = vmatprep.subr.bf16.mxu0 0
        %2282 = vmatpush1.bf16.msra.mxu0 0
        %2283 = vmatprep.subr.bf16.mxu0 0
        %2284 = vmatpush1.bf16.msra.mxu0 0
        %2285 = vmatprep.subr.bf16.mxu0 0
        %2286 = vmatpush1.bf16.msra.mxu0 0
        %2287 = vmatprep.subr.bf16.mxu0 0
        %2288 = vmatpush1.bf16.msra.mxu0 0
        %2289 = vmatprep.subr.bf16.mxu0 0
        %2290 = vmatpush1.bf16.msra.mxu0 0
        %2291 = vmatprep.subr.bf16.mxu0 0
        %2292 = vmatpush1.bf16.msra.mxu0 0
        %2293 = vmatprep.subr.bf16.mxu0 0
        %2294 = vmatpush1.bf16.msra.mxu0 0
        %2295 = vmatprep.subr.bf16.mxu0 0
        %2296 = vmatpush1.bf16.msra.mxu0 0
        %2297 = vmatprep.mubr.bf16.mxu0 0
        %2298 = vmatmul.mubr.bf16.gmra.mrb[0].mxu0 %v2184
        %v2299 = vpop.f32.mrb[0].mxu0
        %v2300 = vadd.f32 0.0, %v2299
        %v2301 = vpop.f32.mrb[0].mxu0
        %v2302 = vpop.f32.mrb[0].mxu0
        %v2303 = vadd.f32 0.0, %v2302
        %v2304 = vpop.f32.mrb[0].mxu0
        %2305 = vmatprep.mubr.bf16.mxu0 0
        %2306 = vmatmul.mubr.bf16.gmra.mrb[0].mxu0 %v2185
        %v2307 = vpop.f32.mrb[0].mxu0
        %v2308 = vadd.f32 0.0, %v2307
        %v2309 = vpop.f32.mrb[0].mxu0
        %v2310 = vpop.f32.mrb[0].mxu0
        %v2311 = vadd.f32 0.0, %v2310
        %v2312 = vpop.f32.mrb[0].mxu0
        %2313 = vmatprep.mubr.bf16.mxu0 0
        %2314 = vmatmul.mubr.bf16.gmra.mrb[0].mxu0 %v2186
        %v2315 = vpop.f32.mrb[0].mxu0
        %v2316 = vadd.f32 0.0, %v2315
        %v2317 = vpop.f32.mrb[0].mxu0
        %v2318 = vpop.f32.mrb[0].mxu0
        %v2319 = vadd.f32 0.0, %v2318
        %v2320 = vpop.f32.mrb[0].mxu0
        %2321 = vmatprep.mubr.bf16.mxu0 0
        %2322 = vmatmul.mubr.bf16.gmra.mrb[0].mxu0 %v2187
        %v2323 = vpop.f32.mrb[0].mxu0
        %v2324 = vadd.f32 0.0, %v2323
        %v2325 = vpop.f32.mrb[0].mxu0
        %v2326 = vpop.f32.mrb[0].mxu0
        %v2327 = vadd.f32 0.0, %v2326
        %v2328 = vpop.f32.mrb[0].mxu0
        %2329 = vmatprep.mubr.bf16.mxu0 0
        %2330 = vmatmul.mubr.bf16.gmra.mrb[0].mxu0 %v2188
        %v2331 = vpop.f32.mrb[0].mxu0
        %v2332 = vadd.f32 0.0, %v2331
        %v2333 = vpop.f32.mrb[0].mxu0
        %v2334 = vpop.f32.mrb[0].mxu0
        %v2335 = vadd.f32 0.0, %v2334
        %v2336 = vpop.f32.mrb[0].mxu0
        %2337 = vmatprep.mubr.bf16.mxu0 0
        %2338 = vmatmul.mubr.bf16.gmra.mrb[0].mxu0 %v2189
        %v2339 = vpop.f32.mrb[0].mxu0
        %v2340 = vadd.f32 0.0, %v2339
        %v2341 = vpop.f32.mrb[0].mxu0
        %v2342 = vpop.f32.mrb[0].mxu0
        %v2343 = vadd.f32 0.0, %v2342
        %v2344 = vpop.f32.mrb[0].mxu0
        %2345 = vmatprep.mubr.bf16.mxu0 0
        %2346 = vmatmul.mubr.bf16.gmra.mrb[0].mxu0 %v2190
        %v2347 = vpop.f32.mrb[0].mxu0
        %v2348 = vadd.f32 0.0, %v2347
        %v2349 = vpop.f32.mrb[0].mxu0
        %v2350 = vpop.f32.mrb[0].mxu0
        %v2351 = vadd.f32 0.0, %v2350
        %v2352 = vpop.f32.mrb[0].mxu0
        %2353 = vmatprep.mubr.bf16.mxu0 0
        %2354 = vmatmul.mubr.bf16.gmra.mrb[0].mxu0 %v2191
        %v2355 = vpop.f32.mrb[0].mxu0
        %v2356 = vadd.f32 0.0, %v2355
        %v2357 = vpop.f32.mrb[0].mxu0
        %v2358 = vpop.f32.mrb[0].mxu0
        %v2359 = vadd.f32 0.0, %v2358
        %v2360 = vpop.f32.mrb[0].mxu0
        %2361 = vmatprep.mubr.bf16.mxu0 0
        %2362 = vmatmul.mubr.bf16.gmra.mrb[0].mxu0 %v2192
        %v2363 = vpop.f32.mrb[0].mxu0
        %v2364 = vadd.f32 0.0, %v2363
        %v2365 = vpop.f32.mrb[0].mxu0
        %v2366 = vpop.f32.mrb[0].mxu0
        %v2367 = vadd.f32 0.0, %v2366
        %v2368 = vpop.f32.mrb[0].mxu0
        %2369 = vmatprep.mubr.bf16.mxu0 0
        %2370 = vmatmul.mubr.bf16.gmra.mrb[0].mxu0 %v2193
        %v2371 = vpop.f32.mrb[0].mxu0
        %v2372 = vadd.f32 0.0, %v2371
        %v2373 = vpop.f32.mrb[0].mxu0
        %v2374 = vpop.f32.mrb[0].mxu0
        %v2375 = vadd.f32 0.0, %v2374
        %v2376 = vpop.f32.mrb[0].mxu0
        %2377 = vmatprep.mubr.bf16.mxu0 0
        %2378 = vmatmul.mubr.bf16.gmra.mrb[0].mxu0 %v2194
        %v2379 = vpop.f32.mrb[0].mxu0
        %v2380 = vadd.f32 0.0, %v2379
        %v2381 = vpop.f32.mrb[0].mxu0
        %v2382 = vpop.f32.mrb[0].mxu0
        %v2383 = vadd.f32 0.0, %v2382
        %v2384 = vpop.f32.mrb[0].mxu0
        %2385 = vmatprep.mubr.bf16.mxu0 0
        %2386 = vmatmul.mubr.bf16.gmra.mrb[0].mxu0 %v2195
        %v2387 = vpop.f32.mrb[0].mxu0
        %v2388 = vadd.f32 0.0, %v2387
        %v2389 = vpop.f32.mrb[0].mxu0
        %v2390 = vpop.f32.mrb[0].mxu0
        %v2391 = vadd.f32 0.0, %v2390
        %v2392 = vpop.f32.mrb[0].mxu0
        %2393 = vmatprep.mubr.bf16.mxu0 0
        %2394 = vmatmul.mubr.bf16.gmra.mrb[0].mxu0 %v2196
        %v2395 = vpop.f32.mrb[0].mxu0
        %v2396 = vadd.f32 0.0, %v2395
        %v2397 = vpop.f32.mrb[0].mxu0
        %v2398 = vpop.f32.mrb[0].mxu0
        %v2399 = vadd.f32 0.0, %v2398
        %v2400 = vpop.f32.mrb[0].mxu0
        %2401 = vmatprep.mubr.bf16.mxu0 0
        %2402 = vmatmul.mubr.bf16.gmra.mrb[0].mxu0 %v2197
        %v2403 = vpop.f32.mrb[0].mxu0
        %v2404 = vadd.f32 0.0, %v2403
        %v2405 = vpop.f32.mrb[0].mxu0
        %v2406 = vpop.f32.mrb[0].mxu0
        %v2407 = vadd.f32 0.0, %v2406
        %v2408 = vpop.f32.mrb[0].mxu0
        %2409 = vmatprep.mubr.bf16.mxu0 0
        %2410 = vmatmul.mubr.bf16.gmra.mrb[0].mxu0 %v2198
        %v2411 = vpop.f32.mrb[0].mxu0
        %v2412 = vadd.f32 0.0, %v2411
        %v2413 = vpop.f32.mrb[0].mxu0
        %v2414 = vpop.f32.mrb[0].mxu0
        %v2415 = vadd.f32 0.0, %v2414
        %v2416 = vpop.f32.mrb[0].mxu0
        %2417 = vmatprep.mubr.bf16.mxu0 0
        %2418 = vmatmul.mubr.bf16.gmra.mrb[0].mxu0 %v2199
        %v2419 = vpop.f32.mrb[0].mxu0
        %v2420 = vadd.f32 0.0, %v2419
        %v2421 = vpop.f32.mrb[0].mxu0
        %v2422 = vpop.f32.mrb[0].mxu0
        %v2423 = vadd.f32 0.0, %v2422
        %v2424 = vpop.f32.mrb[0].mxu0
        %2425 = vdwg.mxu0
        %v2426 = vld [vmem:[#allocation3] sm:$0xff]
        %v2427 = vld [vmem:[#allocation3 + $0x8] sm:$0xff]
        %v2428 = vld [vmem:[#allocation3 + $0x10] sm:$0xff]
        %v2429 = vld [vmem:[#allocation3 + $0x18] sm:$0xff]
        %v2430 = vld [vmem:[#allocation3 + $0x20] sm:$0xff]
        %v2431 = vld [vmem:[#allocation3 + $0x28] sm:$0xff]
        %v2432 = vld [vmem:[#allocation3 + $0x30] sm:$0xff]
        %v2433 = vld [vmem:[#allocation3 + $0x38] sm:$0xff]
        %v2434 = vld [vmem:[#allocation3 + $0x40] sm:$0xff]
        %v2435 = vld [vmem:[#allocation3 + $0x48] sm:$0xff]
        %v2436 = vld [vmem:[#allocation3 + $0x50] sm:$0xff]
        %v2437 = vld [vmem:[#allocation3 + $0x58] sm:$0xff]
        %v2438 = vld [vmem:[#allocation3 + $0x60] sm:$0xff]
        %v2439 = vld [vmem:[#allocation3 + $0x68] sm:$0xff]
        %v2440 = vld [vmem:[#allocation3 + $0x70] sm:$0xff]
        %v2441 = vld [vmem:[#allocation3 + $0x78] sm:$0xff]
        %v2442 = vld [vmem:[#allocation3 + $0x80] sm:$0xff]
        %v2443 = vld [vmem:[#allocation3 + $0x88] sm:$0xff]
        %v2444 = vld [vmem:[#allocation3 + $0x90] sm:$0xff]
        %v2445 = vld [vmem:[#allocation3 + $0x98] sm:$0xff]
        %v2446 = vld [vmem:[#allocation3 + $0xa0] sm:$0xff]
        %v2447 = vld [vmem:[#allocation3 + $0xa8] sm:$0xff]
        %v2448 = vld [vmem:[#allocation3 + $0xb0] sm:$0xff]
        %v2449 = vld [vmem:[#allocation3 + $0xb8] sm:$0xff]
        %v2450 = vld [vmem:[#allocation3 + $0xc0] sm:$0xff]
        %v2451 = vld [vmem:[#allocation3 + $0xc8] sm:$0xff]
        %v2452 = vld [vmem:[#allocation3 + $0xd0] sm:$0xff]
        %v2453 = vld [vmem:[#allocation3 + $0xd8] sm:$0xff]
        %v2454 = vld [vmem:[#allocation3 + $0xe0] sm:$0xff]
        %v2455 = vld [vmem:[#allocation3 + $0xe8] sm:$0xff]
        %v2456 = vld [vmem:[#allocation3 + $0xf0] sm:$0xff]
        %v2457 = vld [vmem:[#allocation3 + $0xf8] sm:$0xff]
        %v2458 = vadd.f32 %v2426, %v2300
        %v2459 = vadd.f32 %v2427, %v2303
        %v2460 = vadd.f32 %v2428, %v2308
        %v2461 = vadd.f32 %v2429, %v2311
        %v2462 = vadd.f32 %v2430, %v2316
        %v2463 = vadd.f32 %v2431, %v2319
        %v2464 = vadd.f32 %v2432, %v2324
        %v2465 = vadd.f32 %v2433, %v2327
        %v2466 = vadd.f32 %v2434, %v2332
        %v2467 = vadd.f32 %v2435, %v2335
        %v2468 = vadd.f32 %v2436, %v2340
        %v2469 = vadd.f32 %v2437, %v2343
        %v2470 = vadd.f32 %v2438, %v2348
        %v2471 = vadd.f32 %v2439, %v2351
        %v2472 = vadd.f32 %v2440, %v2356
        %v2473 = vadd.f32 %v2441, %v2359
        %v2474 = vadd.f32 %v2442, %v2364
        %v2475 = vadd.f32 %v2443, %v2367
        %v2476 = vadd.f32 %v2444, %v2372
        %v2477 = vadd.f32 %v2445, %v2375
        %v2478 = vadd.f32 %v2446, %v2380
        %v2479 = vadd.f32 %v2447, %v2383
        %v2480 = vadd.f32 %v2448, %v2388
        %v2481 = vadd.f32 %v2449, %v2391
        %v2482 = vadd.f32 %v2450, %v2396
        %v2483 = vadd.f32 %v2451, %v2399
        %v2484 = vadd.f32 %v2452, %v2404
        %v2485 = vadd.f32 %v2453, %v2407
        %v2486 = vadd.f32 %v2454, %v2412
        %v2487 = vadd.f32 %v2455, %v2415
        %v2488 = vadd.f32 %v2456, %v2420
        %v2489 = vadd.f32 %v2457, %v2423
        %2490 = vst [vmem:[#allocation3] sm:$0xff] %v2458
        %2491 = vst [vmem:[#allocation3 + $0x8] sm:$0xff] %v2459
        %2492 = vst [vmem:[#allocation3 + $0x10] sm:$0xff] %v2460
        %2493 = vst [vmem:[#allocation3 + $0x18] sm:$0xff] %v2461
        %2494 = vst [vmem:[#allocation3 + $0x20] sm:$0xff] %v2462
        %2495 = vst [vmem:[#allocation3 + $0x28] sm:$0xff] %v2463
        %2496 = vst [vmem:[#allocation3 + $0x30] sm:$0xff] %v2464
        %2497 = vst [vmem:[#allocation3 + $0x38] sm:$0xff] %v2465
        %2498 = vst [vmem:[#allocation3 + $0x40] sm:$0xff] %v2466
        %2499 = vst [vmem:[#allocation3 + $0x48] sm:$0xff] %v2467
        %2500 = vst [vmem:[#allocation3 + $0x50] sm:$0xff] %v2468
        %2501 = vst [vmem:[#allocation3 + $0x58] sm:$0xff] %v2469
        %2502 = vst [vmem:[#allocation3 + $0x60] sm:$0xff] %v2470
        %2503 = vst [vmem:[#allocation3 + $0x68] sm:$0xff] %v2471
        %2504 = vst [vmem:[#allocation3 + $0x70] sm:$0xff] %v2472
        %2505 = vst [vmem:[#allocation3 + $0x78] sm:$0xff] %v2473
        %2506 = vst [vmem:[#allocation3 + $0x80] sm:$0xff] %v2474
        %2507 = vst [vmem:[#allocation3 + $0x88] sm:$0xff] %v2475
        %2508 = vst [vmem:[#allocation3 + $0x90] sm:$0xff] %v2476
        %2509 = vst [vmem:[#allocation3 + $0x98] sm:$0xff] %v2477
        %2510 = vst [vmem:[#allocation3 + $0xa0] sm:$0xff] %v2478
        %2511 = vst [vmem:[#allocation3 + $0xa8] sm:$0xff] %v2479
        %2512 = vst [vmem:[#allocation3 + $0xb0] sm:$0xff] %v2480
        %2513 = vst [vmem:[#allocation3 + $0xb8] sm:$0xff] %v2481
        %2514 = vst [vmem:[#allocation3 + $0xc0] sm:$0xff] %v2482
        %2515 = vst [vmem:[#allocation3 + $0xc8] sm:$0xff] %v2483
        %2516 = vst [vmem:[#allocation3 + $0xd0] sm:$0xff] %v2484
        %2517 = vst [vmem:[#allocation3 + $0xd8] sm:$0xff] %v2485
        %2518 = vst [vmem:[#allocation3 + $0xe0] sm:$0xff] %v2486
        %2519 = vst [vmem:[#allocation3 + $0xe8] sm:$0xff] %v2487
        %2520 = vst [vmem:[#allocation3 + $0xf0] sm:$0xff] %v2488
        %2521 = vst [vmem:[#allocation3 + $0xf8] sm:$0xff] %v2489
        %v2522 = vld [vmem:[%s672 + $0x2] sm:$0xff]
        %v2523 = vld [vmem:[%s672 + $0xa] sm:$0xff]
        %v2524 = vld [vmem:[%s672 + $0x1a] sm:$0xff]
        %v2525 = vld [vmem:[%s672 + $0x22] sm:$0xff]
        %v2526 = vld [vmem:[%s672 + $0x32] sm:$0xff]
        %v2527 = vld [vmem:[%s672 + $0x3a] sm:$0xff]
        %v2528 = vld [vmem:[%s672 + $0x4a] sm:$0xff]
        %v2529 = vld [vmem:[%s672 + $0x52] sm:$0xff]
        %v2530 = vld [vmem:[%s672 + $0x62] sm:$0xff]
        %v2531 = vld [vmem:[%s672 + $0x6a] sm:$0xff]
        %v2532 = vld [vmem:[%s672 + $0x7a] sm:$0xff]
        %v2533 = vld [vmem:[%s672 + $0x82] sm:$0xff]
        %v2534 = vld [vmem:[%s672 + $0x92] sm:$0xff]
        %v2535 = vld [vmem:[%s672 + $0x9a] sm:$0xff]
        %v2536 = vld [vmem:[%s672 + $0xaa] sm:$0xff]
        %v2537 = vld [vmem:[%s672 + $0xb2] sm:$0xff]
        %v2538 = vld [vmem:[%s672 + $0xc2] sm:$0xff]
        %v2539 = vld [vmem:[%s672 + $0xca] sm:$0xff]
        %v2540 = vld [vmem:[%s672 + $0xda] sm:$0xff]
        %v2541 = vld [vmem:[%s672 + $0xe2] sm:$0xff]
        %v2542 = vld [vmem:[%s672 + $0xf2] sm:$0xff]
        %v2543 = vld [vmem:[%s672 + $0xfa] sm:$0xff]
        %v2544 = vld [vmem:[%s672 + $0x10a] sm:$0xff]
        %v2545 = vld [vmem:[%s672 + $0x112] sm:$0xff]
        %v2546 = vld [vmem:[%s672 + $0x122] sm:$0xff]
        %v2547 = vld [vmem:[%s672 + $0x12a] sm:$0xff]
        %v2548 = vld [vmem:[%s672 + $0x13a] sm:$0xff]
        %v2549 = vld [vmem:[%s672 + $0x142] sm:$0xff]
        %v2550 = vld [vmem:[%s672 + $0x152] sm:$0xff]
        %v2551 = vld [vmem:[%s672 + $0x15a] sm:$0xff]
        %v2552 = vld [vmem:[%s672 + $0x16a] sm:$0xff]
        %v2553 = vld [vmem:[%s672 + $0x172] sm:$0xff]
        %v2554 = vpack.c.bf16 %v2523, %v2522
        %v2555 = vpack.c.bf16 %v2525, %v2524
        %v2556 = vpack.c.bf16 %v2527, %v2526
        %v2557 = vpack.c.bf16 %v2529, %v2528
        %v2558 = vpack.c.bf16 %v2531, %v2530
        %v2559 = vpack.c.bf16 %v2533, %v2532
        %v2560 = vpack.c.bf16 %v2535, %v2534
        %v2561 = vpack.c.bf16 %v2537, %v2536
        %v2562 = vpack.c.bf16 %v2539, %v2538
        %v2563 = vpack.c.bf16 %v2541, %v2540
        %v2564 = vpack.c.bf16 %v2543, %v2542
        %v2565 = vpack.c.bf16 %v2545, %v2544
        %v2566 = vpack.c.bf16 %v2547, %v2546
        %v2567 = vpack.c.bf16 %v2549, %v2548
        %v2568 = vpack.c.bf16 %v2551, %v2550
        %v2569 = vpack.c.bf16 %v2553, %v2552
        %s2570 = scalar_lea.vmem [#allocation9], 320
        %v2571 = vld [vmem:[%s2570] sm:$0xf]
        %v2572 = vld [vmem:[%s2570 + $0x4] sm:$0xf]
        %v2573 = vld [vmem:[%s2570 + $0x8] sm:$0xf]
        %v2574 = vld [vmem:[%s2570 + $0xc] sm:$0xf]
        %v2575 = vld [vmem:[%s2570 + $0x10] sm:$0xf]
        %v2576 = vld [vmem:[%s2570 + $0x14] sm:$0xf]
        %v2577 = vld [vmem:[%s2570 + $0x18] sm:$0xf]
        %v2578 = vld [vmem:[%s2570 + $0x1c] sm:$0xf]
        %v2579 = vld [vmem:[%s2570 + $0x20] sm:$0xf]
        %v2580 = vld [vmem:[%s2570 + $0x24] sm:$0xf]
        %v2581 = vld [vmem:[%s2570 + $0x28] sm:$0xf]
        %v2582 = vld [vmem:[%s2570 + $0x2c] sm:$0xf]
        %v2583 = vld [vmem:[%s2570 + $0x30] sm:$0xf]
        %v2584 = vld [vmem:[%s2570 + $0x34] sm:$0xf]
        %v2585 = vld [vmem:[%s2570 + $0x38] sm:$0xf]
        %v2586 = vld [vmem:[%s2570 + $0x3c] sm:$0xf]
        %v2603 = vunpack.c.l.b16 %v2571
        %v2604 = vunpack.c.l.b16 %v2572
        %v2605 = vunpack.c.l.b16 %v2573
        %v2606 = vunpack.c.l.b16 %v2574
        %v2607 = vunpack.c.l.b16 %v2575
        %v2608 = vunpack.c.l.b16 %v2576
        %v2609 = vunpack.c.l.b16 %v2577
        %v2610 = vunpack.c.l.b16 %v2578
        %v2611 = vunpack.c.l.b16 %v2579
        %v2612 = vunpack.c.l.b16 %v2580
        %v2613 = vunpack.c.l.b16 %v2581
        %v2614 = vunpack.c.l.b16 %v2582
        %v2615 = vunpack.c.l.b16 %v2583
        %v2616 = vunpack.c.l.b16 %v2584
        %v2617 = vunpack.c.l.b16 %v2585
        %v2618 = vunpack.c.l.b16 %v2586
        %v2619 = vpack.c.b16 %v2604, %v2603
        %v2620 = vpack.c.b16 %v2606, %v2605
        %v2621 = vpack.c.b16 %v2608, %v2607
        %v2622 = vpack.c.b16 %v2610, %v2609
        %v2623 = vpack.c.b16 %v2612, %v2611
        %v2624 = vpack.c.b16 %v2614, %v2613
        %v2625 = vpack.c.b16 %v2616, %v2615
        %v2626 = vpack.c.b16 %v2618, %v2617
        %2635 = vmatprep.subr.bf16.mxu0 0
        %2636 = vmatpush1.bf16.msra.mxu0 %v2619
        %2637 = vmatprep.subr.bf16.mxu0 0
        %2638 = vmatpush1.bf16.msra.mxu0 %v2620
        %2639 = vmatprep.subr.bf16.mxu0 0
        %2640 = vmatpush1.bf16.msra.mxu0 %v2621
        %2641 = vmatprep.subr.bf16.mxu0 0
        %2642 = vmatpush1.bf16.msra.mxu0 %v2622
        %2643 = vmatprep.subr.bf16.mxu0 0
        %2644 = vmatpush1.bf16.msra.mxu0 %v2623
        %2645 = vmatprep.subr.bf16.mxu0 0
        %2646 = vmatpush1.bf16.msra.mxu0 %v2624
        %2647 = vmatprep.subr.bf16.mxu0 0
        %2648 = vmatpush1.bf16.msra.mxu0 %v2625
        %2649 = vmatprep.subr.bf16.mxu0 0
        %2650 = vmatpush1.bf16.msra.mxu0 %v2626
        %2651 = vmatprep.subr.bf16.mxu0 0
        %2652 = vmatpush1.bf16.msra.mxu0 0
        %2653 = vmatprep.subr.bf16.mxu0 0
        %2654 = vmatpush1.bf16.msra.mxu0 0
        %2655 = vmatprep.subr.bf16.mxu0 0
        %2656 = vmatpush1.bf16.msra.mxu0 0
        %2657 = vmatprep.subr.bf16.mxu0 0
        %2658 = vmatpush1.bf16.msra.mxu0 0
        %2659 = vmatprep.subr.bf16.mxu0 0
        %2660 = vmatpush1.bf16.msra.mxu0 0
        %2661 = vmatprep.subr.bf16.mxu0 0
        %2662 = vmatpush1.bf16.msra.mxu0 0
        %2663 = vmatprep.subr.bf16.mxu0 0
        %2664 = vmatpush1.bf16.msra.mxu0 0
        %2665 = vmatprep.subr.bf16.mxu0 0
        %2666 = vmatpush1.bf16.msra.mxu0 0
        %2667 = vmatprep.mubr.bf16.mxu0 0
        %2668 = vmatmul.mubr.bf16.gmra.mrb[0].mxu0 %v2554
        %v2669 = vpop.f32.mrb[0].mxu0
        %v2670 = vadd.f32 0.0, %v2669
        %v2671 = vpop.f32.mrb[0].mxu0
        %v2672 = vpop.f32.mrb[0].mxu0
        %v2673 = vadd.f32 0.0, %v2672
        %v2674 = vpop.f32.mrb[0].mxu0
        %2675 = vmatprep.mubr.bf16.mxu0 0
        %2676 = vmatmul.mubr.bf16.gmra.mrb[0].mxu0 %v2555
        %v2677 = vpop.f32.mrb[0].mxu0
        %v2678 = vadd.f32 0.0, %v2677
        %v2679 = vpop.f32.mrb[0].mxu0
        %v2680 = vpop.f32.mrb[0].mxu0
        %v2681 = vadd.f32 0.0, %v2680
        %v2682 = vpop.f32.mrb[0].mxu0
        %2683 = vmatprep.mubr.bf16.mxu0 0
        %2684 = vmatmul.mubr.bf16.gmra.mrb[0].mxu0 %v2556
        %v2685 = vpop.f32.mrb[0].mxu0
        %v2686 = vadd.f32 0.0, %v2685
        %v2687 = vpop.f32.mrb[0].mxu0
        %v2688 = vpop.f32.mrb[0].mxu0
        %v2689 = vadd.f32 0.0, %v2688
        %v2690 = vpop.f32.mrb[0].mxu0
        %2691 = vmatprep.mubr.bf16.mxu0 0
        %2692 = vmatmul.mubr.bf16.gmra.mrb[0].mxu0 %v2557
        %v2693 = vpop.f32.mrb[0].mxu0
        %v2694 = vadd.f32 0.0, %v2693
        %v2695 = vpop.f32.mrb[0].mxu0
        %v2696 = vpop.f32.mrb[0].mxu0
        %v2697 = vadd.f32 0.0, %v2696
        %v2698 = vpop.f32.mrb[0].mxu0
        %2699 = vmatprep.mubr.bf16.mxu0 0
        %2700 = vmatmul.mubr.bf16.gmra.mrb[0].mxu0 %v2558
        %v2701 = vpop.f32.mrb[0].mxu0
        %v2702 = vadd.f32 0.0, %v2701
        %v2703 = vpop.f32.mrb[0].mxu0
        %v2704 = vpop.f32.mrb[0].mxu0
        %v2705 = vadd.f32 0.0, %v2704
        %v2706 = vpop.f32.mrb[0].mxu0
        %2707 = vmatprep.mubr.bf16.mxu0 0
        %2708 = vmatmul.mubr.bf16.gmra.mrb[0].mxu0 %v2559
        %v2709 = vpop.f32.mrb[0].mxu0
        %v2710 = vadd.f32 0.0, %v2709
        %v2711 = vpop.f32.mrb[0].mxu0
        %v2712 = vpop.f32.mrb[0].mxu0
        %v2713 = vadd.f32 0.0, %v2712
        %v2714 = vpop.f32.mrb[0].mxu0
        %2715 = vmatprep.mubr.bf16.mxu0 0
        %2716 = vmatmul.mubr.bf16.gmra.mrb[0].mxu0 %v2560
        %v2717 = vpop.f32.mrb[0].mxu0
        %v2718 = vadd.f32 0.0, %v2717
        %v2719 = vpop.f32.mrb[0].mxu0
        %v2720 = vpop.f32.mrb[0].mxu0
        %v2721 = vadd.f32 0.0, %v2720
        %v2722 = vpop.f32.mrb[0].mxu0
        %2723 = vmatprep.mubr.bf16.mxu0 0
        %2724 = vmatmul.mubr.bf16.gmra.mrb[0].mxu0 %v2561
        %v2725 = vpop.f32.mrb[0].mxu0
        %v2726 = vadd.f32 0.0, %v2725
        %v2727 = vpop.f32.mrb[0].mxu0
        %v2728 = vpop.f32.mrb[0].mxu0
        %v2729 = vadd.f32 0.0, %v2728
        %v2730 = vpop.f32.mrb[0].mxu0
        %2731 = vmatprep.mubr.bf16.mxu0 0
        %2732 = vmatmul.mubr.bf16.gmra.mrb[0].mxu0 %v2562
        %v2733 = vpop.f32.mrb[0].mxu0
        %v2734 = vadd.f32 0.0, %v2733
        %v2735 = vpop.f32.mrb[0].mxu0
        %v2736 = vpop.f32.mrb[0].mxu0
        %v2737 = vadd.f32 0.0, %v2736
        %v2738 = vpop.f32.mrb[0].mxu0
        %2739 = vmatprep.mubr.bf16.mxu0 0
        %2740 = vmatmul.mubr.bf16.gmra.mrb[0].mxu0 %v2563
        %v2741 = vpop.f32.mrb[0].mxu0
        %v2742 = vadd.f32 0.0, %v2741
        %v2743 = vpop.f32.mrb[0].mxu0
        %v2744 = vpop.f32.mrb[0].mxu0
        %v2745 = vadd.f32 0.0, %v2744
        %v2746 = vpop.f32.mrb[0].mxu0
        %2747 = vmatprep.mubr.bf16.mxu0 0
        %2748 = vmatmul.mubr.bf16.gmra.mrb[0].mxu0 %v2564
        %v2749 = vpop.f32.mrb[0].mxu0
        %v2750 = vadd.f32 0.0, %v2749
        %v2751 = vpop.f32.mrb[0].mxu0
        %v2752 = vpop.f32.mrb[0].mxu0
        %v2753 = vadd.f32 0.0, %v2752
        %v2754 = vpop.f32.mrb[0].mxu0
        %2755 = vmatprep.mubr.bf16.mxu0 0
        %2756 = vmatmul.mubr.bf16.gmra.mrb[0].mxu0 %v2565
        %v2757 = vpop.f32.mrb[0].mxu0
        %v2758 = vadd.f32 0.0, %v2757
        %v2759 = vpop.f32.mrb[0].mxu0
        %v2760 = vpop.f32.mrb[0].mxu0
        %v2761 = vadd.f32 0.0, %v2760
        %v2762 = vpop.f32.mrb[0].mxu0
        %2763 = vmatprep.mubr.bf16.mxu0 0
        %2764 = vmatmul.mubr.bf16.gmra.mrb[0].mxu0 %v2566
        %v2765 = vpop.f32.mrb[0].mxu0
        %v2766 = vadd.f32 0.0, %v2765
        %v2767 = vpop.f32.mrb[0].mxu0
        %v2768 = vpop.f32.mrb[0].mxu0
        %v2769 = vadd.f32 0.0, %v2768
        %v2770 = vpop.f32.mrb[0].mxu0
        %2771 = vmatprep.mubr.bf16.mxu0 0
        %2772 = vmatmul.mubr.bf16.gmra.mrb[0].mxu0 %v2567
        %v2773 = vpop.f32.mrb[0].mxu0
        %v2774 = vadd.f32 0.0, %v2773
        %v2775 = vpop.f32.mrb[0].mxu0
        %v2776 = vpop.f32.mrb[0].mxu0
        %v2777 = vadd.f32 0.0, %v2776
        %v2778 = vpop.f32.mrb[0].mxu0
        %2779 = vmatprep.mubr.bf16.mxu0 0
        %2780 = vmatmul.mubr.bf16.gmra.mrb[0].mxu0 %v2568
        %v2781 = vpop.f32.mrb[0].mxu0
        %v2782 = vadd.f32 0.0, %v2781
        %v2783 = vpop.f32.mrb[0].mxu0
        %v2784 = vpop.f32.mrb[0].mxu0
        %v2785 = vadd.f32 0.0, %v2784
        %v2786 = vpop.f32.mrb[0].mxu0
        %2787 = vmatprep.mubr.bf16.mxu0 0
        %2788 = vmatmul.mubr.bf16.gmra.mrb[0].mxu0 %v2569
        %v2789 = vpop.f32.mrb[0].mxu0
        %v2790 = vadd.f32 0.0, %v2789
        %v2791 = vpop.f32.mrb[0].mxu0
        %v2792 = vpop.f32.mrb[0].mxu0
        %v2793 = vadd.f32 0.0, %v2792
        %v2794 = vpop.f32.mrb[0].mxu0
        %2795 = vdwg.mxu0
        %v2796 = vld [vmem:[#allocation3] sm:$0xff]
        %v2797 = vld [vmem:[#allocation3 + $0x8] sm:$0xff]
        %v2798 = vld [vmem:[#allocation3 + $0x10] sm:$0xff]
        %v2799 = vld [vmem:[#allocation3 + $0x18] sm:$0xff]
        %v2800 = vld [vmem:[#allocation3 + $0x20] sm:$0xff]
        %v2801 = vld [vmem:[#allocation3 + $0x28] sm:$0xff]
        %v2802 = vld [vmem:[#allocation3 + $0x30] sm:$0xff]
        %v2803 = vld [vmem:[#allocation3 + $0x38] sm:$0xff]
        %v2804 = vld [vmem:[#allocation3 + $0x40] sm:$0xff]
        %v2805 = vld [vmem:[#allocation3 + $0x48] sm:$0xff]
        %v2806 = vld [vmem:[#allocation3 + $0x50] sm:$0xff]
        %v2807 = vld [vmem:[#allocation3 + $0x58] sm:$0xff]
        %v2808 = vld [vmem:[#allocation3 + $0x60] sm:$0xff]
        %v2809 = vld [vmem:[#allocation3 + $0x68] sm:$0xff]
        %v2810 = vld [vmem:[#allocation3 + $0x70] sm:$0xff]
        %v2811 = vld [vmem:[#allocation3 + $0x78] sm:$0xff]
        %v2812 = vld [vmem:[#allocation3 + $0x80] sm:$0xff]
        %v2813 = vld [vmem:[#allocation3 + $0x88] sm:$0xff]
        %v2814 = vld [vmem:[#allocation3 + $0x90] sm:$0xff]
        %v2815 = vld [vmem:[#allocation3 + $0x98] sm:$0xff]
        %v2816 = vld [vmem:[#allocation3 + $0xa0] sm:$0xff]
        %v2817 = vld [vmem:[#allocation3 + $0xa8] sm:$0xff]
        %v2818 = vld [vmem:[#allocation3 + $0xb0] sm:$0xff]
        %v2819 = vld [vmem:[#allocation3 + $0xb8] sm:$0xff]
        %v2820 = vld [vmem:[#allocation3 + $0xc0] sm:$0xff]
        %v2821 = vld [vmem:[#allocation3 + $0xc8] sm:$0xff]
        %v2822 = vld [vmem:[#allocation3 + $0xd0] sm:$0xff]
        %v2823 = vld [vmem:[#allocation3 + $0xd8] sm:$0xff]
        %v2824 = vld [vmem:[#allocation3 + $0xe0] sm:$0xff]
        %v2825 = vld [vmem:[#allocation3 + $0xe8] sm:$0xff]
        %v2826 = vld [vmem:[#allocation3 + $0xf0] sm:$0xff]
        %v2827 = vld [vmem:[#allocation3 + $0xf8] sm:$0xff]
        %v2828 = vadd.f32 %v2796, %v2670
        %v2829 = vadd.f32 %v2797, %v2673
        %v2830 = vadd.f32 %v2798, %v2678
        %v2831 = vadd.f32 %v2799, %v2681
        %v2832 = vadd.f32 %v2800, %v2686
        %v2833 = vadd.f32 %v2801, %v2689
        %v2834 = vadd.f32 %v2802, %v2694
        %v2835 = vadd.f32 %v2803, %v2697
        %v2836 = vadd.f32 %v2804, %v2702
        %v2837 = vadd.f32 %v2805, %v2705
        %v2838 = vadd.f32 %v2806, %v2710
        %v2839 = vadd.f32 %v2807, %v2713
        %v2840 = vadd.f32 %v2808, %v2718
        %v2841 = vadd.f32 %v2809, %v2721
        %v2842 = vadd.f32 %v2810, %v2726
        %v2843 = vadd.f32 %v2811, %v2729
        %v2844 = vadd.f32 %v2812, %v2734
        %v2845 = vadd.f32 %v2813, %v2737
        %v2846 = vadd.f32 %v2814, %v2742
        %v2847 = vadd.f32 %v2815, %v2745
        %v2848 = vadd.f32 %v2816, %v2750
        %v2849 = vadd.f32 %v2817, %v2753
        %v2850 = vadd.f32 %v2818, %v2758
        %v2851 = vadd.f32 %v2819, %v2761
        %v2852 = vadd.f32 %v2820, %v2766
        %v2853 = vadd.f32 %v2821, %v2769
        %v2854 = vadd.f32 %v2822, %v2774
        %v2855 = vadd.f32 %v2823, %v2777
        %v2856 = vadd.f32 %v2824, %v2782
        %v2857 = vadd.f32 %v2825, %v2785
        %v2858 = vadd.f32 %v2826, %v2790
        %v2859 = vadd.f32 %v2827, %v2793
        %2860 = vst [vmem:[#allocation3] sm:$0xff] %v2828
        %2861 = vst [vmem:[#allocation3 + $0x8] sm:$0xff] %v2829
        %2862 = vst [vmem:[#allocation3 + $0x10] sm:$0xff] %v2830
        %2863 = vst [vmem:[#allocation3 + $0x18] sm:$0xff] %v2831
        %2864 = vst [vmem:[#allocation3 + $0x20] sm:$0xff] %v2832
        %2865 = vst [vmem:[#allocation3 + $0x28] sm:$0xff] %v2833
        %2866 = vst [vmem:[#allocation3 + $0x30] sm:$0xff] %v2834
        %2867 = vst [vmem:[#allocation3 + $0x38] sm:$0xff] %v2835
        %2868 = vst [vmem:[#allocation3 + $0x40] sm:$0xff] %v2836
        %2869 = vst [vmem:[#allocation3 + $0x48] sm:$0xff] %v2837
        %2870 = vst [vmem:[#allocation3 + $0x50] sm:$0xff] %v2838
        %2871 = vst [vmem:[#allocation3 + $0x58] sm:$0xff] %v2839
        %2872 = vst [vmem:[#allocation3 + $0x60] sm:$0xff] %v2840
        %2873 = vst [vmem:[#allocation3 + $0x68] sm:$0xff] %v2841
        %2874 = vst [vmem:[#allocation3 + $0x70] sm:$0xff] %v2842
        %2875 = vst [vmem:[#allocation3 + $0x78] sm:$0xff] %v2843
        %2876 = vst [vmem:[#allocation3 + $0x80] sm:$0xff] %v2844
        %2877 = vst [vmem:[#allocation3 + $0x88] sm:$0xff] %v2845
        %2878 = vst [vmem:[#allocation3 + $0x90] sm:$0xff] %v2846
        %2879 = vst [vmem:[#allocation3 + $0x98] sm:$0xff] %v2847
        %2880 = vst [vmem:[#allocation3 + $0xa0] sm:$0xff] %v2848
        %2881 = vst [vmem:[#allocation3 + $0xa8] sm:$0xff] %v2849
        %2882 = vst [vmem:[#allocation3 + $0xb0] sm:$0xff] %v2850
        %2883 = vst [vmem:[#allocation3 + $0xb8] sm:$0xff] %v2851
        %2884 = vst [vmem:[#allocation3 + $0xc0] sm:$0xff] %v2852
        %2885 = vst [vmem:[#allocation3 + $0xc8] sm:$0xff] %v2853
        %2886 = vst [vmem:[#allocation3 + $0xd0] sm:$0xff] %v2854
        %2887 = vst [vmem:[#allocation3 + $0xd8] sm:$0xff] %v2855
        %2888 = vst [vmem:[#allocation3 + $0xe0] sm:$0xff] %v2856
        %2889 = vst [vmem:[#allocation3 + $0xe8] sm:$0xff] %v2857
        %2890 = vst [vmem:[#allocation3 + $0xf0] sm:$0xff] %v2858
        %2891 = vst [vmem:[#allocation3 + $0xf8] sm:$0xff] %v2859
        %s2892 = scalar_lea.vmem [#allocation2], 48
        %v2893 = vld [vmem:[%s2892] sm:$0xff]
        %v2894 = vld [vmem:[%s2892 + $0x8] sm:$0xff]
        %v2895 = vld [vmem:[%s2892 + $0x18] sm:$0xff]
        %v2896 = vld [vmem:[%s2892 + $0x20] sm:$0xff]
        %v2897 = vld [vmem:[%s2892 + $0x30] sm:$0xff]
        %v2898 = vld [vmem:[%s2892 + $0x38] sm:$0xff]
        %v2899 = vld [vmem:[%s2892 + $0x48] sm:$0xff]
        %v2900 = vld [vmem:[%s2892 + $0x50] sm:$0xff]
        %v2901 = vld [vmem:[%s2892 + $0x60] sm:$0xff]
        %v2902 = vld [vmem:[%s2892 + $0x68] sm:$0xff]
        %v2903 = vld [vmem:[%s2892 + $0x78] sm:$0xff]
        %v2904 = vld [vmem:[%s2892 + $0x80] sm:$0xff]
        %v2905 = vld [vmem:[%s2892 + $0x90] sm:$0xff]
        %v2906 = vld [vmem:[%s2892 + $0x98] sm:$0xff]
        %v2907 = vld [vmem:[%s2892 + $0xa8] sm:$0xff]
        %v2908 = vld [vmem:[%s2892 + $0xb0] sm:$0xff]
        %v2909 = vld [vmem:[%s2892 + $0xc0] sm:$0xff]
        %v2910 = vld [vmem:[%s2892 + $0xc8] sm:$0xff]
        %v2911 = vld [vmem:[%s2892 + $0xd8] sm:$0xff]
        %v2912 = vld [vmem:[%s2892 + $0xe0] sm:$0xff]
        %v2913 = vld [vmem:[%s2892 + $0xf0] sm:$0xff]
        %v2914 = vld [vmem:[%s2892 + $0xf8] sm:$0xff]
        %v2915 = vld [vmem:[%s2892 + $0x108] sm:$0xff]
        %v2916 = vld [vmem:[%s2892 + $0x110] sm:$0xff]
        %v2917 = vld [vmem:[%s2892 + $0x120] sm:$0xff]
        %v2918 = vld [vmem:[%s2892 + $0x128] sm:$0xff]
        %v2919 = vld [vmem:[%s2892 + $0x138] sm:$0xff]
        %v2920 = vld [vmem:[%s2892 + $0x140] sm:$0xff]
        %v2921 = vld [vmem:[%s2892 + $0x150] sm:$0xff]
        %v2922 = vld [vmem:[%s2892 + $0x158] sm:$0xff]
        %v2923 = vld [vmem:[%s2892 + $0x168] sm:$0xff]
        %v2924 = vld [vmem:[%s2892 + $0x170] sm:$0xff]
        %v2925 = vpack.c.bf16 %v2894, %v2893
        %v2926 = vpack.c.bf16 %v2896, %v2895
        %v2927 = vpack.c.bf16 %v2898, %v2897
        %v2928 = vpack.c.bf16 %v2900, %v2899
        %v2929 = vpack.c.bf16 %v2902, %v2901
        %v2930 = vpack.c.bf16 %v2904, %v2903
        %v2931 = vpack.c.bf16 %v2906, %v2905
        %v2932 = vpack.c.bf16 %v2908, %v2907
        %v2933 = vpack.c.bf16 %v2910, %v2909
        %v2934 = vpack.c.bf16 %v2912, %v2911
        %v2935 = vpack.c.bf16 %v2914, %v2913
        %v2936 = vpack.c.bf16 %v2916, %v2915
        %v2937 = vpack.c.bf16 %v2918, %v2917
        %v2938 = vpack.c.bf16 %v2920, %v2919
        %v2939 = vpack.c.bf16 %v2922, %v2921
        %v2940 = vpack.c.bf16 %v2924, %v2923
        %s2941 = scalar_lea.vmem [#allocation9], 384
        %v2942 = vld [vmem:[%s2941] sm:$0xf]
        %v2943 = vld [vmem:[%s2941 + $0x4] sm:$0xf]
        %v2944 = vld [vmem:[%s2941 + $0x8] sm:$0xf]
        %v2945 = vld [vmem:[%s2941 + $0xc] sm:$0xf]
        %v2946 = vld [vmem:[%s2941 + $0x10] sm:$0xf]
        %v2947 = vld [vmem:[%s2941 + $0x14] sm:$0xf]
        %v2948 = vld [vmem:[%s2941 + $0x18] sm:$0xf]
        %v2949 = vld [vmem:[%s2941 + $0x1c] sm:$0xf]
        %v2950 = vld [vmem:[%s2941 + $0x20] sm:$0xf]
        %v2951 = vld [vmem:[%s2941 + $0x24] sm:$0xf]
        %v2952 = vld [vmem:[%s2941 + $0x28] sm:$0xf]
        %v2953 = vld [vmem:[%s2941 + $0x2c] sm:$0xf]
        %v2954 = vld [vmem:[%s2941 + $0x30] sm:$0xf]
        %v2955 = vld [vmem:[%s2941 + $0x34] sm:$0xf]
        %v2956 = vld [vmem:[%s2941 + $0x38] sm:$0xf]
        %v2957 = vld [vmem:[%s2941 + $0x3c] sm:$0xf]
        %v2974 = vunpack.c.l.b16 %v2942
        %v2975 = vunpack.c.l.b16 %v2943
        %v2976 = vunpack.c.l.b16 %v2944
        %v2977 = vunpack.c.l.b16 %v2945
        %v2978 = vunpack.c.l.b16 %v2946
        %v2979 = vunpack.c.l.b16 %v2947
        %v2980 = vunpack.c.l.b16 %v2948
        %v2981 = vunpack.c.l.b16 %v2949
        %v2982 = vunpack.c.l.b16 %v2950
        %v2983 = vunpack.c.l.b16 %v2951
        %v2984 = vunpack.c.l.b16 %v2952
        %v2985 = vunpack.c.l.b16 %v2953
        %v2986 = vunpack.c.l.b16 %v2954
        %v2987 = vunpack.c.l.b16 %v2955
        %v2988 = vunpack.c.l.b16 %v2956
        %v2989 = vunpack.c.l.b16 %v2957
        %v2990 = vpack.c.b16 %v2975, %v2974
        %v2991 = vpack.c.b16 %v2977, %v2976
        %v2992 = vpack.c.b16 %v2979, %v2978
        %v2993 = vpack.c.b16 %v2981, %v2980
        %v2994 = vpack.c.b16 %v2983, %v2982
        %v2995 = vpack.c.b16 %v2985, %v2984
        %v2996 = vpack.c.b16 %v2987, %v2986
        %v2997 = vpack.c.b16 %v2989, %v2988
        %3006 = vmatprep.subr.bf16.mxu0 0
        %3007 = vmatpush1.bf16.msra.mxu0 %v2990
        %3008 = vmatprep.subr.bf16.mxu0 0
        %3009 = vmatpush1.bf16.msra.mxu0 %v2991
        %3010 = vmatprep.subr.bf16.mxu0 0
        %3011 = vmatpush1.bf16.msra.mxu0 %v2992
        %3012 = vmatprep.subr.bf16.mxu0 0
        %3013 = vmatpush1.bf16.msra.mxu0 %v2993
        %3014 = vmatprep.subr.bf16.mxu0 0
        %3015 = vmatpush1.bf16.msra.mxu0 %v2994
        %3016 = vmatprep.subr.bf16.mxu0 0
        %3017 = vmatpush1.bf16.msra.mxu0 %v2995
        %3018 = vmatprep.subr.bf16.mxu0 0
        %3019 = vmatpush1.bf16.msra.mxu0 %v2996
        %3020 = vmatprep.subr.bf16.mxu0 0
        %3021 = vmatpush1.bf16.msra.mxu0 %v2997
        %3022 = vmatprep.subr.bf16.mxu0 0
        %3023 = vmatpush1.bf16.msra.mxu0 0
        %3024 = vmatprep.subr.bf16.mxu0 0
        %3025 = vmatpush1.bf16.msra.mxu0 0
        %3026 = vmatprep.subr.bf16.mxu0 0
        %3027 = vmatpush1.bf16.msra.mxu0 0
        %3028 = vmatprep.subr.bf16.mxu0 0
        %3029 = vmatpush1.bf16.msra.mxu0 0
        %3030 = vmatprep.subr.bf16.mxu0 0
        %3031 = vmatpush1.bf16.msra.mxu0 0
        %3032 = vmatprep.subr.bf16.mxu0 0
        %3033 = vmatpush1.bf16.msra.mxu0 0
        %3034 = vmatprep.subr.bf16.mxu0 0
        %3035 = vmatpush1.bf16.msra.mxu0 0
        %3036 = vmatprep.subr.bf16.mxu0 0
        %3037 = vmatpush1.bf16.msra.mxu0 0
        %3038 = vmatprep.mubr.bf16.mxu0 0
        %3039 = vmatmul.mubr.bf16.gmra.mrb[0].mxu0 %v2925
        %v3040 = vpop.f32.mrb[0].mxu0
        %v3041 = vadd.f32 0.0, %v3040
        %v3042 = vpop.f32.mrb[0].mxu0
        %v3043 = vpop.f32.mrb[0].mxu0
        %v3044 = vadd.f32 0.0, %v3043
        %v3045 = vpop.f32.mrb[0].mxu0
        %3046 = vmatprep.mubr.bf16.mxu0 0
        %3047 = vmatmul.mubr.bf16.gmra.mrb[0].mxu0 %v2926
        %v3048 = vpop.f32.mrb[0].mxu0
        %v3049 = vadd.f32 0.0, %v3048
        %v3050 = vpop.f32.mrb[0].mxu0
        %v3051 = vpop.f32.mrb[0].mxu0
        %v3052 = vadd.f32 0.0, %v3051
        %v3053 = vpop.f32.mrb[0].mxu0
        %3054 = vmatprep.mubr.bf16.mxu0 0
        %3055 = vmatmul.mubr.bf16.gmra.mrb[0].mxu0 %v2927
        %v3056 = vpop.f32.mrb[0].mxu0
        %v3057 = vadd.f32 0.0, %v3056
        %v3058 = vpop.f32.mrb[0].mxu0
        %v3059 = vpop.f32.mrb[0].mxu0
        %v3060 = vadd.f32 0.0, %v3059
        %v3061 = vpop.f32.mrb[0].mxu0
        %3062 = vmatprep.mubr.bf16.mxu0 0
        %3063 = vmatmul.mubr.bf16.gmra.mrb[0].mxu0 %v2928
        %v3064 = vpop.f32.mrb[0].mxu0
        %v3065 = vadd.f32 0.0, %v3064
        %v3066 = vpop.f32.mrb[0].mxu0
        %v3067 = vpop.f32.mrb[0].mxu0
        %v3068 = vadd.f32 0.0, %v3067
        %v3069 = vpop.f32.mrb[0].mxu0
        %3070 = vmatprep.mubr.bf16.mxu0 0
        %3071 = vmatmul.mubr.bf16.gmra.mrb[0].mxu0 %v2929
        %v3072 = vpop.f32.mrb[0].mxu0
        %v3073 = vadd.f32 0.0, %v3072
        %v3074 = vpop.f32.mrb[0].mxu0
        %v3075 = vpop.f32.mrb[0].mxu0
        %v3076 = vadd.f32 0.0, %v3075
        %v3077 = vpop.f32.mrb[0].mxu0
        %3078 = vmatprep.mubr.bf16.mxu0 0
        %3079 = vmatmul.mubr.bf16.gmra.mrb[0].mxu0 %v2930
        %v3080 = vpop.f32.mrb[0].mxu0
        %v3081 = vadd.f32 0.0, %v3080
        %v3082 = vpop.f32.mrb[0].mxu0
        %v3083 = vpop.f32.mrb[0].mxu0
        %v3084 = vadd.f32 0.0, %v3083
        %v3085 = vpop.f32.mrb[0].mxu0
        %3086 = vmatprep.mubr.bf16.mxu0 0
        %3087 = vmatmul.mubr.bf16.gmra.mrb[0].mxu0 %v2931
        %v3088 = vpop.f32.mrb[0].mxu0
        %v3089 = vadd.f32 0.0, %v3088
        %v3090 = vpop.f32.mrb[0].mxu0
        %v3091 = vpop.f32.mrb[0].mxu0
        %v3092 = vadd.f32 0.0, %v3091
        %v3093 = vpop.f32.mrb[0].mxu0
        %3094 = vmatprep.mubr.bf16.mxu0 0
        %3095 = vmatmul.mubr.bf16.gmra.mrb[0].mxu0 %v2932
        %v3096 = vpop.f32.mrb[0].mxu0
        %v3097 = vadd.f32 0.0, %v3096
        %v3098 = vpop.f32.mrb[0].mxu0
        %v3099 = vpop.f32.mrb[0].mxu0
        %v3100 = vadd.f32 0.0, %v3099
        %v3101 = vpop.f32.mrb[0].mxu0
        %3102 = vmatprep.mubr.bf16.mxu0 0
        %3103 = vmatmul.mubr.bf16.gmra.mrb[0].mxu0 %v2933
        %v3104 = vpop.f32.mrb[0].mxu0
        %v3105 = vadd.f32 0.0, %v3104
        %v3106 = vpop.f32.mrb[0].mxu0
        %v3107 = vpop.f32.mrb[0].mxu0
        %v3108 = vadd.f32 0.0, %v3107
        %v3109 = vpop.f32.mrb[0].mxu0
        %3110 = vmatprep.mubr.bf16.mxu0 0
        %3111 = vmatmul.mubr.bf16.gmra.mrb[0].mxu0 %v2934
        %v3112 = vpop.f32.mrb[0].mxu0
        %v3113 = vadd.f32 0.0, %v3112
        %v3114 = vpop.f32.mrb[0].mxu0
        %v3115 = vpop.f32.mrb[0].mxu0
        %v3116 = vadd.f32 0.0, %v3115
        %v3117 = vpop.f32.mrb[0].mxu0
        %3118 = vmatprep.mubr.bf16.mxu0 0
        %3119 = vmatmul.mubr.bf16.gmra.mrb[0].mxu0 %v2935
        %v3120 = vpop.f32.mrb[0].mxu0
        %v3121 = vadd.f32 0.0, %v3120
        %v3122 = vpop.f32.mrb[0].mxu0
        %v3123 = vpop.f32.mrb[0].mxu0
        %v3124 = vadd.f32 0.0, %v3123
        %v3125 = vpop.f32.mrb[0].mxu0
        %3126 = vmatprep.mubr.bf16.mxu0 0
        %3127 = vmatmul.mubr.bf16.gmra.mrb[0].mxu0 %v2936
        %v3128 = vpop.f32.mrb[0].mxu0
        %v3129 = vadd.f32 0.0, %v3128
        %v3130 = vpop.f32.mrb[0].mxu0
        %v3131 = vpop.f32.mrb[0].mxu0
        %v3132 = vadd.f32 0.0, %v3131
        %v3133 = vpop.f32.mrb[0].mxu0
        %3134 = vmatprep.mubr.bf16.mxu0 0
        %3135 = vmatmul.mubr.bf16.gmra.mrb[0].mxu0 %v2937
        %v3136 = vpop.f32.mrb[0].mxu0
        %v3137 = vadd.f32 0.0, %v3136
        %v3138 = vpop.f32.mrb[0].mxu0
        %v3139 = vpop.f32.mrb[0].mxu0
        %v3140 = vadd.f32 0.0, %v3139
        %v3141 = vpop.f32.mrb[0].mxu0
        %3142 = vmatprep.mubr.bf16.mxu0 0
        %3143 = vmatmul.mubr.bf16.gmra.mrb[0].mxu0 %v2938
        %v3144 = vpop.f32.mrb[0].mxu0
        %v3145 = vadd.f32 0.0, %v3144
        %v3146 = vpop.f32.mrb[0].mxu0
        %v3147 = vpop.f32.mrb[0].mxu0
        %v3148 = vadd.f32 0.0, %v3147
        %v3149 = vpop.f32.mrb[0].mxu0
        %3150 = vmatprep.mubr.bf16.mxu0 0
        %3151 = vmatmul.mubr.bf16.gmra.mrb[0].mxu0 %v2939
        %v3152 = vpop.f32.mrb[0].mxu0
        %v3153 = vadd.f32 0.0, %v3152
        %v3154 = vpop.f32.mrb[0].mxu0
        %v3155 = vpop.f32.mrb[0].mxu0
        %v3156 = vadd.f32 0.0, %v3155
        %v3157 = vpop.f32.mrb[0].mxu0
        %3158 = vmatprep.mubr.bf16.mxu0 0
        %3159 = vmatmul.mubr.bf16.gmra.mrb[0].mxu0 %v2940
        %v3160 = vpop.f32.mrb[0].mxu0
        %v3161 = vadd.f32 0.0, %v3160
        %v3162 = vpop.f32.mrb[0].mxu0
        %v3163 = vpop.f32.mrb[0].mxu0
        %v3164 = vadd.f32 0.0, %v3163
        %v3165 = vpop.f32.mrb[0].mxu0
        %3166 = vdwg.mxu0
        %v3167 = vld [vmem:[#allocation3] sm:$0xff]
        %v3168 = vld [vmem:[#allocation3 + $0x8] sm:$0xff]
        %v3169 = vld [vmem:[#allocation3 + $0x10] sm:$0xff]
        %v3170 = vld [vmem:[#allocation3 + $0x18] sm:$0xff]
        %v3171 = vld [vmem:[#allocation3 + $0x20] sm:$0xff]
        %v3172 = vld [vmem:[#allocation3 + $0x28] sm:$0xff]
        %v3173 = vld [vmem:[#allocation3 + $0x30] sm:$0xff]
        %v3174 = vld [vmem:[#allocation3 + $0x38] sm:$0xff]
        %v3175 = vld [vmem:[#allocation3 + $0x40] sm:$0xff]
        %v3176 = vld [vmem:[#allocation3 + $0x48] sm:$0xff]
        %v3177 = vld [vmem:[#allocation3 + $0x50] sm:$0xff]
        %v3178 = vld [vmem:[#allocation3 + $0x58] sm:$0xff]
        %v3179 = vld [vmem:[#allocation3 + $0x60] sm:$0xff]
        %v3180 = vld [vmem:[#allocation3 + $0x68] sm:$0xff]
        %v3181 = vld [vmem:[#allocation3 + $0x70] sm:$0xff]
        %v3182 = vld [vmem:[#allocation3 + $0x78] sm:$0xff]
        %v3183 = vld [vmem:[#allocation3 + $0x80] sm:$0xff]
        %v3184 = vld [vmem:[#allocation3 + $0x88] sm:$0xff]
        %v3185 = vld [vmem:[#allocation3 + $0x90] sm:$0xff]
        %v3186 = vld [vmem:[#allocation3 + $0x98] sm:$0xff]
        %v3187 = vld [vmem:[#allocation3 + $0xa0] sm:$0xff]
        %v3188 = vld [vmem:[#allocation3 + $0xa8] sm:$0xff]
        %v3189 = vld [vmem:[#allocation3 + $0xb0] sm:$0xff]
        %v3190 = vld [vmem:[#allocation3 + $0xb8] sm:$0xff]
        %v3191 = vld [vmem:[#allocation3 + $0xc0] sm:$0xff]
        %v3192 = vld [vmem:[#allocation3 + $0xc8] sm:$0xff]
        %v3193 = vld [vmem:[#allocation3 + $0xd0] sm:$0xff]
        %v3194 = vld [vmem:[#allocation3 + $0xd8] sm:$0xff]
        %v3195 = vld [vmem:[#allocation3 + $0xe0] sm:$0xff]
        %v3196 = vld [vmem:[#allocation3 + $0xe8] sm:$0xff]
        %v3197 = vld [vmem:[#allocation3 + $0xf0] sm:$0xff]
        %v3198 = vld [vmem:[#allocation3 + $0xf8] sm:$0xff]
        %v3199 = vadd.f32 %v3167, %v3041
        %v3200 = vadd.f32 %v3168, %v3044
        %v3201 = vadd.f32 %v3169, %v3049
        %v3202 = vadd.f32 %v3170, %v3052
        %v3203 = vadd.f32 %v3171, %v3057
        %v3204 = vadd.f32 %v3172, %v3060
        %v3205 = vadd.f32 %v3173, %v3065
        %v3206 = vadd.f32 %v3174, %v3068
        %v3207 = vadd.f32 %v3175, %v3073
        %v3208 = vadd.f32 %v3176, %v3076
        %v3209 = vadd.f32 %v3177, %v3081
        %v3210 = vadd.f32 %v3178, %v3084
        %v3211 = vadd.f32 %v3179, %v3089
        %v3212 = vadd.f32 %v3180, %v3092
        %v3213 = vadd.f32 %v3181, %v3097
        %v3214 = vadd.f32 %v3182, %v3100
        %v3215 = vadd.f32 %v3183, %v3105
        %v3216 = vadd.f32 %v3184, %v3108
        %v3217 = vadd.f32 %v3185, %v3113
        %v3218 = vadd.f32 %v3186, %v3116
        %v3219 = vadd.f32 %v3187, %v3121
        %v3220 = vadd.f32 %v3188, %v3124
        %v3221 = vadd.f32 %v3189, %v3129
        %v3222 = vadd.f32 %v3190, %v3132
        %v3223 = vadd.f32 %v3191, %v3137
        %v3224 = vadd.f32 %v3192, %v3140
        %v3225 = vadd.f32 %v3193, %v3145
        %v3226 = vadd.f32 %v3194, %v3148
        %v3227 = vadd.f32 %v3195, %v3153
        %v3228 = vadd.f32 %v3196, %v3156
        %v3229 = vadd.f32 %v3197, %v3161
        %v3230 = vadd.f32 %v3198, %v3164
        %3231 = vst [vmem:[#allocation3] sm:$0xff] %v3199
        %3232 = vst [vmem:[#allocation3 + $0x8] sm:$0xff] %v3200
        %3233 = vst [vmem:[#allocation3 + $0x10] sm:$0xff] %v3201
        %3234 = vst [vmem:[#allocation3 + $0x18] sm:$0xff] %v3202
        %3235 = vst [vmem:[#allocation3 + $0x20] sm:$0xff] %v3203
        %3236 = vst [vmem:[#allocation3 + $0x28] sm:$0xff] %v3204
        %3237 = vst [vmem:[#allocation3 + $0x30] sm:$0xff] %v3205
        %3238 = vst [vmem:[#allocation3 + $0x38] sm:$0xff] %v3206
        %3239 = vst [vmem:[#allocation3 + $0x40] sm:$0xff] %v3207
        %3240 = vst [vmem:[#allocation3 + $0x48] sm:$0xff] %v3208
        %3241 = vst [vmem:[#allocation3 + $0x50] sm:$0xff] %v3209
        %3242 = vst [vmem:[#allocation3 + $0x58] sm:$0xff] %v3210
        %3243 = vst [vmem:[#allocation3 + $0x60] sm:$0xff] %v3211
        %3244 = vst [vmem:[#allocation3 + $0x68] sm:$0xff] %v3212
        %3245 = vst [vmem:[#allocation3 + $0x70] sm:$0xff] %v3213
        %3246 = vst [vmem:[#allocation3 + $0x78] sm:$0xff] %v3214
        %3247 = vst [vmem:[#allocation3 + $0x80] sm:$0xff] %v3215
        %3248 = vst [vmem:[#allocation3 + $0x88] sm:$0xff] %v3216
        %3249 = vst [vmem:[#allocation3 + $0x90] sm:$0xff] %v3217
        %3250 = vst [vmem:[#allocation3 + $0x98] sm:$0xff] %v3218
        %3251 = vst [vmem:[#allocation3 + $0xa0] sm:$0xff] %v3219
        %3252 = vst [vmem:[#allocation3 + $0xa8] sm:$0xff] %v3220
        %3253 = vst [vmem:[#allocation3 + $0xb0] sm:$0xff] %v3221
        %3254 = vst [vmem:[#allocation3 + $0xb8] sm:$0xff] %v3222
        %3255 = vst [vmem:[#allocation3 + $0xc0] sm:$0xff] %v3223
        %3256 = vst [vmem:[#allocation3 + $0xc8] sm:$0xff] %v3224
        %3257 = vst [vmem:[#allocation3 + $0xd0] sm:$0xff] %v3225
        %3258 = vst [vmem:[#allocation3 + $0xd8] sm:$0xff] %v3226
        %3259 = vst [vmem:[#allocation3 + $0xe0] sm:$0xff] %v3227
        %3260 = vst [vmem:[#allocation3 + $0xe8] sm:$0xff] %v3228
        %3261 = vst [vmem:[#allocation3 + $0xf0] sm:$0xff] %v3229
        %3262 = vst [vmem:[#allocation3 + $0xf8] sm:$0xff] %v3230
        %v3263 = vld [vmem:[%s2892 + $0x1] sm:$0xff]
        %v3264 = vld [vmem:[%s2892 + $0x9] sm:$0xff]
        %v3265 = vld [vmem:[%s2892 + $0x19] sm:$0xff]
        %v3266 = vld [vmem:[%s2892 + $0x21] sm:$0xff]
        %v3267 = vld [vmem:[%s2892 + $0x31] sm:$0xff]
        %v3268 = vld [vmem:[%s2892 + $0x39] sm:$0xff]
        %v3269 = vld [vmem:[%s2892 + $0x49] sm:$0xff]
        %v3270 = vld [vmem:[%s2892 + $0x51] sm:$0xff]
        %v3271 = vld [vmem:[%s2892 + $0x61] sm:$0xff]
        %v3272 = vld [vmem:[%s2892 + $0x69] sm:$0xff]
        %v3273 = vld [vmem:[%s2892 + $0x79] sm:$0xff]
        %v3274 = vld [vmem:[%s2892 + $0x81] sm:$0xff]
        %v3275 = vld [vmem:[%s2892 + $0x91] sm:$0xff]
        %v3276 = vld [vmem:[%s2892 + $0x99] sm:$0xff]
        %v3277 = vld [vmem:[%s2892 + $0xa9] sm:$0xff]
        %v3278 = vld [vmem:[%s2892 + $0xb1] sm:$0xff]
        %v3279 = vld [vmem:[%s2892 + $0xc1] sm:$0xff]
        %v3280 = vld [vmem:[%s2892 + $0xc9] sm:$0xff]
        %v3281 = vld [vmem:[%s2892 + $0xd9] sm:$0xff]
        %v3282 = vld [vmem:[%s2892 + $0xe1] sm:$0xff]
        %v3283 = vld [vmem:[%s2892 + $0xf1] sm:$0xff]
        %v3284 = vld [vmem:[%s2892 + $0xf9] sm:$0xff]
        %v3285 = vld [vmem:[%s2892 + $0x109] sm:$0xff]
        %v3286 = vld [vmem:[%s2892 + $0x111] sm:$0xff]
        %v3287 = vld [vmem:[%s2892 + $0x121] sm:$0xff]
        %v3288 = vld [vmem:[%s2892 + $0x129] sm:$0xff]
        %v3289 = vld [vmem:[%s2892 + $0x139] sm:$0xff]
        %v3290 = vld [vmem:[%s2892 + $0x141] sm:$0xff]
        %v3291 = vld [vmem:[%s2892 + $0x151] sm:$0xff]
        %v3292 = vld [vmem:[%s2892 + $0x159] sm:$0xff]
        %v3293 = vld [vmem:[%s2892 + $0x169] sm:$0xff]
        %v3294 = vld [vmem:[%s2892 + $0x171] sm:$0xff]
        %v3295 = vpack.c.bf16 %v3264, %v3263
        %v3296 = vpack.c.bf16 %v3266, %v3265
        %v3297 = vpack.c.bf16 %v3268, %v3267
        %v3298 = vpack.c.bf16 %v3270, %v3269
        %v3299 = vpack.c.bf16 %v3272, %v3271
        %v3300 = vpack.c.bf16 %v3274, %v3273
        %v3301 = vpack.c.bf16 %v3276, %v3275
        %v3302 = vpack.c.bf16 %v3278, %v3277
        %v3303 = vpack.c.bf16 %v3280, %v3279
        %v3304 = vpack.c.bf16 %v3282, %v3281
        %v3305 = vpack.c.bf16 %v3284, %v3283
        %v3306 = vpack.c.bf16 %v3286, %v3285
        %v3307 = vpack.c.bf16 %v3288, %v3287
        %v3308 = vpack.c.bf16 %v3290, %v3289
        %v3309 = vpack.c.bf16 %v3292, %v3291
        %v3310 = vpack.c.bf16 %v3294, %v3293
        %s3311 = scalar_lea.vmem [#allocation9], 448
        %v3312 = vld [vmem:[%s3311] sm:$0xf]
        %v3313 = vld [vmem:[%s3311 + $0x4] sm:$0xf]
        %v3314 = vld [vmem:[%s3311 + $0x8] sm:$0xf]
        %v3315 = vld [vmem:[%s3311 + $0xc] sm:$0xf]
        %v3316 = vld [vmem:[%s3311 + $0x10] sm:$0xf]
        %v3317 = vld [vmem:[%s3311 + $0x14] sm:$0xf]
        %v3318 = vld [vmem:[%s3311 + $0x18] sm:$0xf]
        %v3319 = vld [vmem:[%s3311 + $0x1c] sm:$0xf]
        %v3320 = vld [vmem:[%s3311 + $0x20] sm:$0xf]
        %v3321 = vld [vmem:[%s3311 + $0x24] sm:$0xf]
        %v3322 = vld [vmem:[%s3311 + $0x28] sm:$0xf]
        %v3323 = vld [vmem:[%s3311 + $0x2c] sm:$0xf]
        %v3324 = vld [vmem:[%s3311 + $0x30] sm:$0xf]
        %v3325 = vld [vmem:[%s3311 + $0x34] sm:$0xf]
        %v3326 = vld [vmem:[%s3311 + $0x38] sm:$0xf]
        %v3327 = vld [vmem:[%s3311 + $0x3c] sm:$0xf]
        %v3344 = vunpack.c.l.b16 %v3312
        %v3345 = vunpack.c.l.b16 %v3313
        %v3346 = vunpack.c.l.b16 %v3314
        %v3347 = vunpack.c.l.b16 %v3315
        %v3348 = vunpack.c.l.b16 %v3316
        %v3349 = vunpack.c.l.b16 %v3317
        %v3350 = vunpack.c.l.b16 %v3318
        %v3351 = vunpack.c.l.b16 %v3319
        %v3352 = vunpack.c.l.b16 %v3320
        %v3353 = vunpack.c.l.b16 %v3321
        %v3354 = vunpack.c.l.b16 %v3322
        %v3355 = vunpack.c.l.b16 %v3323
        %v3356 = vunpack.c.l.b16 %v3324
        %v3357 = vunpack.c.l.b16 %v3325
        %v3358 = vunpack.c.l.b16 %v3326
        %v3359 = vunpack.c.l.b16 %v3327
        %v3360 = vpack.c.b16 %v3345, %v3344
        %v3361 = vpack.c.b16 %v3347, %v3346
        %v3362 = vpack.c.b16 %v3349, %v3348
        %v3363 = vpack.c.b16 %v3351, %v3350
        %v3364 = vpack.c.b16 %v3353, %v3352
        %v3365 = vpack.c.b16 %v3355, %v3354
        %v3366 = vpack.c.b16 %v3357, %v3356
        %v3367 = vpack.c.b16 %v3359, %v3358
        %3376 = vmatprep.subr.bf16.mxu0 0
        %3377 = vmatpush1.bf16.msra.mxu0 %v3360
        %3378 = vmatprep.subr.bf16.mxu0 0
        %3379 = vmatpush1.bf16.msra.mxu0 %v3361
        %3380 = vmatprep.subr.bf16.mxu0 0
        %3381 = vmatpush1.bf16.msra.mxu0 %v3362
        %3382 = vmatprep.subr.bf16.mxu0 0
        %3383 = vmatpush1.bf16.msra.mxu0 %v3363
        %3384 = vmatprep.subr.bf16.mxu0 0
        %3385 = vmatpush1.bf16.msra.mxu0 %v3364
        %3386 = vmatprep.subr.bf16.mxu0 0
        %3387 = vmatpush1.bf16.msra.mxu0 %v3365
        %3388 = vmatprep.subr.bf16.mxu0 0
        %3389 = vmatpush1.bf16.msra.mxu0 %v3366
        %3390 = vmatprep.subr.bf16.mxu0 0
        %3391 = vmatpush1.bf16.msra.mxu0 %v3367
        %3392 = vmatprep.subr.bf16.mxu0 0
        %3393 = vmatpush1.bf16.msra.mxu0 0
        %3394 = vmatprep.subr.bf16.mxu0 0
        %3395 = vmatpush1.bf16.msra.mxu0 0
        %3396 = vmatprep.subr.bf16.mxu0 0
        %3397 = vmatpush1.bf16.msra.mxu0 0
        %3398 = vmatprep.subr.bf16.mxu0 0
        %3399 = vmatpush1.bf16.msra.mxu0 0
        %3400 = vmatprep.subr.bf16.mxu0 0
        %3401 = vmatpush1.bf16.msra.mxu0 0
        %3402 = vmatprep.subr.bf16.mxu0 0
        %3403 = vmatpush1.bf16.msra.mxu0 0
        %3404 = vmatprep.subr.bf16.mxu0 0
        %3405 = vmatpush1.bf16.msra.mxu0 0
        %3406 = vmatprep.subr.bf16.mxu0 0
        %3407 = vmatpush1.bf16.msra.mxu0 0
        %3408 = vmatprep.mubr.bf16.mxu0 0
        %3409 = vmatmul.mubr.bf16.gmra.mrb[0].mxu0 %v3295
        %v3410 = vpop.f32.mrb[0].mxu0
        %v3411 = vadd.f32 0.0, %v3410
        %v3412 = vpop.f32.mrb[0].mxu0
        %v3413 = vpop.f32.mrb[0].mxu0
        %v3414 = vadd.f32 0.0, %v3413
        %v3415 = vpop.f32.mrb[0].mxu0
        %3416 = vmatprep.mubr.bf16.mxu0 0
        %3417 = vmatmul.mubr.bf16.gmra.mrb[0].mxu0 %v3296
        %v3418 = vpop.f32.mrb[0].mxu0
        %v3419 = vadd.f32 0.0, %v3418
        %v3420 = vpop.f32.mrb[0].mxu0
        %v3421 = vpop.f32.mrb[0].mxu0
        %v3422 = vadd.f32 0.0, %v3421
        %v3423 = vpop.f32.mrb[0].mxu0
        %3424 = vmatprep.mubr.bf16.mxu0 0
        %3425 = vmatmul.mubr.bf16.gmra.mrb[0].mxu0 %v3297
        %v3426 = vpop.f32.mrb[0].mxu0
        %v3427 = vadd.f32 0.0, %v3426
        %v3428 = vpop.f32.mrb[0].mxu0
        %v3429 = vpop.f32.mrb[0].mxu0
        %v3430 = vadd.f32 0.0, %v3429
        %v3431 = vpop.f32.mrb[0].mxu0
        %3432 = vmatprep.mubr.bf16.mxu0 0
        %3433 = vmatmul.mubr.bf16.gmra.mrb[0].mxu0 %v3298
        %v3434 = vpop.f32.mrb[0].mxu0
        %v3435 = vadd.f32 0.0, %v3434
        %v3436 = vpop.f32.mrb[0].mxu0
        %v3437 = vpop.f32.mrb[0].mxu0
        %v3438 = vadd.f32 0.0, %v3437
        %v3439 = vpop.f32.mrb[0].mxu0
        %3440 = vmatprep.mubr.bf16.mxu0 0
        %3441 = vmatmul.mubr.bf16.gmra.mrb[0].mxu0 %v3299
        %v3442 = vpop.f32.mrb[0].mxu0
        %v3443 = vadd.f32 0.0, %v3442
        %v3444 = vpop.f32.mrb[0].mxu0
        %v3445 = vpop.f32.mrb[0].mxu0
        %v3446 = vadd.f32 0.0, %v3445
        %v3447 = vpop.f32.mrb[0].mxu0
        %3448 = vmatprep.mubr.bf16.mxu0 0
        %3449 = vmatmul.mubr.bf16.gmra.mrb[0].mxu0 %v3300
        %v3450 = vpop.f32.mrb[0].mxu0
        %v3451 = vadd.f32 0.0, %v3450
        %v3452 = vpop.f32.mrb[0].mxu0
        %v3453 = vpop.f32.mrb[0].mxu0
        %v3454 = vadd.f32 0.0, %v3453
        %v3455 = vpop.f32.mrb[0].mxu0
        %3456 = vmatprep.mubr.bf16.mxu0 0
        %3457 = vmatmul.mubr.bf16.gmra.mrb[0].mxu0 %v3301
        %v3458 = vpop.f32.mrb[0].mxu0
        %v3459 = vadd.f32 0.0, %v3458
        %v3460 = vpop.f32.mrb[0].mxu0
        %v3461 = vpop.f32.mrb[0].mxu0
        %v3462 = vadd.f32 0.0, %v3461
        %v3463 = vpop.f32.mrb[0].mxu0
        %3464 = vmatprep.mubr.bf16.mxu0 0
        %3465 = vmatmul.mubr.bf16.gmra.mrb[0].mxu0 %v3302
        %v3466 = vpop.f32.mrb[0].mxu0
        %v3467 = vadd.f32 0.0, %v3466
        %v3468 = vpop.f32.mrb[0].mxu0
        %v3469 = vpop.f32.mrb[0].mxu0
        %v3470 = vadd.f32 0.0, %v3469
        %v3471 = vpop.f32.mrb[0].mxu0
        %3472 = vmatprep.mubr.bf16.mxu0 0
        %3473 = vmatmul.mubr.bf16.gmra.mrb[0].mxu0 %v3303
        %v3474 = vpop.f32.mrb[0].mxu0
        %v3475 = vadd.f32 0.0, %v3474
        %v3476 = vpop.f32.mrb[0].mxu0
        %v3477 = vpop.f32.mrb[0].mxu0
        %v3478 = vadd.f32 0.0, %v3477
        %v3479 = vpop.f32.mrb[0].mxu0
        %3480 = vmatprep.mubr.bf16.mxu0 0
        %3481 = vmatmul.mubr.bf16.gmra.mrb[0].mxu0 %v3304
        %v3482 = vpop.f32.mrb[0].mxu0
        %v3483 = vadd.f32 0.0, %v3482
        %v3484 = vpop.f32.mrb[0].mxu0
        %v3485 = vpop.f32.mrb[0].mxu0
        %v3486 = vadd.f32 0.0, %v3485
        %v3487 = vpop.f32.mrb[0].mxu0
        %3488 = vmatprep.mubr.bf16.mxu0 0
        %3489 = vmatmul.mubr.bf16.gmra.mrb[0].mxu0 %v3305
        %v3490 = vpop.f32.mrb[0].mxu0
        %v3491 = vadd.f32 0.0, %v3490
        %v3492 = vpop.f32.mrb[0].mxu0
        %v3493 = vpop.f32.mrb[0].mxu0
        %v3494 = vadd.f32 0.0, %v3493
        %v3495 = vpop.f32.mrb[0].mxu0
        %3496 = vmatprep.mubr.bf16.mxu0 0
        %3497 = vmatmul.mubr.bf16.gmra.mrb[0].mxu0 %v3306
        %v3498 = vpop.f32.mrb[0].mxu0
        %v3499 = vadd.f32 0.0, %v3498
        %v3500 = vpop.f32.mrb[0].mxu0
        %v3501 = vpop.f32.mrb[0].mxu0
        %v3502 = vadd.f32 0.0, %v3501
        %v3503 = vpop.f32.mrb[0].mxu0
        %3504 = vmatprep.mubr.bf16.mxu0 0
        %3505 = vmatmul.mubr.bf16.gmra.mrb[0].mxu0 %v3307
        %v3506 = vpop.f32.mrb[0].mxu0
        %v3507 = vadd.f32 0.0, %v3506
        %v3508 = vpop.f32.mrb[0].mxu0
        %v3509 = vpop.f32.mrb[0].mxu0
        %v3510 = vadd.f32 0.0, %v3509
        %v3511 = vpop.f32.mrb[0].mxu0
        %3512 = vmatprep.mubr.bf16.mxu0 0
        %3513 = vmatmul.mubr.bf16.gmra.mrb[0].mxu0 %v3308
        %v3514 = vpop.f32.mrb[0].mxu0
        %v3515 = vadd.f32 0.0, %v3514
        %v3516 = vpop.f32.mrb[0].mxu0
        %v3517 = vpop.f32.mrb[0].mxu0
        %v3518 = vadd.f32 0.0, %v3517
        %v3519 = vpop.f32.mrb[0].mxu0
        %3520 = vmatprep.mubr.bf16.mxu0 0
        %3521 = vmatmul.mubr.bf16.gmra.mrb[0].mxu0 %v3309
        %v3522 = vpop.f32.mrb[0].mxu0
        %v3523 = vadd.f32 0.0, %v3522
        %v3524 = vpop.f32.mrb[0].mxu0
        %v3525 = vpop.f32.mrb[0].mxu0
        %v3526 = vadd.f32 0.0, %v3525
        %v3527 = vpop.f32.mrb[0].mxu0
        %3528 = vmatprep.mubr.bf16.mxu0 0
        %3529 = vmatmul.mubr.bf16.gmra.mrb[0].mxu0 %v3310
        %v3530 = vpop.f32.mrb[0].mxu0
        %v3531 = vadd.f32 0.0, %v3530
        %v3532 = vpop.f32.mrb[0].mxu0
        %v3533 = vpop.f32.mrb[0].mxu0
        %v3534 = vadd.f32 0.0, %v3533
        %v3535 = vpop.f32.mrb[0].mxu0
        %3536 = vdwg.mxu0
        %v3537 = vld [vmem:[#allocation3] sm:$0xff]
        %v3538 = vld [vmem:[#allocation3 + $0x8] sm:$0xff]
        %v3539 = vld [vmem:[#allocation3 + $0x10] sm:$0xff]
        %v3540 = vld [vmem:[#allocation3 + $0x18] sm:$0xff]
        %v3541 = vld [vmem:[#allocation3 + $0x20] sm:$0xff]
        %v3542 = vld [vmem:[#allocation3 + $0x28] sm:$0xff]
        %v3543 = vld [vmem:[#allocation3 + $0x30] sm:$0xff]
        %v3544 = vld [vmem:[#allocation3 + $0x38] sm:$0xff]
        %v3545 = vld [vmem:[#allocation3 + $0x40] sm:$0xff]
        %v3546 = vld [vmem:[#allocation3 + $0x48] sm:$0xff]
        %v3547 = vld [vmem:[#allocation3 + $0x50] sm:$0xff]
        %v3548 = vld [vmem:[#allocation3 + $0x58] sm:$0xff]
        %v3549 = vld [vmem:[#allocation3 + $0x60] sm:$0xff]
        %v3550 = vld [vmem:[#allocation3 + $0x68] sm:$0xff]
        %v3551 = vld [vmem:[#allocation3 + $0x70] sm:$0xff]
        %v3552 = vld [vmem:[#allocation3 + $0x78] sm:$0xff]
        %v3553 = vld [vmem:[#allocation3 + $0x80] sm:$0xff]
        %v3554 = vld [vmem:[#allocation3 + $0x88] sm:$0xff]
        %v3555 = vld [vmem:[#allocation3 + $0x90] sm:$0xff]
        %v3556 = vld [vmem:[#allocation3 + $0x98] sm:$0xff]
        %v3557 = vld [vmem:[#allocation3 + $0xa0] sm:$0xff]
        %v3558 = vld [vmem:[#allocation3 + $0xa8] sm:$0xff]
        %v3559 = vld [vmem:[#allocation3 + $0xb0] sm:$0xff]
        %v3560 = vld [vmem:[#allocation3 + $0xb8] sm:$0xff]
        %v3561 = vld [vmem:[#allocation3 + $0xc0] sm:$0xff]
        %v3562 = vld [vmem:[#allocation3 + $0xc8] sm:$0xff]
        %v3563 = vld [vmem:[#allocation3 + $0xd0] sm:$0xff]
        %v3564 = vld [vmem:[#allocation3 + $0xd8] sm:$0xff]
        %v3565 = vld [vmem:[#allocation3 + $0xe0] sm:$0xff]
        %v3566 = vld [vmem:[#allocation3 + $0xe8] sm:$0xff]
        %v3567 = vld [vmem:[#allocation3 + $0xf0] sm:$0xff]
        %v3568 = vld [vmem:[#allocation3 + $0xf8] sm:$0xff]
        %v3569 = vadd.f32 %v3537, %v3411
        %v3570 = vadd.f32 %v3538, %v3414
        %v3571 = vadd.f32 %v3539, %v3419
        %v3572 = vadd.f32 %v3540, %v3422
        %v3573 = vadd.f32 %v3541, %v3427
        %v3574 = vadd.f32 %v3542, %v3430
        %v3575 = vadd.f32 %v3543, %v3435
        %v3576 = vadd.f32 %v3544, %v3438
        %v3577 = vadd.f32 %v3545, %v3443
        %v3578 = vadd.f32 %v3546, %v3446
        %v3579 = vadd.f32 %v3547, %v3451
        %v3580 = vadd.f32 %v3548, %v3454
        %v3581 = vadd.f32 %v3549, %v3459
        %v3582 = vadd.f32 %v3550, %v3462
        %v3583 = vadd.f32 %v3551, %v3467
        %v3584 = vadd.f32 %v3552, %v3470
        %v3585 = vadd.f32 %v3553, %v3475
        %v3586 = vadd.f32 %v3554, %v3478
        %v3587 = vadd.f32 %v3555, %v3483
        %v3588 = vadd.f32 %v3556, %v3486
        %v3589 = vadd.f32 %v3557, %v3491
        %v3590 = vadd.f32 %v3558, %v3494
        %v3591 = vadd.f32 %v3559, %v3499
        %v3592 = vadd.f32 %v3560, %v3502
        %v3593 = vadd.f32 %v3561, %v3507
        %v3594 = vadd.f32 %v3562, %v3510
        %v3595 = vadd.f32 %v3563, %v3515
        %v3596 = vadd.f32 %v3564, %v3518
        %v3597 = vadd.f32 %v3565, %v3523
        %v3598 = vadd.f32 %v3566, %v3526
        %v3599 = vadd.f32 %v3567, %v3531
        %v3600 = vadd.f32 %v3568, %v3534
        %3601 = vst [vmem:[#allocation3] sm:$0xff] %v3569
        %3602 = vst [vmem:[#allocation3 + $0x8] sm:$0xff] %v3570
        %3603 = vst [vmem:[#allocation3 + $0x10] sm:$0xff] %v3571
        %3604 = vst [vmem:[#allocation3 + $0x18] sm:$0xff] %v3572
        %3605 = vst [vmem:[#allocation3 + $0x20] sm:$0xff] %v3573
        %3606 = vst [vmem:[#allocation3 + $0x28] sm:$0xff] %v3574
        %3607 = vst [vmem:[#allocation3 + $0x30] sm:$0xff] %v3575
        %3608 = vst [vmem:[#allocation3 + $0x38] sm:$0xff] %v3576
        %3609 = vst [vmem:[#allocation3 + $0x40] sm:$0xff] %v3577
        %3610 = vst [vmem:[#allocation3 + $0x48] sm:$0xff] %v3578
        %3611 = vst [vmem:[#allocation3 + $0x50] sm:$0xff] %v3579
        %3612 = vst [vmem:[#allocation3 + $0x58] sm:$0xff] %v3580
        %3613 = vst [vmem:[#allocation3 + $0x60] sm:$0xff] %v3581
        %3614 = vst [vmem:[#allocation3 + $0x68] sm:$0xff] %v3582
        %3615 = vst [vmem:[#allocation3 + $0x70] sm:$0xff] %v3583
        %3616 = vst [vmem:[#allocation3 + $0x78] sm:$0xff] %v3584
        %3617 = vst [vmem:[#allocation3 + $0x80] sm:$0xff] %v3585
        %3618 = vst [vmem:[#allocation3 + $0x88] sm:$0xff] %v3586
        %3619 = vst [vmem:[#allocation3 + $0x90] sm:$0xff] %v3587
        %3620 = vst [vmem:[#allocation3 + $0x98] sm:$0xff] %v3588
        %3621 = vst [vmem:[#allocation3 + $0xa0] sm:$0xff] %v3589
        %3622 = vst [vmem:[#allocation3 + $0xa8] sm:$0xff] %v3590
        %3623 = vst [vmem:[#allocation3 + $0xb0] sm:$0xff] %v3591
        %3624 = vst [vmem:[#allocation3 + $0xb8] sm:$0xff] %v3592
        %3625 = vst [vmem:[#allocation3 + $0xc0] sm:$0xff] %v3593
        %3626 = vst [vmem:[#allocation3 + $0xc8] sm:$0xff] %v3594
        %3627 = vst [vmem:[#allocation3 + $0xd0] sm:$0xff] %v3595
        %3628 = vst [vmem:[#allocation3 + $0xd8] sm:$0xff] %v3596
        %3629 = vst [vmem:[#allocation3 + $0xe0] sm:$0xff] %v3597
        %3630 = vst [vmem:[#allocation3 + $0xe8] sm:$0xff] %v3598
        %3631 = vst [vmem:[#allocation3 + $0xf0] sm:$0xff] %v3599
        %3632 = vst [vmem:[#allocation3 + $0xf8] sm:$0xff] %v3600
        %v3633 = vld [vmem:[%s2892 + $0x2] sm:$0xff]
        %v3634 = vld [vmem:[%s2892 + $0xa] sm:$0xff]
        %v3635 = vld [vmem:[%s2892 + $0x1a] sm:$0xff]
        %v3636 = vld [vmem:[%s2892 + $0x22] sm:$0xff]
        %v3637 = vld [vmem:[%s2892 + $0x32] sm:$0xff]
        %v3638 = vld [vmem:[%s2892 + $0x3a] sm:$0xff]
        %v3639 = vld [vmem:[%s2892 + $0x4a] sm:$0xff]
        %v3640 = vld [vmem:[%s2892 + $0x52] sm:$0xff]
        %v3641 = vld [vmem:[%s2892 + $0x62] sm:$0xff]
        %v3642 = vld [vmem:[%s2892 + $0x6a] sm:$0xff]
        %v3643 = vld [vmem:[%s2892 + $0x7a] sm:$0xff]
        %v3644 = vld [vmem:[%s2892 + $0x82] sm:$0xff]
        %v3645 = vld [vmem:[%s2892 + $0x92] sm:$0xff]
        %v3646 = vld [vmem:[%s2892 + $0x9a] sm:$0xff]
        %v3647 = vld [vmem:[%s2892 + $0xaa] sm:$0xff]
        %v3648 = vld [vmem:[%s2892 + $0xb2] sm:$0xff]
        %v3649 = vld [vmem:[%s2892 + $0xc2] sm:$0xff]
        %v3650 = vld [vmem:[%s2892 + $0xca] sm:$0xff]
        %v3651 = vld [vmem:[%s2892 + $0xda] sm:$0xff]
        %v3652 = vld [vmem:[%s2892 + $0xe2] sm:$0xff]
        %v3653 = vld [vmem:[%s2892 + $0xf2] sm:$0xff]
        %v3654 = vld [vmem:[%s2892 + $0xfa] sm:$0xff]
        %v3655 = vld [vmem:[%s2892 + $0x10a] sm:$0xff]
        %v3656 = vld [vmem:[%s2892 + $0x112] sm:$0xff]
        %v3657 = vld [vmem:[%s2892 + $0x122] sm:$0xff]
        %v3658 = vld [vmem:[%s2892 + $0x12a] sm:$0xff]
        %v3659 = vld [vmem:[%s2892 + $0x13a] sm:$0xff]
        %v3660 = vld [vmem:[%s2892 + $0x142] sm:$0xff]
        %v3661 = vld [vmem:[%s2892 + $0x152] sm:$0xff]
        %v3662 = vld [vmem:[%s2892 + $0x15a] sm:$0xff]
        %v3663 = vld [vmem:[%s2892 + $0x16a] sm:$0xff]
        %v3664 = vld [vmem:[%s2892 + $0x172] sm:$0xff]
        %v3665 = vpack.c.bf16 %v3634, %v3633
        %v3666 = vpack.c.bf16 %v3636, %v3635
        %v3667 = vpack.c.bf16 %v3638, %v3637
        %v3668 = vpack.c.bf16 %v3640, %v3639
        %v3669 = vpack.c.bf16 %v3642, %v3641
        %v3670 = vpack.c.bf16 %v3644, %v3643
        %v3671 = vpack.c.bf16 %v3646, %v3645
        %v3672 = vpack.c.bf16 %v3648, %v3647
        %v3673 = vpack.c.bf16 %v3650, %v3649
        %v3674 = vpack.c.bf16 %v3652, %v3651
        %v3675 = vpack.c.bf16 %v3654, %v3653
        %v3676 = vpack.c.bf16 %v3656, %v3655
        %v3677 = vpack.c.bf16 %v3658, %v3657
        %v3678 = vpack.c.bf16 %v3660, %v3659
        %v3679 = vpack.c.bf16 %v3662, %v3661
        %v3680 = vpack.c.bf16 %v3664, %v3663
        %s3681 = scalar_lea.vmem [#allocation9], 512
        %v3682 = vld [vmem:[%s3681] sm:$0xf]
        %v3683 = vld [vmem:[%s3681 + $0x4] sm:$0xf]
        %v3684 = vld [vmem:[%s3681 + $0x8] sm:$0xf]
        %v3685 = vld [vmem:[%s3681 + $0xc] sm:$0xf]
        %v3686 = vld [vmem:[%s3681 + $0x10] sm:$0xf]
        %v3687 = vld [vmem:[%s3681 + $0x14] sm:$0xf]
        %v3688 = vld [vmem:[%s3681 + $0x18] sm:$0xf]
        %v3689 = vld [vmem:[%s3681 + $0x1c] sm:$0xf]
        %v3690 = vld [vmem:[%s3681 + $0x20] sm:$0xf]
        %v3691 = vld [vmem:[%s3681 + $0x24] sm:$0xf]
        %v3692 = vld [vmem:[%s3681 + $0x28] sm:$0xf]
        %v3693 = vld [vmem:[%s3681 + $0x2c] sm:$0xf]
        %v3694 = vld [vmem:[%s3681 + $0x30] sm:$0xf]
        %v3695 = vld [vmem:[%s3681 + $0x34] sm:$0xf]
        %v3696 = vld [vmem:[%s3681 + $0x38] sm:$0xf]
        %v3697 = vld [vmem:[%s3681 + $0x3c] sm:$0xf]
        %v3714 = vunpack.c.l.b16 %v3682
        %v3715 = vunpack.c.l.b16 %v3683
        %v3716 = vunpack.c.l.b16 %v3684
        %v3717 = vunpack.c.l.b16 %v3685
        %v3718 = vunpack.c.l.b16 %v3686
        %v3719 = vunpack.c.l.b16 %v3687
        %v3720 = vunpack.c.l.b16 %v3688
        %v3721 = vunpack.c.l.b16 %v3689
        %v3722 = vunpack.c.l.b16 %v3690
        %v3723 = vunpack.c.l.b16 %v3691
        %v3724 = vunpack.c.l.b16 %v3692
        %v3725 = vunpack.c.l.b16 %v3693
        %v3726 = vunpack.c.l.b16 %v3694
        %v3727 = vunpack.c.l.b16 %v3695
        %v3728 = vunpack.c.l.b16 %v3696
        %v3729 = vunpack.c.l.b16 %v3697
        %v3730 = vpack.c.b16 %v3715, %v3714
        %v3731 = vpack.c.b16 %v3717, %v3716
        %v3732 = vpack.c.b16 %v3719, %v3718
        %v3733 = vpack.c.b16 %v3721, %v3720
        %v3734 = vpack.c.b16 %v3723, %v3722
        %v3735 = vpack.c.b16 %v3725, %v3724
        %v3736 = vpack.c.b16 %v3727, %v3726
        %v3737 = vpack.c.b16 %v3729, %v3728
        %3746 = vmatprep.subr.bf16.mxu0 0
        %3747 = vmatpush1.bf16.msra.mxu0 %v3730
        %3748 = vmatprep.subr.bf16.mxu0 0
        %3749 = vmatpush1.bf16.msra.mxu0 %v3731
        %3750 = vmatprep.subr.bf16.mxu0 0
        %3751 = vmatpush1.bf16.msra.mxu0 %v3732
        %3752 = vmatprep.subr.bf16.mxu0 0
        %3753 = vmatpush1.bf16.msra.mxu0 %v3733
        %3754 = vmatprep.subr.bf16.mxu0 0
        %3755 = vmatpush1.bf16.msra.mxu0 %v3734
        %3756 = vmatprep.subr.bf16.mxu0 0
        %3757 = vmatpush1.bf16.msra.mxu0 %v3735
        %3758 = vmatprep.subr.bf16.mxu0 0
        %3759 = vmatpush1.bf16.msra.mxu0 %v3736
        %3760 = vmatprep.subr.bf16.mxu0 0
        %3761 = vmatpush1.bf16.msra.mxu0 %v3737
        %3762 = vmatprep.subr.bf16.mxu0 0
        %3763 = vmatpush1.bf16.msra.mxu0 0
        %3764 = vmatprep.subr.bf16.mxu0 0
        %3765 = vmatpush1.bf16.msra.mxu0 0
        %3766 = vmatprep.subr.bf16.mxu0 0
        %3767 = vmatpush1.bf16.msra.mxu0 0
        %3768 = vmatprep.subr.bf16.mxu0 0
        %3769 = vmatpush1.bf16.msra.mxu0 0
        %3770 = vmatprep.subr.bf16.mxu0 0
        %3771 = vmatpush1.bf16.msra.mxu0 0
        %3772 = vmatprep.subr.bf16.mxu0 0
        %3773 = vmatpush1.bf16.msra.mxu0 0
        %3774 = vmatprep.subr.bf16.mxu0 0
        %3775 = vmatpush1.bf16.msra.mxu0 0
        %3776 = vmatprep.subr.bf16.mxu0 0
        %3777 = vmatpush1.bf16.msra.mxu0 0
        %3778 = vmatprep.mubr.bf16.mxu0 0
        %3779 = vmatmul.mubr.bf16.gmra.mrb[0].mxu0 %v3665
        %v3780 = vpop.f32.mrb[0].mxu0
        %v3781 = vadd.f32 0.0, %v3780
        %v3782 = vpop.f32.mrb[0].mxu0
        %v3783 = vpop.f32.mrb[0].mxu0
        %v3784 = vadd.f32 0.0, %v3783
        %v3785 = vpop.f32.mrb[0].mxu0
        %3786 = vmatprep.mubr.bf16.mxu0 0
        %3787 = vmatmul.mubr.bf16.gmra.mrb[0].mxu0 %v3666
        %v3788 = vpop.f32.mrb[0].mxu0
        %v3789 = vadd.f32 0.0, %v3788
        %v3790 = vpop.f32.mrb[0].mxu0
        %v3791 = vpop.f32.mrb[0].mxu0
        %v3792 = vadd.f32 0.0, %v3791
        %v3793 = vpop.f32.mrb[0].mxu0
        %3794 = vmatprep.mubr.bf16.mxu0 0
        %3795 = vmatmul.mubr.bf16.gmra.mrb[0].mxu0 %v3667
        %v3796 = vpop.f32.mrb[0].mxu0
        %v3797 = vadd.f32 0.0, %v3796
        %v3798 = vpop.f32.mrb[0].mxu0
        %v3799 = vpop.f32.mrb[0].mxu0
        %v3800 = vadd.f32 0.0, %v3799
        %v3801 = vpop.f32.mrb[0].mxu0
        %3802 = vmatprep.mubr.bf16.mxu0 0
        %3803 = vmatmul.mubr.bf16.gmra.mrb[0].mxu0 %v3668
        %v3804 = vpop.f32.mrb[0].mxu0
        %v3805 = vadd.f32 0.0, %v3804
        %v3806 = vpop.f32.mrb[0].mxu0
        %v3807 = vpop.f32.mrb[0].mxu0
        %v3808 = vadd.f32 0.0, %v3807
        %v3809 = vpop.f32.mrb[0].mxu0
        %3810 = vmatprep.mubr.bf16.mxu0 0
        %3811 = vmatmul.mubr.bf16.gmra.mrb[0].mxu0 %v3669
        %v3812 = vpop.f32.mrb[0].mxu0
        %v3813 = vadd.f32 0.0, %v3812
        %v3814 = vpop.f32.mrb[0].mxu0
        %v3815 = vpop.f32.mrb[0].mxu0
        %v3816 = vadd.f32 0.0, %v3815
        %v3817 = vpop.f32.mrb[0].mxu0
        %3818 = vmatprep.mubr.bf16.mxu0 0
        %3819 = vmatmul.mubr.bf16.gmra.mrb[0].mxu0 %v3670
        %v3820 = vpop.f32.mrb[0].mxu0
        %v3821 = vadd.f32 0.0, %v3820
        %v3822 = vpop.f32.mrb[0].mxu0
        %v3823 = vpop.f32.mrb[0].mxu0
        %v3824 = vadd.f32 0.0, %v3823
        %v3825 = vpop.f32.mrb[0].mxu0
        %3826 = vmatprep.mubr.bf16.mxu0 0
        %3827 = vmatmul.mubr.bf16.gmra.mrb[0].mxu0 %v3671
        %v3828 = vpop.f32.mrb[0].mxu0
        %v3829 = vadd.f32 0.0, %v3828
        %v3830 = vpop.f32.mrb[0].mxu0
        %v3831 = vpop.f32.mrb[0].mxu0
        %v3832 = vadd.f32 0.0, %v3831
        %v3833 = vpop.f32.mrb[0].mxu0
        %3834 = vmatprep.mubr.bf16.mxu0 0
        %3835 = vmatmul.mubr.bf16.gmra.mrb[0].mxu0 %v3672
        %v3836 = vpop.f32.mrb[0].mxu0
        %v3837 = vadd.f32 0.0, %v3836
        %v3838 = vpop.f32.mrb[0].mxu0
        %v3839 = vpop.f32.mrb[0].mxu0
        %v3840 = vadd.f32 0.0, %v3839
        %v3841 = vpop.f32.mrb[0].mxu0
        %3842 = vmatprep.mubr.bf16.mxu0 0
        %3843 = vmatmul.mubr.bf16.gmra.mrb[0].mxu0 %v3673
        %v3844 = vpop.f32.mrb[0].mxu0
        %v3845 = vadd.f32 0.0, %v3844
        %v3846 = vpop.f32.mrb[0].mxu0
        %v3847 = vpop.f32.mrb[0].mxu0
        %v3848 = vadd.f32 0.0, %v3847
        %v3849 = vpop.f32.mrb[0].mxu0
        %3850 = vmatprep.mubr.bf16.mxu0 0
        %3851 = vmatmul.mubr.bf16.gmra.mrb[0].mxu0 %v3674
        %v3852 = vpop.f32.mrb[0].mxu0
        %v3853 = vadd.f32 0.0, %v3852
        %v3854 = vpop.f32.mrb[0].mxu0
        %v3855 = vpop.f32.mrb[0].mxu0
        %v3856 = vadd.f32 0.0, %v3855
        %v3857 = vpop.f32.mrb[0].mxu0
        %3858 = vmatprep.mubr.bf16.mxu0 0
        %3859 = vmatmul.mubr.bf16.gmra.mrb[0].mxu0 %v3675
        %v3860 = vpop.f32.mrb[0].mxu0
        %v3861 = vadd.f32 0.0, %v3860
        %v3862 = vpop.f32.mrb[0].mxu0
        %v3863 = vpop.f32.mrb[0].mxu0
        %v3864 = vadd.f32 0.0, %v3863
        %v3865 = vpop.f32.mrb[0].mxu0
        %3866 = vmatprep.mubr.bf16.mxu0 0
        %3867 = vmatmul.mubr.bf16.gmra.mrb[0].mxu0 %v3676
        %v3868 = vpop.f32.mrb[0].mxu0
        %v3869 = vadd.f32 0.0, %v3868
        %v3870 = vpop.f32.mrb[0].mxu0
        %v3871 = vpop.f32.mrb[0].mxu0
        %v3872 = vadd.f32 0.0, %v3871
        %v3873 = vpop.f32.mrb[0].mxu0
        %3874 = vmatprep.mubr.bf16.mxu0 0
        %3875 = vmatmul.mubr.bf16.gmra.mrb[0].mxu0 %v3677
        %v3876 = vpop.f32.mrb[0].mxu0
        %v3877 = vadd.f32 0.0, %v3876
        %v3878 = vpop.f32.mrb[0].mxu0
        %v3879 = vpop.f32.mrb[0].mxu0
        %v3880 = vadd.f32 0.0, %v3879
        %v3881 = vpop.f32.mrb[0].mxu0
        %3882 = vmatprep.mubr.bf16.mxu0 0
        %3883 = vmatmul.mubr.bf16.gmra.mrb[0].mxu0 %v3678
        %v3884 = vpop.f32.mrb[0].mxu0
        %v3885 = vadd.f32 0.0, %v3884
        %v3886 = vpop.f32.mrb[0].mxu0
        %v3887 = vpop.f32.mrb[0].mxu0
        %v3888 = vadd.f32 0.0, %v3887
        %v3889 = vpop.f32.mrb[0].mxu0
        %3890 = vmatprep.mubr.bf16.mxu0 0
        %3891 = vmatmul.mubr.bf16.gmra.mrb[0].mxu0 %v3679
        %v3892 = vpop.f32.mrb[0].mxu0
        %v3893 = vadd.f32 0.0, %v3892
        %v3894 = vpop.f32.mrb[0].mxu0
        %v3895 = vpop.f32.mrb[0].mxu0
        %v3896 = vadd.f32 0.0, %v3895
        %v3897 = vpop.f32.mrb[0].mxu0
        %3898 = vmatprep.mubr.bf16.mxu0 0
        %3899 = vmatmul.mubr.bf16.gmra.mrb[0].mxu0 %v3680
        %v3900 = vpop.f32.mrb[0].mxu0
        %v3901 = vadd.f32 0.0, %v3900
        %v3902 = vpop.f32.mrb[0].mxu0
        %v3903 = vpop.f32.mrb[0].mxu0
        %v3904 = vadd.f32 0.0, %v3903
        %v3905 = vpop.f32.mrb[0].mxu0
        %3906 = vdwg.mxu0
        %v3907 = vld [vmem:[#allocation3] sm:$0xff]
        %v3908 = vld [vmem:[#allocation3 + $0x8] sm:$0xff]
        %v3909 = vld [vmem:[#allocation3 + $0x10] sm:$0xff]
        %v3910 = vld [vmem:[#allocation3 + $0x18] sm:$0xff]
        %v3911 = vld [vmem:[#allocation3 + $0x20] sm:$0xff]
        %v3912 = vld [vmem:[#allocation3 + $0x28] sm:$0xff]
        %v3913 = vld [vmem:[#allocation3 + $0x30] sm:$0xff]
        %v3914 = vld [vmem:[#allocation3 + $0x38] sm:$0xff]
        %v3915 = vld [vmem:[#allocation3 + $0x40] sm:$0xff]
        %v3916 = vld [vmem:[#allocation3 + $0x48] sm:$0xff]
        %v3917 = vld [vmem:[#allocation3 + $0x50] sm:$0xff]
        %v3918 = vld [vmem:[#allocation3 + $0x58] sm:$0xff]
        %v3919 = vld [vmem:[#allocation3 + $0x60] sm:$0xff]
        %v3920 = vld [vmem:[#allocation3 + $0x68] sm:$0xff]
        %v3921 = vld [vmem:[#allocation3 + $0x70] sm:$0xff]
        %v3922 = vld [vmem:[#allocation3 + $0x78] sm:$0xff]
        %v3923 = vld [vmem:[#allocation3 + $0x80] sm:$0xff]
        %v3924 = vld [vmem:[#allocation3 + $0x88] sm:$0xff]
        %v3925 = vld [vmem:[#allocation3 + $0x90] sm:$0xff]
        %v3926 = vld [vmem:[#allocation3 + $0x98] sm:$0xff]
        %v3927 = vld [vmem:[#allocation3 + $0xa0] sm:$0xff]
        %v3928 = vld [vmem:[#allocation3 + $0xa8] sm:$0xff]
        %v3929 = vld [vmem:[#allocation3 + $0xb0] sm:$0xff]
        %v3930 = vld [vmem:[#allocation3 + $0xb8] sm:$0xff]
        %v3931 = vld [vmem:[#allocation3 + $0xc0] sm:$0xff]
        %v3932 = vld [vmem:[#allocation3 + $0xc8] sm:$0xff]
        %v3933 = vld [vmem:[#allocation3 + $0xd0] sm:$0xff]
        %v3934 = vld [vmem:[#allocation3 + $0xd8] sm:$0xff]
        %v3935 = vld [vmem:[#allocation3 + $0xe0] sm:$0xff]
        %v3936 = vld [vmem:[#allocation3 + $0xe8] sm:$0xff]
        %v3937 = vld [vmem:[#allocation3 + $0xf0] sm:$0xff]
        %v3938 = vld [vmem:[#allocation3 + $0xf8] sm:$0xff]
        %v3939 = vadd.f32 %v3907, %v3781
        %v3940 = vadd.f32 %v3908, %v3784
        %v3941 = vadd.f32 %v3909, %v3789
        %v3942 = vadd.f32 %v3910, %v3792
        %v3943 = vadd.f32 %v3911, %v3797
        %v3944 = vadd.f32 %v3912, %v3800
        %v3945 = vadd.f32 %v3913, %v3805
        %v3946 = vadd.f32 %v3914, %v3808
        %v3947 = vadd.f32 %v3915, %v3813
        %v3948 = vadd.f32 %v3916, %v3816
        %v3949 = vadd.f32 %v3917, %v3821
        %v3950 = vadd.f32 %v3918, %v3824
        %v3951 = vadd.f32 %v3919, %v3829
        %v3952 = vadd.f32 %v3920, %v3832
        %v3953 = vadd.f32 %v3921, %v3837
        %v3954 = vadd.f32 %v3922, %v3840
        %v3955 = vadd.f32 %v3923, %v3845
        %v3956 = vadd.f32 %v3924, %v3848
        %v3957 = vadd.f32 %v3925, %v3853
        %v3958 = vadd.f32 %v3926, %v3856
        %v3959 = vadd.f32 %v3927, %v3861
        %v3960 = vadd.f32 %v3928, %v3864
        %v3961 = vadd.f32 %v3929, %v3869
        %v3962 = vadd.f32 %v3930, %v3872
        %v3963 = vadd.f32 %v3931, %v3877
        %v3964 = vadd.f32 %v3932, %v3880
        %v3965 = vadd.f32 %v3933, %v3885
        %v3966 = vadd.f32 %v3934, %v3888
        %v3967 = vadd.f32 %v3935, %v3893
        %v3968 = vadd.f32 %v3936, %v3896
        %v3969 = vadd.f32 %v3937, %v3901
        %v3970 = vadd.f32 %v3938, %v3904
        %3971 = vst [vmem:[#allocation3] sm:$0xff] %v3939
        %3972 = vst [vmem:[#allocation3 + $0x8] sm:$0xff] %v3940
        %3973 = vst [vmem:[#allocation3 + $0x10] sm:$0xff] %v3941
        %3974 = vst [vmem:[#allocation3 + $0x18] sm:$0xff] %v3942
        %3975 = vst [vmem:[#allocation3 + $0x20] sm:$0xff] %v3943
        %3976 = vst [vmem:[#allocation3 + $0x28] sm:$0xff] %v3944
        %3977 = vst [vmem:[#allocation3 + $0x30] sm:$0xff] %v3945
        %3978 = vst [vmem:[#allocation3 + $0x38] sm:$0xff] %v3946
        %3979 = vst [vmem:[#allocation3 + $0x40] sm:$0xff] %v3947
        %3980 = vst [vmem:[#allocation3 + $0x48] sm:$0xff] %v3948
        %3981 = vst [vmem:[#allocation3 + $0x50] sm:$0xff] %v3949
        %3982 = vst [vmem:[#allocation3 + $0x58] sm:$0xff] %v3950
        %3983 = vst [vmem:[#allocation3 + $0x60] sm:$0xff] %v3951
        %3984 = vst [vmem:[#allocation3 + $0x68] sm:$0xff] %v3952
        %3985 = vst [vmem:[#allocation3 + $0x70] sm:$0xff] %v3953
        %3986 = vst [vmem:[#allocation3 + $0x78] sm:$0xff] %v3954
        %3987 = vst [vmem:[#allocation3 + $0x80] sm:$0xff] %v3955
        %3988 = vst [vmem:[#allocation3 + $0x88] sm:$0xff] %v3956
        %3989 = vst [vmem:[#allocation3 + $0x90] sm:$0xff] %v3957
        %3990 = vst [vmem:[#allocation3 + $0x98] sm:$0xff] %v3958
        %3991 = vst [vmem:[#allocation3 + $0xa0] sm:$0xff] %v3959
        %3992 = vst [vmem:[#allocation3 + $0xa8] sm:$0xff] %v3960
        %3993 = vst [vmem:[#allocation3 + $0xb0] sm:$0xff] %v3961
        %3994 = vst [vmem:[#allocation3 + $0xb8] sm:$0xff] %v3962
        %3995 = vst [vmem:[#allocation3 + $0xc0] sm:$0xff] %v3963
        %3996 = vst [vmem:[#allocation3 + $0xc8] sm:$0xff] %v3964
        %3997 = vst [vmem:[#allocation3 + $0xd0] sm:$0xff] %v3965
        %3998 = vst [vmem:[#allocation3 + $0xd8] sm:$0xff] %v3966
        %3999 = vst [vmem:[#allocation3 + $0xe0] sm:$0xff] %v3967
        %4000 = vst [vmem:[#allocation3 + $0xe8] sm:$0xff] %v3968
        %4001 = vst [vmem:[#allocation3 + $0xf0] sm:$0xff] %v3969
        %4002 = vst [vmem:[#allocation3 + $0xf8] sm:$0xff] %v3970
        %v4003 = vld [vmem:[#allocation3] sm:$0xff]
        %v4004 = vld [vmem:[#allocation3 + $0x8] sm:$0xff]
        %v4005 = vld [vmem:[#allocation3 + $0x10] sm:$0xff]
        %v4006 = vld [vmem:[#allocation3 + $0x18] sm:$0xff]
        %v4007 = vld [vmem:[#allocation3 + $0x20] sm:$0xff]
        %v4008 = vld [vmem:[#allocation3 + $0x28] sm:$0xff]
        %v4009 = vld [vmem:[#allocation3 + $0x30] sm:$0xff]
        %v4010 = vld [vmem:[#allocation3 + $0x38] sm:$0xff]
        %v4011 = vld [vmem:[#allocation3 + $0x40] sm:$0xff]
        %v4012 = vld [vmem:[#allocation3 + $0x48] sm:$0xff]
        %v4013 = vld [vmem:[#allocation3 + $0x50] sm:$0xff]
        %v4014 = vld [vmem:[#allocation3 + $0x58] sm:$0xff]
        %v4015 = vld [vmem:[#allocation3 + $0x60] sm:$0xff]
        %v4016 = vld [vmem:[#allocation3 + $0x68] sm:$0xff]
        %v4017 = vld [vmem:[#allocation3 + $0x70] sm:$0xff]
        %v4018 = vld [vmem:[#allocation3 + $0x78] sm:$0xff]
        %v4019 = vld [vmem:[#allocation3 + $0x80] sm:$0xff]
        %v4020 = vld [vmem:[#allocation3 + $0x88] sm:$0xff]
        %v4021 = vld [vmem:[#allocation3 + $0x90] sm:$0xff]
        %v4022 = vld [vmem:[#allocation3 + $0x98] sm:$0xff]
        %v4023 = vld [vmem:[#allocation3 + $0xa0] sm:$0xff]
        %v4024 = vld [vmem:[#allocation3 + $0xa8] sm:$0xff]
        %v4025 = vld [vmem:[#allocation3 + $0xb0] sm:$0xff]
        %v4026 = vld [vmem:[#allocation3 + $0xb8] sm:$0xff]
        %v4027 = vld [vmem:[#allocation3 + $0xc0] sm:$0xff]
        %v4028 = vld [vmem:[#allocation3 + $0xc8] sm:$0xff]
        %v4029 = vld [vmem:[#allocation3 + $0xd0] sm:$0xff]
        %v4030 = vld [vmem:[#allocation3 + $0xd8] sm:$0xff]
        %v4031 = vld [vmem:[#allocation3 + $0xe0] sm:$0xff]
        %v4032 = vld [vmem:[#allocation3 + $0xe8] sm:$0xff]
        %v4033 = vld [vmem:[#allocation3 + $0xf0] sm:$0xff]
        %v4034 = vld [vmem:[#allocation3 + $0xf8] sm:$0xff]
        %v4035 = vld [vmem:[%s4] sm:$0x1]
        %v4037 = vlaneseq
        %v4038 = vshrl.u32 %v4037, 7
        %v4039 = vsub.s32 0, %v4038
        %v4040 = vrot.slane %v4035, %v4039
        %v4042 = vadd.f32 %v4003, %v4040
        %v4043 = vadd.f32 %v4004, %v4040
        %v4044 = vadd.f32 %v4005, %v4040
        %v4045 = vadd.f32 %v4006, %v4040
        %v4046 = vadd.f32 %v4007, %v4040
        %v4047 = vadd.f32 %v4008, %v4040
        %v4048 = vadd.f32 %v4009, %v4040
        %v4049 = vadd.f32 %v4010, %v4040
        %v4050 = vadd.f32 %v4011, %v4040
        %v4051 = vadd.f32 %v4012, %v4040
        %v4052 = vadd.f32 %v4013, %v4040
        %v4053 = vadd.f32 %v4014, %v4040
        %v4054 = vadd.f32 %v4015, %v4040
        %v4055 = vadd.f32 %v4016, %v4040
        %v4056 = vadd.f32 %v4017, %v4040
        %v4057 = vadd.f32 %v4018, %v4040
        %v4058 = vadd.f32 %v4019, %v4040
        %v4059 = vadd.f32 %v4020, %v4040
        %v4060 = vadd.f32 %v4021, %v4040
        %v4061 = vadd.f32 %v4022, %v4040
        %v4062 = vadd.f32 %v4023, %v4040
        %v4063 = vadd.f32 %v4024, %v4040
        %v4064 = vadd.f32 %v4025, %v4040
        %v4065 = vadd.f32 %v4026, %v4040
        %v4066 = vadd.f32 %v4027, %v4040
        %v4067 = vadd.f32 %v4028, %v4040
        %v4068 = vadd.f32 %v4029, %v4040
        %v4069 = vadd.f32 %v4030, %v4040
        %v4070 = vadd.f32 %v4031, %v4040
        %v4071 = vadd.f32 %v4032, %v4040
        %v4072 = vadd.f32 %v4033, %v4040
        %v4073 = vadd.f32 %v4034, %v4040
        %v4074 = vmax.f32 %v4042, 0.0
        %v4075 = vmax.f32 %v4043, 0.0
        %v4076 = vmax.f32 %v4044, 0.0
        %v4077 = vmax.f32 %v4045, 0.0
        %v4078 = vmax.f32 %v4046, 0.0
        %v4079 = vmax.f32 %v4047, 0.0
        %v4080 = vmax.f32 %v4048, 0.0
        %v4081 = vmax.f32 %v4049, 0.0
        %v4082 = vmax.f32 %v4050, 0.0
        %v4083 = vmax.f32 %v4051, 0.0
        %v4084 = vmax.f32 %v4052, 0.0
        %v4085 = vmax.f32 %v4053, 0.0
        %v4086 = vmax.f32 %v4054, 0.0
        %v4087 = vmax.f32 %v4055, 0.0
        %v4088 = vmax.f32 %v4056, 0.0
        %v4089 = vmax.f32 %v4057, 0.0
        %v4090 = vmax.f32 %v4058, 0.0
        %v4091 = vmax.f32 %v4059, 0.0
        %v4092 = vmax.f32 %v4060, 0.0
        %v4093 = vmax.f32 %v4061, 0.0
        %v4094 = vmax.f32 %v4062, 0.0
        %v4095 = vmax.f32 %v4063, 0.0
        %v4096 = vmax.f32 %v4064, 0.0
        %v4097 = vmax.f32 %v4065, 0.0
        %v4098 = vmax.f32 %v4066, 0.0
        %v4099 = vmax.f32 %v4067, 0.0
        %v4100 = vmax.f32 %v4068, 0.0
        %v4101 = vmax.f32 %v4069, 0.0
        %v4102 = vmax.f32 %v4070, 0.0
        %v4103 = vmax.f32 %v4071, 0.0
        %v4104 = vmax.f32 %v4072, 0.0
        %v4105 = vmax.f32 %v4073, 0.0
        %v4106 = vpack.c.bf16 %v4075, %v4074
        %v4107 = vpack.c.bf16 %v4077, %v4076
        %v4108 = vpack.c.bf16 %v4079, %v4078
        %v4109 = vpack.c.bf16 %v4081, %v4080
        %v4110 = vpack.c.bf16 %v4083, %v4082
        %v4111 = vpack.c.bf16 %v4085, %v4084
        %v4112 = vpack.c.bf16 %v4087, %v4086
        %v4113 = vpack.c.bf16 %v4089, %v4088
        %v4114 = vpack.c.bf16 %v4091, %v4090
        %v4115 = vpack.c.bf16 %v4093, %v4092
        %v4116 = vpack.c.bf16 %v4095, %v4094
        %v4117 = vpack.c.bf16 %v4097, %v4096
        %v4118 = vpack.c.bf16 %v4099, %v4098
        %v4119 = vpack.c.bf16 %v4101, %v4100
        %v4120 = vpack.c.bf16 %v4103, %v4102
        %v4121 = vpack.c.bf16 %v4105, %v4104
        %v4138 = vunpack.c.l.b16 %v4106
        %v4139 = vunpack.c.h.b16 %v4106
        %v4140 = vunpack.c.l.b16 %v4107
        %v4141 = vunpack.c.h.b16 %v4107
        %v4142 = vunpack.c.l.b16 %v4108
        %v4143 = vunpack.c.h.b16 %v4108
        %v4144 = vunpack.c.l.b16 %v4109
        %v4145 = vunpack.c.h.b16 %v4109
        %v4146 = vunpack.c.l.b16 %v4110
        %v4147 = vunpack.c.h.b16 %v4110
        %v4148 = vunpack.c.l.b16 %v4111
        %v4149 = vunpack.c.h.b16 %v4111
        %v4150 = vunpack.c.l.b16 %v4112
        %v4151 = vunpack.c.h.b16 %v4112
        %v4152 = vunpack.c.l.b16 %v4113
        %v4153 = vunpack.c.h.b16 %v4113
        %v4154 = vunpack.c.l.b16 %v4114
        %v4155 = vunpack.c.h.b16 %v4114
        %v4156 = vunpack.c.l.b16 %v4115
        %v4157 = vunpack.c.h.b16 %v4115
        %v4158 = vunpack.c.l.b16 %v4116
        %v4159 = vunpack.c.h.b16 %v4116
        %v4160 = vunpack.c.l.b16 %v4117
        %v4161 = vunpack.c.h.b16 %v4117
        %v4162 = vunpack.c.l.b16 %v4118
        %v4163 = vunpack.c.h.b16 %v4118
        %v4164 = vunpack.c.l.b16 %v4119
        %v4165 = vunpack.c.h.b16 %v4119
        %v4166 = vunpack.c.l.b16 %v4120
        %v4167 = vunpack.c.h.b16 %v4120
        %v4168 = vunpack.c.l.b16 %v4121
        %v4169 = vunpack.c.h.b16 %v4121
        %v4170 = vpack.c.b16 %v4138, %v4138
        %v4171 = vpack.c.b16 %v4139, %v4139
        %v4172 = vpack.c.b16 %v4140, %v4140
        %v4173 = vpack.c.b16 %v4141, %v4141
        %v4174 = vpack.c.b16 %v4142, %v4142
        %v4175 = vpack.c.b16 %v4143, %v4143
        %v4176 = vpack.c.b16 %v4144, %v4144
        %v4177 = vpack.c.b16 %v4145, %v4145
        %v4178 = vpack.c.b16 %v4146, %v4146
        %v4179 = vpack.c.b16 %v4147, %v4147
        %v4180 = vpack.c.b16 %v4148, %v4148
        %v4181 = vpack.c.b16 %v4149, %v4149
        %v4182 = vpack.c.b16 %v4150, %v4150
        %v4183 = vpack.c.b16 %v4151, %v4151
        %v4184 = vpack.c.b16 %v4152, %v4152
        %v4185 = vpack.c.b16 %v4153, %v4153
        %v4186 = vpack.c.b16 %v4154, %v4154
        %v4187 = vpack.c.b16 %v4155, %v4155
        %v4188 = vpack.c.b16 %v4156, %v4156
        %v4189 = vpack.c.b16 %v4157, %v4157
        %v4190 = vpack.c.b16 %v4158, %v4158
        %v4191 = vpack.c.b16 %v4159, %v4159
        %v4192 = vpack.c.b16 %v4160, %v4160
        %v4193 = vpack.c.b16 %v4161, %v4161
        %v4194 = vpack.c.b16 %v4162, %v4162
        %v4195 = vpack.c.b16 %v4163, %v4163
        %v4196 = vpack.c.b16 %v4164, %v4164
        %v4197 = vpack.c.b16 %v4165, %v4165
        %v4198 = vpack.c.b16 %v4166, %v4166
        %v4199 = vpack.c.b16 %v4167, %v4167
        %v4200 = vpack.c.b16 %v4168, %v4168
        %v4201 = vpack.c.b16 %v4169, %v4169
        %4234 = vst [vmem:[%s271] sm:$0xf] %v4170
        %4235 = vst [vmem:[%s271 + $0x4] sm:$0xf] %v4171
        %4236 = vst [vmem:[%s271 + $0x8] sm:$0xf] %v4172
        %4237 = vst [vmem:[%s271 + $0xc] sm:$0xf] %v4173
        %4238 = vst [vmem:[%s271 + $0x10] sm:$0xf] %v4174
        %4239 = vst [vmem:[%s271 + $0x14] sm:$0xf] %v4175
        %4240 = vst [vmem:[%s271 + $0x18] sm:$0xf] %v4176
        %4241 = vst [vmem:[%s271 + $0x1c] sm:$0xf] %v4177
        %4242 = vst [vmem:[%s271 + $0x20] sm:$0xf] %v4178
        %4243 = vst [vmem:[%s271 + $0x24] sm:$0xf] %v4179
        %4244 = vst [vmem:[%s271 + $0x28] sm:$0xf] %v4180
        %4245 = vst [vmem:[%s271 + $0x2c] sm:$0xf] %v4181
        %4246 = vst [vmem:[%s271 + $0x30] sm:$0xf] %v4182
        %4247 = vst [vmem:[%s271 + $0x34] sm:$0xf] %v4183
        %4248 = vst [vmem:[%s271 + $0x38] sm:$0xf] %v4184
        %4249 = vst [vmem:[%s271 + $0x3c] sm:$0xf] %v4185
        %4250 = vst [vmem:[%s271 + $0x40] sm:$0xf] %v4186
        %4251 = vst [vmem:[%s271 + $0x44] sm:$0xf] %v4187
        %4252 = vst [vmem:[%s271 + $0x48] sm:$0xf] %v4188
        %4253 = vst [vmem:[%s271 + $0x4c] sm:$0xf] %v4189
        %4254 = vst [vmem:[%s271 + $0x50] sm:$0xf] %v4190
        %4255 = vst [vmem:[%s271 + $0x54] sm:$0xf] %v4191
        %4256 = vst [vmem:[%s271 + $0x58] sm:$0xf] %v4192
        %4257 = vst [vmem:[%s271 + $0x5c] sm:$0xf] %v4193
        %4258 = vst [vmem:[%s271 + $0x60] sm:$0xf] %v4194
        %4259 = vst [vmem:[%s271 + $0x64] sm:$0xf] %v4195
        %4260 = vst [vmem:[%s271 + $0x68] sm:$0xf] %v4196
        %4261 = vst [vmem:[%s271 + $0x6c] sm:$0xf] %v4197
        %4262 = vst [vmem:[%s271 + $0x70] sm:$0xf] %v4198
        %4263 = vst [vmem:[%s271 + $0x74] sm:$0xf] %v4199
        %4264 = vst [vmem:[%s271 + $0x78] sm:$0xf] %v4200
        %4265 = vst [vmem:[%s271 + $0x7c] sm:$0xf] %v4201
        %s4266 = sand.u32 %s141, 1
        %s4267 = scalar_lea.sflag [#allocation6], %s4266
        %s4268 = sand.u32 %s141, 1
        %s4269 = smul.addr %s4268, 128
        %s4270 = scalar_lea.vmem [#allocation10], %s4269
        // Predicated region
        $region53: #{tpu_custom_call.1} parent=39 // pred_check
          %p4271 = pneg %p151
        $region54: #{tpu_custom_call.1} parent=39 // pred_check_branch
          %4273 = sbr.rel (%p4271) target = $region56
        $region55: #{tpu_custom_call.1} parent=39 // pred_region
          %s4275 = ssub.s32 2048, 2048
          %4276 = vsyncadd %s4267, %s4275
          %s4277 = smul.addr %s23, 32
          %s4278 = smul.addr %s4277, 64
          %s4279 = scalar_lea.hbm %s5, %s4278
          %s4280 = sshll.u32 %s4270, 4
          %s4281 = int_to_ptr.vmem [resolvable:$true] %s4280
          %4286 = dma.vmem_to_hbm [thread:$0]  %s4281, 2048, %s4279, %s4267, 64, 64, 4
        $region56: #{tpu_custom_call.1} parent=39 // pred_fallthru
          _
      $region40: #{tpu_custom_call.1} parent=5 // pred_fallthru
        _
      %p4287 = scmp.le.s32.totalorder 2, %s18
      // Predicated region
      $region57: #{tpu_custom_call.1} parent=5 // pred_check
        %p4288 = pneg %p4287
      $region58: #{tpu_custom_call.1} parent=5 // pred_check_branch
        %4290 = sbr.rel (%p4288) target = $region60
      $region59: #{tpu_custom_call.1} parent=5 // pred_region
        %s4291 = ssub.s32 %s18, 2
        // Predicated region
        $region61: #{tpu_custom_call.1} parent=59 // pred_check
          %p4292 = pneg %p157
        $region62: #{tpu_custom_call.1} parent=59 // pred_check_branch
          %4294 = sbr.rel (%p4292) target = $region64
        $region63: #{tpu_custom_call.1} parent=59 // pred_region
          %s4295 = sand.u32 %s142, 1
          %s4296 = scalar_lea.sflag [#allocation6], %s4295
          %s4297 = sand.u32 %s142, 1
          %s4298 = smul.addr %s4297, 128
          %s4299 = scalar_lea.vmem [#allocation10], %s4298
          %4300 = dma.done %s4296, 2048
        $region64: #{tpu_custom_call.1} parent=59 // pred_fallthru
          _
      $region60: #{tpu_custom_call.1} parent=5 // pred_fallthru
        _
    $region6: #{tpu_custom_call.1} parent=1 // loop_footer
      %s22 = sadd.s32 1, %s18
    $region7: #{tpu_custom_call.1} parent=1 // loop_footer_branch
      %17 = sbr.rel target = $region3
    $region8: #{tpu_custom_call.1} parent=1 // loop_exit
      _
    %4301 = vsyncpa [#allocation5], 1
    %s4302 = scalar_lea.sflag [#allocation5], 1
    %4303 = vsyncpa %s4302, 1
    %4304 = vsyncpa [#allocation8], 1
    %4305 = vsyncpa [#allocation6], 1
    %s4306 = scalar_lea.sflag [#allocation6], 1
    %4307 = vsyncpa %s4306, 1

</llo_original>
